<compile_context>
chip_gen: v6e
topology: v6e:2x2x1
jax: 0.10.0
libtpu: 0.0.40
codegen_flags: <defaults>
</compile_context>

<pallas_src>
import math

import jax
import jax.numpy as jnp
from jax import lax
from jax.experimental import pallas as pl
from jax.experimental.pallas import tpu as pltpu

LN_EPS = 1e-5                     # PyTorch nn.LayerNorm default eps
_INV_SQRT2 = 0.7071067811865476   # 1/sqrt(2) for exact-erf GELU


# --------------------------------------------------------------------------- #
# Kernel
# --------------------------------------------------------------------------- #
def _ffn_kernel(x_ref, g_ref, b_ref, w1_ref, b1_ref, w2_ref, b2_ref,
                o_ref, xn_ref):
    """Grid = (token tiles i, hidden tiles h).  Per step:
       x_ref  : (tm, D)   token tile (f32 input)
       w1_ref : (D, th)   first weight slab  (bf16)
       b1_ref : (1, th)
       w2_ref : (th, D)   second weight slab (bf16)
       o_ref  : (tm, D)   f32 output tile, VMEM-resident across h (accumulator)
       xn_ref : (tm, D)   cached LayerNorm output (bf16 scratch)
    """
    h_idx = pl.program_id(1)

    # ---- LayerNorm once per token tile (h == 0); cache xn; zero the output.
    @pl.when(h_idx == 0)
    def _init():
        x = x_ref[...].astype(jnp.float32)
        mean = jnp.mean(x, axis=-1, keepdims=True)
        c = x - mean
        var = jnp.mean(c * c, axis=-1, keepdims=True)
        xn = c * lax.rsqrt(var + jnp.float32(LN_EPS))
        xn = xn * g_ref[...].astype(jnp.float32) + b_ref[...].astype(jnp.float32)
        xn_ref[...] = xn.astype(xn_ref.dtype)
        o_ref[...] = jnp.zeros_like(o_ref)

    # ---- Linear(dim -> th slice of hidden), f32 accumulation on the MXU.
    h = jnp.dot(xn_ref[...], w1_ref[...], preferred_element_type=jnp.float32)
    h = h + b1_ref[...].astype(jnp.float32)

    # ---- exact-erf GELU (torch.nn.GELU default), f32 VPU/EUP math.
    h = 0.5 * h * (1.0 + lax.erf(h * jnp.float32(_INV_SQRT2)))

    # ---- Linear(th slice of hidden -> dim): accumulate directly into o_ref.
    o_ref[...] += jnp.dot(h.astype(w2_ref.dtype), w2_ref[...],
                          preferred_element_type=jnp.float32).astype(o_ref.dtype)

    # ---- finalize: add output bias on the last hidden tile.
    @pl.when(h_idx == pl.num_programs(1) - 1)
    def _finalize():
        o_ref[...] = o_ref[...] + b2_ref[...].astype(o_ref.dtype)


# --------------------------------------------------------------------------- #
# Tile / VMEM heuristics
# --------------------------------------------------------------------------- #
def _round_up(n, m):
    return ((n + m - 1) // m) * m


def _vmem_capacity_bytes():
    """Physical VMEM per core; conservative (v7x) default if query fails."""
    try:
        return int(pltpu.get_tpu_info().vmem_capacity_bytes)
    except Exception:
        return 64 * 1024 * 1024


def _default_tm_target():
    """Per-generation roofline-ridge token tile; 512 is a safe all-round pick."""
    try:
        info = pltpu.get_tpu_info()
        ver = str(getattr(info, "chip_version", "")).lower()
        if "v5" in ver:
            return 256
        if "v6" in ver:
            return 1024
        if "v7" in ver:
            return 512
    except Exception:
        pass
    return 512


def _th_candidates(H):
    """th = H (full, weights resident) plus 128-aligned divisors, descending."""
    cands = {H}
    cands.update(d for d in range(128, H, 128) if H % d == 0)
    return sorted(cands, reverse=True)


def _vmem_bytes(tm, th, D, wb):
    """Estimated double-buffered working set (+ persistent scratch)."""
    buf = 2  # default double buffering
    return (buf * tm * D * 4          # x tile (f32 in)
            + buf * tm * D * 4        # output tile (f32 out)
            + buf * D * th * wb       # w1 slab
            + buf * th * D * wb       # w2 slab
            + buf * _round_up(th, 128) * 4   # b1 slab
            + buf * 3 * D * 4         # ln gamma, ln beta, b2
            + tm * D * wb)            # xn scratch (persistent)


def _pick_tiles(N, D, H, wb, vmem_budget, tm_target):
    """Largest tm (<= target), then largest th that fits the VMEM budget."""
    tm_cap = max(128, min(_round_up(tm_target, 128), _round_up(N, 128)))
    tm_try = tm_cap
    while tm_try >= 128:
        for th_try in _th_candidates(H):
            if _vmem_bytes(tm_try, th_try, D, wb) <= vmem_budget:
                return tm_try, th_try
        tm_try -= 128
    # Nothing fit cleanly; fall back to the smallest aligned configuration.
    return 128, _th_candidates(H)[-1]


# --------------------------------------------------------------------------- #
# Wrapper
# --------------------------------------------------------------------------- #
def feed_forward(x, params, *, tm=None, th=None, matmul_dtype=jnp.bfloat16):
    """x: (B, S, D) float32. params: dict of LN/Linear weights (see init_params)."""
    B, S, D = x.shape
    H = params["w1"].shape[1]
    N = B * S
    wb = jnp.dtype(matmul_dtype).itemsize

    vmem_cap = _vmem_capacity_bytes()
    vmem_budget = int(vmem_cap * 0.85)          # leave headroom for Mosaic scratch

    if tm is None or th is None:
        auto_tm, auto_th = _pick_tiles(N, D, H, wb, vmem_budget, _default_tm_target())
        tm = auto_tm if tm is None else tm
        th = auto_th if th is None else th

    # Validate user-provided tiles against the (8,128) layout constraint.
    assert tm % 8 == 0, "tm must be a multiple of 8"
    assert H % th == 0, "th must divide the hidden dimension"
    assert th % 128 == 0 or th == H, "th must be 128-aligned or equal H"

    # Pad the token axis to a multiple of tm (padded rows are discarded).
    n_tiles = pl.cdiv(N, tm)
    n_pad = n_tiles * tm
    x2d = x.reshape(N, D)
    if n_pad != N:
        x2d = jnp.pad(x2d, ((0, n_pad - N), (0, 0)))
    h_tiles = H // th

    w1 = params["w1"].astype(matmul_dtype)
    w2 = params["w2"].astype(matmul_dtype)

    # VMEM budget: never request more than the physical capacity (v7x = 64 MiB).
    need = _vmem_bytes(tm, th, D, wb) + (4 << 20)
    vmem_limit = int(min(vmem_cap, max(need, 32 << 20)))

    grid = (n_tiles, h_tiles)
    out = pl.pallas_call(
        _ffn_kernel,
        out_shape=jax.ShapeDtypeStruct((n_pad, D), x.dtype),
        grid_spec=pltpu.PrefetchScalarGridSpec(
            num_scalar_prefetch=0,
            grid=grid,
            in_specs=[
                pl.BlockSpec((tm, D), lambda i, h: (i, 0)),   # x tile
                pl.BlockSpec((1, D), lambda i, h: (0, 0)),    # ln gamma
                pl.BlockSpec((1, D), lambda i, h: (0, 0)),    # ln beta
                pl.BlockSpec((D, th), lambda i, h: (0, h)),   # w1 slab
                pl.BlockSpec((1, th), lambda i, h: (0, h)),   # b1 slab
                pl.BlockSpec((th, D), lambda i, h: (h, 0)),   # w2 slab
                pl.BlockSpec((1, D), lambda i, h: (0, 0)),    # b2
            ],
            out_specs=pl.BlockSpec((tm, D), lambda i, h: (i, 0)),
            scratch_shapes=[
                pltpu.VMEM((tm, D), matmul_dtype),   # cached LayerNorm output
            ],
        ),
        compiler_params=pltpu.CompilerParams(
            dimension_semantics=("parallel", "arbitrary"),
            vmem_limit_bytes=vmem_limit,
        ),
    )(x2d, params["ln_g"], params["ln_b"], w1, params["b1"], w2, params["b2"])

    return out[:N].reshape(B, S, D)


# --------------------------------------------------------------------------- #
# Params + reference
# --------------------------------------------------------------------------- #
def init_params(key, dim, hidden_dim):
    """Synthetic params; shapes match nn.LayerNorm / nn.Linear.
    Linear weights stored pre-transposed: (in, out)."""
    k1, k2, k3, k4 = jax.random.split(key, 4)
    s1 = 1.0 / math.sqrt(dim)
    s2 = 1.0 / math.sqrt(hidden_dim)
    return {
        "ln_g": jnp.ones((1, dim), jnp.float32),
        "ln_b": jnp.zeros((1, dim), jnp.float32),
        "w1": jax.random.uniform(k1, (dim, hidden_dim), jnp.float32, -s1, s1),
        "b1": jax.random.uniform(k2, (1, hidden_dim), jnp.float32, -s1, s1),
        "w2": jax.random.uniform(k3, (hidden_dim, dim), jnp.float32, -s2, s2),
        "b2": jax.random.uniform(k4, (1, dim), jnp.float32, -s2, s2),
    }


def feed_forward_ref(x, p):
    """Pure-JAX f32 reference for correctness."""
    mean = jnp.mean(x, axis=-1, keepdims=True)
    var = jnp.mean((x - mean) ** 2, axis=-1, keepdims=True)
    xn = (x - mean) / jnp.sqrt(var + LN_EPS)
    xn = xn * p["ln_g"][0] + p["ln_b"][0]
    h = xn @ p["w1"] + p["b1"][0]
    h = 0.5 * h * (1.0 + lax.erf(h * _INV_SQRT2))
    return h @ p["w2"] + p["b2"][0]


if __name__ == "__main__":
    key = jax.random.PRNGKey(0)
    kx, kp = jax.random.split(key)

    # Small but lane-dense shapes; seq*batch deliberately not a multiple of 128
    # to exercise the row-padding path.
    batch, seq, dim, hidden_dim = 2, 120, 256, 512
    x = jax.random.normal(kx, (batch, seq, dim), jnp.float32)
    params = init_params(kp, dim, hidden_dim)
    y_ref = feed_forward_ref(x, params)

    # 1) Auto-tiled path (weights VMEM-resident: th == H, single hidden tile).
    y = jax.block_until_ready(feed_forward(x, params))
    assert y.shape == (batch, seq, dim)
    assert jnp.allclose(y, y_ref, atol=3e-2, rtol=3e-2), (
        "auto-tile mismatch vs reference: max abs err = %e"
        % float(jnp.max(jnp.abs(y - y_ref))))

    # 2) Forced multi-tile path (exercises the h-axis accumulation into o_ref).
    y2 = jax.block_until_ready(feed_forward(x, params, tm=128, th=128))
    assert jnp.allclose(y2, y_ref, atol=3e-2, rtol=3e-2), (
        "tiled-H mismatch vs reference: max abs err = %e"
        % float(jnp.max(jnp.abs(y2 - y_ref))))

    print("KERNEL_OK")
</pallas_src>

<mosaic_0001>
module attributes {stable_mosaic.version = 11 : i64} {
  func.func @_ffn_kernel(%arg0: i32, %arg1: i32, %arg2: memref<256x256xf32, #tpu.memory_space<vmem>>, %arg3: memref<1x256xf32, #tpu.memory_space<vmem>>, %arg4: memref<1x256xf32, #tpu.memory_space<vmem>>, %arg5: memref<256x512xbf16, #tpu.memory_space<vmem>>, %arg6: memref<1x512xf32, #tpu.memory_space<vmem>>, %arg7: memref<512x256xbf16, #tpu.memory_space<vmem>>, %arg8: memref<1x256xf32, #tpu.memory_space<vmem>>, %arg9: memref<256x256xf32, #tpu.memory_space<vmem>>, %arg10: memref<256x256xbf16, #tpu.memory_space<vmem>>) attributes {dimension_semantics = [#tpu.dimension_semantics<parallel>, #tpu.dimension_semantics<arbitrary>], iteration_bounds = array<i64: 1, 1>, scalar_prefetch = 0 : i64, scratch_operands = 1 : i64, tpu.core_type = #tpu.core_type<tc>, window_params = [{transform_indices = @transform_0, window_bounds = array<i64: 256, 256>}, {pipeline_mode = #tpu.pipeline_mode<synchronous>, transform_indices = @transform_1, window_bounds = array<i64: 1, 256>}, {pipeline_mode = #tpu.pipeline_mode<synchronous>, transform_indices = @transform_2, window_bounds = array<i64: 1, 256>}, {transform_indices = @transform_3, window_bounds = array<i64: 256, 512>}, {transform_indices = @transform_4, window_bounds = array<i64: 1, 512>}, {transform_indices = @transform_5, window_bounds = array<i64: 512, 256>}, {pipeline_mode = #tpu.pipeline_mode<synchronous>, transform_indices = @transform_6, window_bounds = array<i64: 1, 256>}, {transform_indices = @transform_7, window_bounds = array<i64: 256, 256>}]} {
    %c0_i32 = arith.constant 0 : i32
    %0 = arith.cmpi eq, %arg1, %c0_i32 : i32
    %1 = arith.extui %0 : i1 to i32
    %c0_i32_0 = arith.constant 0 : i32
    %2 = arith.cmpi ne, %1, %c0_i32_0 : i32
    scf.if %2 {
      %c0_18 = arith.constant 0 : index
      %c0_19 = arith.constant 0 : index
      %26 = vector.load %arg2[%c0_18, %c0_19] : memref<256x256xf32, #tpu.memory_space<vmem>>, vector<256x256xf32>
      %cst_20 = arith.constant dense<0.000000e+00> : vector<256xf32>
      %27 = vector.multi_reduction <add>, %26, %cst_20 [1] : vector<256x256xf32> to vector<256xf32>
      %28 = vector.shape_cast %27 : vector<256xf32> to vector<256x1xf32>
      %cst_21 = arith.constant 2.560000e+02 : f32
      %29 = vector.broadcast %cst_21 : f32 to vector<256x1xf32>
      %30 = arith.divf %28, %29 : vector<256x1xf32>
      %31 = vector.broadcast %30 : vector<256x1xf32> to vector<256x256xf32>
      %32 = arith.subf %26, %31 : vector<256x256xf32>
      %33 = arith.mulf %32, %32 : vector<256x256xf32>
      %cst_22 = arith.constant dense<0.000000e+00> : vector<256xf32>
      %34 = vector.multi_reduction <add>, %33, %cst_22 [1] : vector<256x256xf32> to vector<256xf32>
      %35 = vector.shape_cast %34 : vector<256xf32> to vector<256x1xf32>
      %cst_23 = arith.constant 2.560000e+02 : f32
      %36 = vector.broadcast %cst_23 : f32 to vector<256x1xf32>
      %37 = arith.divf %35, %36 : vector<256x1xf32>
      %cst_24 = arith.constant 9.99999974E-6 : f32
      %38 = vector.broadcast %cst_24 : f32 to vector<256x1xf32>
      %39 = arith.addf %37, %38 : vector<256x1xf32>
      %40 = math.rsqrt %39 : vector<256x1xf32>
      %41 = vector.broadcast %40 : vector<256x1xf32> to vector<256x256xf32>
      %42 = arith.mulf %32, %41 : vector<256x256xf32>
      %c0_25 = arith.constant 0 : index
      %c0_26 = arith.constant 0 : index
      %43 = vector.load %arg3[%c0_25, %c0_26] : memref<1x256xf32, #tpu.memory_space<vmem>>, vector<1x256xf32>
      %44 = vector.broadcast %43 : vector<1x256xf32> to vector<256x256xf32>
      %45 = arith.mulf %42, %44 : vector<256x256xf32>
      %c0_27 = arith.constant 0 : index
      %c0_28 = arith.constant 0 : index
      %46 = vector.load %arg4[%c0_27, %c0_28] : memref<1x256xf32, #tpu.memory_space<vmem>>, vector<1x256xf32>
      %47 = vector.broadcast %46 : vector<1x256xf32> to vector<256x256xf32>
      %48 = arith.addf %45, %47 : vector<256x256xf32>
      %49 = arith.truncf %48 : vector<256x256xf32> to vector<256x256xbf16>
      %c0_29 = arith.constant 0 : index
      %c0_30 = arith.constant 0 : index
      %50 = vector.load %arg10[%c0_29, %c0_30] : memref<256x256xbf16, #tpu.memory_space<vmem>>, vector<256x256xbf16>
      tpu.vector_store %arg10[%c0_29, %c0_30], %49 {strides = array<i32>} : memref<256x256xbf16, #tpu.memory_space<vmem>>, vector<256x256xbf16>,
      %cst_31 = arith.constant 0.000000e+00 : f32
      %51 = vector.broadcast %cst_31 : f32 to vector<256x256xf32>
      %c0_32 = arith.constant 0 : index
      %c0_33 = arith.constant 0 : index
      %52 = vector.load %arg9[%c0_32, %c0_33] : memref<256x256xf32, #tpu.memory_space<vmem>>, vector<256x256xf32>
      tpu.vector_store %arg9[%c0_32, %c0_33], %51 {strides = array<i32>} : memref<256x256xf32, #tpu.memory_space<vmem>>, vector<256x256xf32>,
    } else {
    }
    %c0 = arith.constant 0 : index
    %c0_1 = arith.constant 0 : index
    %3 = vector.load %arg10[%c0, %c0_1] : memref<256x256xbf16, #tpu.memory_space<vmem>>, vector<256x256xbf16>
    %c0_2 = arith.constant 0 : index
    %c0_3 = arith.constant 0 : index
    %4 = vector.load %arg5[%c0_2, %c0_3] : memref<256x512xbf16, #tpu.memory_space<vmem>>, vector<256x512xbf16>
    %cst = arith.constant dense<0.000000e+00> : vector<256x512xf32>
    %5 = tpu.matmul %3, %4, %cst {dimension_numbers = #tpu.dot_dimension_numbers<[1], [0], [0], [1], [0, 0, 1, 1], [], []>} : vector<256x256xbf16>, vector<256x512xbf16>, vector<256x512xf32> -> vector<256x512xf32>
    %c0_4 = arith.constant 0 : index
    %c0_5 = arith.constant 0 : index
    %6 = vector.load %arg6[%c0_4, %c0_5] : memref<1x512xf32, #tpu.memory_space<vmem>>, vector<1x512xf32>
    %7 = vector.broadcast %6 : vector<1x512xf32> to vector<256x512xf32>
    %8 = arith.addf %5, %7 : vector<256x512xf32>
    %cst_6 = arith.constant 5.000000e-01 : f32
    %9 = vector.broadcast %cst_6 : f32 to vector<256x512xf32>
    %10 = arith.mulf %9, %8 : vector<256x512xf32>
    %cst_7 = arith.constant 0.707106769 : f32
    %11 = vector.broadcast %cst_7 : f32 to vector<256x512xf32>
    %12 = arith.mulf %8, %11 : vector<256x512xf32>
    %13 = math.erf %12 : vector<256x512xf32>
    %cst_8 = arith.constant 1.000000e+00 : f32
    %14 = vector.broadcast %cst_8 : f32 to vector<256x512xf32>
    %15 = arith.addf %14, %13 : vector<256x512xf32>
    %16 = arith.mulf %10, %15 : vector<256x512xf32>
    %c0_9 = arith.constant 0 : index
    %c0_10 = arith.constant 0 : index
    %17 = vector.load %arg9[%c0_9, %c0_10] : memref<256x256xf32, #tpu.memory_space<vmem>>, vector<256x256xf32>
    %18 = arith.truncf %16 : vector<256x512xf32> to vector<256x512xbf16>
    %c0_11 = arith.constant 0 : index
    %c0_12 = arith.constant 0 : index
    %19 = vector.load %arg7[%c0_11, %c0_12] : memref<512x256xbf16, #tpu.memory_space<vmem>>, vector<512x256xbf16>
    %cst_13 = arith.constant dense<0.000000e+00> : vector<256x256xf32>
    %20 = tpu.matmul %18, %19, %cst_13 {dimension_numbers = #tpu.dot_dimension_numbers<[1], [0], [0], [1], [0, 0, 1, 1], [], []>} : vector<256x512xbf16>, vector<512x256xbf16>, vector<256x256xf32> -> vector<256x256xf32>
    %21 = arith.addf %17, %20 : vector<256x256xf32>
    %c0_14 = arith.constant 0 : index
    %c0_15 = arith.constant 0 : index
    %22 = vector.load %arg9[%c0_14, %c0_15] : memref<256x256xf32, #tpu.memory_space<vmem>>, vector<256x256xf32>
    tpu.vector_store %arg9[%c0_14, %c0_15], %21 {strides = array<i32>} : memref<256x256xf32, #tpu.memory_space<vmem>>, vector<256x256xf32>,
    %c0_i32_16 = arith.constant 0 : i32
    %23 = arith.cmpi eq, %arg1, %c0_i32_16 : i32
    %24 = arith.extui %23 : i1 to i32
    %c0_i32_17 = arith.constant 0 : i32
    %25 = arith.cmpi ne, %24, %c0_i32_17 : i32
    scf.if %25 {
      %c0_18 = arith.constant 0 : index
      %c0_19 = arith.constant 0 : index
      %26 = vector.load %arg9[%c0_18, %c0_19] : memref<256x256xf32, #tpu.memory_space<vmem>>, vector<256x256xf32>
      %c0_20 = arith.constant 0 : index
      %c0_21 = arith.constant 0 : index
      %27 = vector.load %arg8[%c0_20, %c0_21] : memref<1x256xf32, #tpu.memory_space<vmem>>, vector<1x256xf32>
      %28 = vector.broadcast %27 : vector<1x256xf32> to vector<256x256xf32>
      %29 = arith.addf %26, %28 : vector<256x256xf32>
      %c0_22 = arith.constant 0 : index
      %c0_23 = arith.constant 0 : index
      %30 = vector.load %arg9[%c0_22, %c0_23] : memref<256x256xf32, #tpu.memory_space<vmem>>, vector<256x256xf32>
      tpu.vector_store %arg9[%c0_22, %c0_23], %29 {strides = array<i32>} : memref<256x256xf32, #tpu.memory_space<vmem>>, vector<256x256xf32>,
    } else {
    }
    return
  }
  func.func @transform_0(%arg0: i32, %arg1: i32) -> (i32, i32) {
    %c0_i32 = arith.constant 0 : i32
    %c0_i32_0 = arith.constant 0 : i32
    return %arg0, %c0_i32 : i32, i32
  }
  func.func @transform_1(%arg0: i32, %arg1: i32) -> (i32, i32) {
    %c0_i32 = arith.constant 0 : i32
    %c0_i32_0 = arith.constant 0 : i32
    %c0_i32_1 = arith.constant 0 : i32
    return %c0_i32, %c0_i32_0 : i32, i32
  }
  func.func @transform_2(%arg0: i32, %arg1: i32) -> (i32, i32) {
    %c0_i32 = arith.constant 0 : i32
    %c0_i32_0 = arith.constant 0 : i32
    %c0_i32_1 = arith.constant 0 : i32
    return %c0_i32, %c0_i32_0 : i32, i32
  }
  func.func @transform_3(%arg0: i32, %arg1: i32) -> (i32, i32) {
    %c0_i32 = arith.constant 0 : i32
    %c0_i32_0 = arith.constant 0 : i32
    return %c0_i32, %arg1 : i32, i32
  }
  func.func @transform_4(%arg0: i32, %arg1: i32) -> (i32, i32) {
    %c0_i32 = arith.constant 0 : i32
    %c0_i32_0 = arith.constant 0 : i32
    return %c0_i32, %arg1 : i32, i32
  }
  func.func @transform_5(%arg0: i32, %arg1: i32) -> (i32, i32) {
    %c0_i32 = arith.constant 0 : i32
    %c0_i32_0 = arith.constant 0 : i32
    return %arg1, %c0_i32 : i32, i32
  }
  func.func @transform_6(%arg0: i32, %arg1: i32) -> (i32, i32) {
    %c0_i32 = arith.constant 0 : i32
    %c0_i32_0 = arith.constant 0 : i32
    %c0_i32_1 = arith.constant 0 : i32
    return %c0_i32, %c0_i32_0 : i32, i32
  }
  func.func @transform_7(%arg0: i32, %arg1: i32) -> (i32, i32) {
    %c0_i32 = arith.constant 0 : i32
    %c0_i32_0 = arith.constant 0 : i32
    return %arg0, %c0_i32 : i32, i32
  }
}

</mosaic_0001>

<llo_original>
// kernel: tpu_custom_call.1
$region0: #{tpu_custom_call.1}
  #allocation0 [shape = 'u32[]', space=smem, size = 0x4, offset = 0x4, fixed_abs, tag = 'smem constant byte address 0x4 - core index']
  #allocation1 [shape = 'u32[144,128]{1,0:T(1,128)}', space=vmem, size = 0x12000, scoped, tag = 'internal scratch']
  #allocation2 [shape = 'bf16[256,256]{1,0:T(8,128)(2,1)}', space=vmem, size = 0x20000, scoped, tag = 'scratch operand']
  %s0 = inlined_call_operand.hbm [shape: f32[256,256], index: 0, kind: input, shape index: {}]
  %s1 = inlined_call_operand.hbm [shape: f32[1,256], index: 1, kind: input, shape index: {}]
  %s2 = inlined_call_operand.vmem [shape: f32[1,256], index: 2, kind: input, shape index: {}]
  %s3 = inlined_call_operand.hbm [shape: bf16[256,512], index: 3, kind: input, shape index: {}]
  %s4 = inlined_call_operand.vmem [shape: f32[1,512], index: 4, kind: input, shape index: {}]
  %s5 = inlined_call_operand.hbm [shape: bf16[512,256], index: 5, kind: input, shape index: {}]
  %s6 = inlined_call_operand.vmem [shape: f32[1,256], index: 6, kind: input, shape index: {}]
  %s7 = inlined_call_operand.hbm [shape: f32[256,256], index: 7, kind: output, shape index: {}]
  %s8 = sld [smem:[#allocation0]]
  $region62: #{tpu_custom_call.1} parent=0
    _
  %s10 = ssub.s32 1, %s8
  %s11 = scalar_select 0, %s10, %s8
  $region1: #{tpu_custom_call.1} parent=0
    #allocation3 [shape = 'u8[262144]{0}', space=vmem, size = 0x40000, scoped, tag = 'input window, operand 0, single buffered']
    #allocation4 [shape = 's32[1]{0}', space=sflag, size = 0x4, scoped, tag = 'scoped memory for tpu_custom_call.1']
    #allocation5 [shape = 's32[1]{0}', space=sflag, size = 0x4, scoped, tag = 'scoped memory for tpu_custom_call.1']
    #allocation6 [shape = 'u8[1024]{0}', space=vmem, size = 0x400, scoped, tag = 'input window, operand 1, single buffered']
    #allocation7 [shape = 's32[1]{0}', space=sflag, size = 0x4, scoped, tag = 'scoped memory for tpu_custom_call.1']
    #allocation8 [shape = 'u8[262144]{0}', space=vmem, size = 0x40000, scoped, tag = 'input window, operand 3, single buffered']
    #allocation9 [shape = 'u8[262144]{0}', space=vmem, size = 0x40000, scoped, tag = 'input window, operand 5, single buffered']
    #allocation10 [shape = 's32[1]{0}', space=sflag, size = 0x4, scoped, tag = 'scoped memory for tpu_custom_call.1']
    #allocation11 [shape = 'u8[262144]{0}', space=vmem, size = 0x40000, scoped, tag = 'output window, operand 0, single buffered']
    %12 = vsyncpa [#allocation4], 0
    %13 = vsyncpa [#allocation7], 0
    %14 = vsyncpa [#allocation10], 0
    %15 = vsyncpa [#allocation5], 0
    // Predicated region
    $region2: #{tpu_custom_call.1} parent=1 // pred_check
      _
    $region3: #{tpu_custom_call.1} parent=1 // pred_check_branch
      %17 = sbr.rel (0) target = $region5
    $region4: #{tpu_custom_call.1} parent=1 // pred_region
      %s19 = ssub.s32 8192, 8192
      %20 = vsyncadd [#allocation4], %s19
      %s21 = sshll.u32 [#allocation3], 4
      %s22 = int_to_ptr.vmem [resolvable:$true] %s21
      %27 = dma.hbm_to_vmem [thread:$0]  %s0, 8192, %s22, [#allocation4], 256, 256, 16
    $region5: #{tpu_custom_call.1} parent=1 // pred_fallthru
      _
    // Predicated region
    $region6: #{tpu_custom_call.1} parent=1 // pred_check
      _
    $region7: #{tpu_custom_call.1} parent=1 // pred_check_branch
      %29 = sbr.rel (0) target = $region9
    $region8: #{tpu_custom_call.1} parent=1 // pred_region
      %s31 = ssub.s32 32, 32
      %32 = vsyncadd [#allocation7], %s31
      %s34 = sshll.u32 [#allocation6], 4
      %s35 = int_to_ptr.vmem [resolvable:$true] %s34
      %37 = dma.hbm_to_vmem [thread:$0]  %s1, 32, %s35, [#allocation7]
    $region9: #{tpu_custom_call.1} parent=1 // pred_fallthru
      _
    // Predicated region
    $region10: #{tpu_custom_call.1} parent=1 // pred_check
      _
    $region11: #{tpu_custom_call.1} parent=1 // pred_check_branch
      %39 = sbr.rel (0) target = $region13
    $region12: #{tpu_custom_call.1} parent=1 // pred_region
      _
    $region13: #{tpu_custom_call.1} parent=1 // pred_fallthru
      _
    // Predicated region
    $region14: #{tpu_custom_call.1} parent=1 // pred_check
      _
    $region15: #{tpu_custom_call.1} parent=1 // pred_check_branch
      %41 = sbr.rel (0) target = $region17
    $region16: #{tpu_custom_call.1} parent=1 // pred_region
      %s43 = ssub.s32 8192, 8192
      %44 = vsyncadd [#allocation7], %s43
      %s45 = sshll.u32 [#allocation8], 4
      %s46 = int_to_ptr.vmem [resolvable:$true] %s45
      %51 = dma.hbm_to_vmem [thread:$0]  %s3, 8192, %s46, [#allocation7], 256, 256, 16
    $region17: #{tpu_custom_call.1} parent=1 // pred_fallthru
      _
    // Predicated region
    $region18: #{tpu_custom_call.1} parent=1 // pred_check
      _
    $region19: #{tpu_custom_call.1} parent=1 // pred_check_branch
      %53 = sbr.rel (0) target = $region21
    $region20: #{tpu_custom_call.1} parent=1 // pred_region
      _
    $region21: #{tpu_custom_call.1} parent=1 // pred_fallthru
      _
    // Predicated region
    $region22: #{tpu_custom_call.1} parent=1 // pred_check
      _
    $region23: #{tpu_custom_call.1} parent=1 // pred_check_branch
      %55 = sbr.rel (0) target = $region25
    $region24: #{tpu_custom_call.1} parent=1 // pred_region
      %s57 = ssub.s32 8192, 8192
      %58 = vsyncadd [#allocation10], %s57
      %s59 = sshll.u32 [#allocation9], 4
      %s60 = int_to_ptr.vmem [resolvable:$true] %s59
      %65 = dma.hbm_to_vmem [thread:$0]  %s5, 8192, %s60, [#allocation10], 128, 128, 8
    $region25: #{tpu_custom_call.1} parent=1 // pred_fallthru
      _
    // Predicated region
    $region26: #{tpu_custom_call.1} parent=1 // pred_check
      _
    $region27: #{tpu_custom_call.1} parent=1 // pred_check_branch
      %67 = sbr.rel (0) target = $region29
    $region28: #{tpu_custom_call.1} parent=1 // pred_region
      _
    $region29: #{tpu_custom_call.1} parent=1 // pred_fallthru
      _
    // Predicated region
    $region30: #{tpu_custom_call.1} parent=1 // pred_check
      _
    $region31: #{tpu_custom_call.1} parent=1 // pred_check_branch
      %69 = sbr.rel (0) target = $region33
    $region32: #{tpu_custom_call.1} parent=1 // pred_region
      %70 = dma.done [#allocation4], 8192
    $region33: #{tpu_custom_call.1} parent=1 // pred_fallthru
      _
    // Predicated region
    $region34: #{tpu_custom_call.1} parent=1 // pred_check
      _
    $region35: #{tpu_custom_call.1} parent=1 // pred_check_branch
      %72 = sbr.rel (0) target = $region37
    $region36: #{tpu_custom_call.1} parent=1 // pred_region
      %73 = dma.done [#allocation7], 32
    $region37: #{tpu_custom_call.1} parent=1 // pred_fallthru
      _
    // Predicated region
    $region38: #{tpu_custom_call.1} parent=1 // pred_check
      _
    $region39: #{tpu_custom_call.1} parent=1 // pred_check_branch
      %75 = sbr.rel (0) target = $region41
    $region40: #{tpu_custom_call.1} parent=1 // pred_region
      %76 = dma.done [#allocation7], 8192
    $region41: #{tpu_custom_call.1} parent=1 // pred_fallthru
      _
    // Predicated region
    $region42: #{tpu_custom_call.1} parent=1 // pred_check
      _
    $region43: #{tpu_custom_call.1} parent=1 // pred_check_branch
      %78 = sbr.rel (0) target = $region45
    $region44: #{tpu_custom_call.1} parent=1 // pred_region
      %79 = dma.done [#allocation10], 8192
    $region45: #{tpu_custom_call.1} parent=1 // pred_fallthru
      _
    %p80 = scmp.eq.s32.totalorder 0, 0
    // Predicated region
    $region46: #{tpu_custom_call.1} parent=1 // pred_check
      %p81 = pneg %p80
    $region47: #{tpu_custom_call.1} parent=1 // pred_check_branch
      %83 = sbr.rel (%p81) target = $region49
    $region48: #{tpu_custom_call.1} parent=1 // pred_region
      %v84 = vld [vmem:[#allocation3] sm:$0xff]
      %v85 = vld [vmem:[#allocation3 + $0x8] sm:$0xff]
      %v86 = vld [vmem:[#allocation3 + $0x10] sm:$0xff]
      %v87 = vld [vmem:[#allocation3 + $0x18] sm:$0xff]
      %v88 = vld [vmem:[#allocation3 + $0x20] sm:$0xff]
      %v89 = vld [vmem:[#allocation3 + $0x28] sm:$0xff]
      %v90 = vld [vmem:[#allocation3 + $0x30] sm:$0xff]
      %v91 = vld [vmem:[#allocation3 + $0x38] sm:$0xff]
      %v92 = vld [vmem:[#allocation3 + $0x40] sm:$0xff]
      %v93 = vld [vmem:[#allocation3 + $0x48] sm:$0xff]
      %v94 = vld [vmem:[#allocation3 + $0x50] sm:$0xff]
      %v95 = vld [vmem:[#allocation3 + $0x58] sm:$0xff]
      %v96 = vld [vmem:[#allocation3 + $0x60] sm:$0xff]
      %v97 = vld [vmem:[#allocation3 + $0x68] sm:$0xff]
      %v98 = vld [vmem:[#allocation3 + $0x70] sm:$0xff]
      %v99 = vld [vmem:[#allocation3 + $0x78] sm:$0xff]
      %v100 = vld [vmem:[#allocation3 + $0x80] sm:$0xff]
      %v101 = vld [vmem:[#allocation3 + $0x88] sm:$0xff]
      %v102 = vld [vmem:[#allocation3 + $0x90] sm:$0xff]
      %v103 = vld [vmem:[#allocation3 + $0x98] sm:$0xff]
      %v104 = vld [vmem:[#allocation3 + $0xa0] sm:$0xff]
      %v105 = vld [vmem:[#allocation3 + $0xa8] sm:$0xff]
      %v106 = vld [vmem:[#allocation3 + $0xb0] sm:$0xff]
      %v107 = vld [vmem:[#allocation3 + $0xb8] sm:$0xff]
      %v108 = vld [vmem:[#allocation3 + $0xc0] sm:$0xff]
      %v109 = vld [vmem:[#allocation3 + $0xc8] sm:$0xff]
      %v110 = vld [vmem:[#allocation3 + $0xd0] sm:$0xff]
      %v111 = vld [vmem:[#allocation3 + $0xd8] sm:$0xff]
      %v112 = vld [vmem:[#allocation3 + $0xe0] sm:$0xff]
      %v113 = vld [vmem:[#allocation3 + $0xe8] sm:$0xff]
      %v114 = vld [vmem:[#allocation3 + $0xf0] sm:$0xff]
      %v115 = vld [vmem:[#allocation3 + $0xf8] sm:$0xff]
      %v116 = vld [vmem:[#allocation3 + $0x100] sm:$0xff]
      %v117 = vld [vmem:[#allocation3 + $0x108] sm:$0xff]
      %v118 = vld [vmem:[#allocation3 + $0x110] sm:$0xff]
      %v119 = vld [vmem:[#allocation3 + $0x118] sm:$0xff]
      %v120 = vld [vmem:[#allocation3 + $0x120] sm:$0xff]
      %v121 = vld [vmem:[#allocation3 + $0x128] sm:$0xff]
      %v122 = vld [vmem:[#allocation3 + $0x130] sm:$0xff]
      %v123 = vld [vmem:[#allocation3 + $0x138] sm:$0xff]
      %v124 = vld [vmem:[#allocation3 + $0x140] sm:$0xff]
      %v125 = vld [vmem:[#allocation3 + $0x148] sm:$0xff]
      %v126 = vld [vmem:[#allocation3 + $0x150] sm:$0xff]
      %v127 = vld [vmem:[#allocation3 + $0x158] sm:$0xff]
      %v128 = vld [vmem:[#allocation3 + $0x160] sm:$0xff]
      %v129 = vld [vmem:[#allocation3 + $0x168] sm:$0xff]
      %v130 = vld [vmem:[#allocation3 + $0x170] sm:$0xff]
      %v131 = vld [vmem:[#allocation3 + $0x178] sm:$0xff]
      %v132 = vld [vmem:[#allocation3 + $0x180] sm:$0xff]
      %v133 = vld [vmem:[#allocation3 + $0x188] sm:$0xff]
      %v134 = vld [vmem:[#allocation3 + $0x190] sm:$0xff]
      %v135 = vld [vmem:[#allocation3 + $0x198] sm:$0xff]
      %v136 = vld [vmem:[#allocation3 + $0x1a0] sm:$0xff]
      %v137 = vld [vmem:[#allocation3 + $0x1a8] sm:$0xff]
      %v138 = vld [vmem:[#allocation3 + $0x1b0] sm:$0xff]
      %v139 = vld [vmem:[#allocation3 + $0x1b8] sm:$0xff]
      %v140 = vld [vmem:[#allocation3 + $0x1c0] sm:$0xff]
      %v141 = vld [vmem:[#allocation3 + $0x1c8] sm:$0xff]
      %v142 = vld [vmem:[#allocation3 + $0x1d0] sm:$0xff]
      %v143 = vld [vmem:[#allocation3 + $0x1d8] sm:$0xff]
      %v144 = vld [vmem:[#allocation3 + $0x1e0] sm:$0xff]
      %v145 = vld [vmem:[#allocation3 + $0x1e8] sm:$0xff]
      %v146 = vld [vmem:[#allocation3 + $0x1f0] sm:$0xff]
      %v147 = vld [vmem:[#allocation3 + $0x1f8] sm:$0xff]
      %v148 = vadd.f32 %v84, %v85
      %149 = vadd.xlane.f32.xlu0 %v148
      %v150 = vpop.xlane.xlu0 %149
      %v151 = vadd.f32 %v86, %v87
      %152 = vadd.xlane.f32.xlu0 %v151
      %v153 = vpop.xlane.xlu0 %152
      %v154 = vadd.f32 %v88, %v89
      %155 = vadd.xlane.f32.xlu0 %v154
      %v156 = vpop.xlane.xlu0 %155
      %v157 = vadd.f32 %v90, %v91
      %158 = vadd.xlane.f32.xlu0 %v157
      %v159 = vpop.xlane.xlu0 %158
      %v160 = vadd.f32 %v92, %v93
      %161 = vadd.xlane.f32.xlu0 %v160
      %v162 = vpop.xlane.xlu0 %161
      %v163 = vadd.f32 %v94, %v95
      %164 = vadd.xlane.f32.xlu0 %v163
      %v165 = vpop.xlane.xlu0 %164
      %v166 = vadd.f32 %v96, %v97
      %167 = vadd.xlane.f32.xlu0 %v166
      %v168 = vpop.xlane.xlu0 %167
      %v169 = vadd.f32 %v98, %v99
      %170 = vadd.xlane.f32.xlu0 %v169
      %v171 = vpop.xlane.xlu0 %170
      %v172 = vadd.f32 %v100, %v101
      %173 = vadd.xlane.f32.xlu0 %v172
      %v174 = vpop.xlane.xlu0 %173
      %v175 = vadd.f32 %v102, %v103
      %176 = vadd.xlane.f32.xlu0 %v175
      %v177 = vpop.xlane.xlu0 %176
      %v178 = vadd.f32 %v104, %v105
      %179 = vadd.xlane.f32.xlu0 %v178
      %v180 = vpop.xlane.xlu0 %179
      %v181 = vadd.f32 %v106, %v107
      %182 = vadd.xlane.f32.xlu0 %v181
      %v183 = vpop.xlane.xlu0 %182
      %v184 = vadd.f32 %v108, %v109
      %185 = vadd.xlane.f32.xlu0 %v184
      %v186 = vpop.xlane.xlu0 %185
      %v187 = vadd.f32 %v110, %v111
      %188 = vadd.xlane.f32.xlu0 %v187
      %v189 = vpop.xlane.xlu0 %188
      %v190 = vadd.f32 %v112, %v113
      %191 = vadd.xlane.f32.xlu0 %v190
      %v192 = vpop.xlane.xlu0 %191
      %v193 = vadd.f32 %v114, %v115
      %194 = vadd.xlane.f32.xlu0 %v193
      %v195 = vpop.xlane.xlu0 %194
      %v196 = vadd.f32 %v116, %v117
      %197 = vadd.xlane.f32.xlu0 %v196
      %v198 = vpop.xlane.xlu0 %197
      %v199 = vadd.f32 %v118, %v119
      %200 = vadd.xlane.f32.xlu0 %v199
      %v201 = vpop.xlane.xlu0 %200
      %v202 = vadd.f32 %v120, %v121
      %203 = vadd.xlane.f32.xlu0 %v202
      %v204 = vpop.xlane.xlu0 %203
      %v205 = vadd.f32 %v122, %v123
      %206 = vadd.xlane.f32.xlu0 %v205
      %v207 = vpop.xlane.xlu0 %206
      %v208 = vadd.f32 %v124, %v125
      %209 = vadd.xlane.f32.xlu0 %v208
      %v210 = vpop.xlane.xlu0 %209
      %v211 = vadd.f32 %v126, %v127
      %212 = vadd.xlane.f32.xlu0 %v211
      %v213 = vpop.xlane.xlu0 %212
      %v214 = vadd.f32 %v128, %v129
      %215 = vadd.xlane.f32.xlu0 %v214
      %v216 = vpop.xlane.xlu0 %215
      %v217 = vadd.f32 %v130, %v131
      %218 = vadd.xlane.f32.xlu0 %v217
      %v219 = vpop.xlane.xlu0 %218
      %v220 = vadd.f32 %v132, %v133
      %221 = vadd.xlane.f32.xlu0 %v220
      %v222 = vpop.xlane.xlu0 %221
      %v223 = vadd.f32 %v134, %v135
      %224 = vadd.xlane.f32.xlu0 %v223
      %v225 = vpop.xlane.xlu0 %224
      %v226 = vadd.f32 %v136, %v137
      %227 = vadd.xlane.f32.xlu0 %v226
      %v228 = vpop.xlane.xlu0 %227
      %v229 = vadd.f32 %v138, %v139
      %230 = vadd.xlane.f32.xlu0 %v229
      %v231 = vpop.xlane.xlu0 %230
      %v232 = vadd.f32 %v140, %v141
      %233 = vadd.xlane.f32.xlu0 %v232
      %v234 = vpop.xlane.xlu0 %233
      %v235 = vadd.f32 %v142, %v143
      %236 = vadd.xlane.f32.xlu0 %v235
      %v237 = vpop.xlane.xlu0 %236
      %v238 = vadd.f32 %v144, %v145
      %239 = vadd.xlane.f32.xlu0 %v238
      %v240 = vpop.xlane.xlu0 %239
      %v241 = vadd.f32 %v146, %v147
      %242 = vadd.xlane.f32.xlu0 %v241
      %v243 = vpop.xlane.xlu0 %242
      %v244 = vrcp.pop 256.0
      %v245 = vmul.f32 %v150, %v244
      %v246 = vmul.f32 %v153, %v244
      %v247 = vmul.f32 %v156, %v244
      %v248 = vmul.f32 %v159, %v244
      %v249 = vmul.f32 %v162, %v244
      %v250 = vmul.f32 %v165, %v244
      %v251 = vmul.f32 %v168, %v244
      %v252 = vmul.f32 %v171, %v244
      %v253 = vmul.f32 %v174, %v244
      %v254 = vmul.f32 %v177, %v244
      %v255 = vmul.f32 %v180, %v244
      %v256 = vmul.f32 %v183, %v244
      %v257 = vmul.f32 %v186, %v244
      %v258 = vmul.f32 %v189, %v244
      %v259 = vmul.f32 %v192, %v244
      %v260 = vmul.f32 %v195, %v244
      %v261 = vmul.f32 %v198, %v244
      %v262 = vmul.f32 %v201, %v244
      %v263 = vmul.f32 %v204, %v244
      %v264 = vmul.f32 %v207, %v244
      %v265 = vmul.f32 %v210, %v244
      %v266 = vmul.f32 %v213, %v244
      %v267 = vmul.f32 %v216, %v244
      %v268 = vmul.f32 %v219, %v244
      %v269 = vmul.f32 %v222, %v244
      %v270 = vmul.f32 %v225, %v244
      %v271 = vmul.f32 %v228, %v244
      %v272 = vmul.f32 %v231, %v244
      %v273 = vmul.f32 %v234, %v244
      %v274 = vmul.f32 %v237, %v244
      %v275 = vmul.f32 %v240, %v244
      %v276 = vmul.f32 %v243, %v244
      %v277 = vsub.f32 %v84, %v245
      %v278 = vsub.f32 %v85, %v245
      %v279 = vsub.f32 %v86, %v246
      %v280 = vsub.f32 %v87, %v246
      %v281 = vsub.f32 %v88, %v247
      %v282 = vsub.f32 %v89, %v247
      %v283 = vsub.f32 %v90, %v248
      %v284 = vsub.f32 %v91, %v248
      %v285 = vsub.f32 %v92, %v249
      %v286 = vsub.f32 %v93, %v249
      %v287 = vsub.f32 %v94, %v250
      %v288 = vsub.f32 %v95, %v250
      %v289 = vsub.f32 %v96, %v251
      %v290 = vsub.f32 %v97, %v251
      %v291 = vsub.f32 %v98, %v252
      %v292 = vsub.f32 %v99, %v252
      %v293 = vsub.f32 %v100, %v253
      %v294 = vsub.f32 %v101, %v253
      %v295 = vsub.f32 %v102, %v254
      %v296 = vsub.f32 %v103, %v254
      %v297 = vsub.f32 %v104, %v255
      %v298 = vsub.f32 %v105, %v255
      %v299 = vsub.f32 %v106, %v256
      %v300 = vsub.f32 %v107, %v256
      %v301 = vsub.f32 %v108, %v257
      %v302 = vsub.f32 %v109, %v257
      %v303 = vsub.f32 %v110, %v258
      %v304 = vsub.f32 %v111, %v258
      %v305 = vsub.f32 %v112, %v259
      %v306 = vsub.f32 %v113, %v259
      %v307 = vsub.f32 %v114, %v260
      %v308 = vsub.f32 %v115, %v260
      %v309 = vsub.f32 %v116, %v261
      %v310 = vsub.f32 %v117, %v261
      %v311 = vsub.f32 %v118, %v262
      %v312 = vsub.f32 %v119, %v262
      %v313 = vsub.f32 %v120, %v263
      %v314 = vsub.f32 %v121, %v263
      %v315 = vsub.f32 %v122, %v264
      %v316 = vsub.f32 %v123, %v264
      %v317 = vsub.f32 %v124, %v265
      %v318 = vsub.f32 %v125, %v265
      %v319 = vsub.f32 %v126, %v266
      %v320 = vsub.f32 %v127, %v266
      %v321 = vsub.f32 %v128, %v267
      %v322 = vsub.f32 %v129, %v267
      %v323 = vsub.f32 %v130, %v268
      %v324 = vsub.f32 %v131, %v268
      %v325 = vsub.f32 %v132, %v269
      %v326 = vsub.f32 %v133, %v269
      %v327 = vsub.f32 %v134, %v270
      %v328 = vsub.f32 %v135, %v270
      %v329 = vsub.f32 %v136, %v271
      %v330 = vsub.f32 %v137, %v271
      %v331 = vsub.f32 %v138, %v272
      %v332 = vsub.f32 %v139, %v272
      %v333 = vsub.f32 %v140, %v273
      %v334 = vsub.f32 %v141, %v273
      %v335 = vsub.f32 %v142, %v274
      %v336 = vsub.f32 %v143, %v274
      %v337 = vsub.f32 %v144, %v275
      %v338 = vsub.f32 %v145, %v275
      %v339 = vsub.f32 %v146, %v276
      %v340 = vsub.f32 %v147, %v276
      %v341 = vmul.f32 %v277, %v277
      %v342 = vmul.f32 %v278, %v278
      %v343 = vmul.f32 %v279, %v279
      %v344 = vmul.f32 %v280, %v280
      %v345 = vmul.f32 %v281, %v281
      %v346 = vmul.f32 %v282, %v282
      %v347 = vmul.f32 %v283, %v283
      %v348 = vmul.f32 %v284, %v284
      %v349 = vmul.f32 %v285, %v285
      %v350 = vmul.f32 %v286, %v286
      %v351 = vmul.f32 %v287, %v287
      %v352 = vmul.f32 %v288, %v288
      %v353 = vmul.f32 %v289, %v289
      %v354 = vmul.f32 %v290, %v290
      %v355 = vmul.f32 %v291, %v291
      %v356 = vmul.f32 %v292, %v292
      %v357 = vmul.f32 %v293, %v293
      %v358 = vmul.f32 %v294, %v294
      %v359 = vmul.f32 %v295, %v295
      %v360 = vmul.f32 %v296, %v296
      %v361 = vmul.f32 %v297, %v297
      %v362 = vmul.f32 %v298, %v298
      %v363 = vmul.f32 %v299, %v299
      %v364 = vmul.f32 %v300, %v300
      %v365 = vmul.f32 %v301, %v301
      %v366 = vmul.f32 %v302, %v302
      %v367 = vmul.f32 %v303, %v303
      %v368 = vmul.f32 %v304, %v304
      %v369 = vmul.f32 %v305, %v305
      %v370 = vmul.f32 %v306, %v306
      %v371 = vmul.f32 %v307, %v307
      %v372 = vmul.f32 %v308, %v308
      %v373 = vmul.f32 %v309, %v309
      %v374 = vmul.f32 %v310, %v310
      %v375 = vmul.f32 %v311, %v311
      %v376 = vmul.f32 %v312, %v312
      %v377 = vmul.f32 %v313, %v313
      %v378 = vmul.f32 %v314, %v314
      %v379 = vmul.f32 %v315, %v315
      %v380 = vmul.f32 %v316, %v316
      %v381 = vmul.f32 %v317, %v317
      %v382 = vmul.f32 %v318, %v318
      %v383 = vmul.f32 %v319, %v319
      %v384 = vmul.f32 %v320, %v320
      %v385 = vmul.f32 %v321, %v321
      %v386 = vmul.f32 %v322, %v322
      %v387 = vmul.f32 %v323, %v323
      %v388 = vmul.f32 %v324, %v324
      %v389 = vmul.f32 %v325, %v325
      %v390 = vmul.f32 %v326, %v326
      %v391 = vmul.f32 %v327, %v327
      %v392 = vmul.f32 %v328, %v328
      %v393 = vmul.f32 %v329, %v329
      %v394 = vmul.f32 %v330, %v330
      %v395 = vmul.f32 %v331, %v331
      %v396 = vmul.f32 %v332, %v332
      %v397 = vmul.f32 %v333, %v333
      %v398 = vmul.f32 %v334, %v334
      %v399 = vmul.f32 %v335, %v335
      %v400 = vmul.f32 %v336, %v336
      %v401 = vmul.f32 %v337, %v337
      %v402 = vmul.f32 %v338, %v338
      %v403 = vmul.f32 %v339, %v339
      %v404 = vmul.f32 %v340, %v340
      %v405 = vadd.f32 %v341, %v342
      %406 = vadd.xlane.f32.xlu0 %v405
      %v407 = vpop.xlane.xlu0 %406
      %v408 = vadd.f32 %v343, %v344
      %409 = vadd.xlane.f32.xlu0 %v408
      %v410 = vpop.xlane.xlu0 %409
      %v411 = vadd.f32 %v345, %v346
      %412 = vadd.xlane.f32.xlu0 %v411
      %v413 = vpop.xlane.xlu0 %412
      %v414 = vadd.f32 %v347, %v348
      %415 = vadd.xlane.f32.xlu0 %v414
      %v416 = vpop.xlane.xlu0 %415
      %v417 = vadd.f32 %v349, %v350
      %418 = vadd.xlane.f32.xlu0 %v417
      %v419 = vpop.xlane.xlu0 %418
      %v420 = vadd.f32 %v351, %v352
      %421 = vadd.xlane.f32.xlu0 %v420
      %v422 = vpop.xlane.xlu0 %421
      %v423 = vadd.f32 %v353, %v354
      %424 = vadd.xlane.f32.xlu0 %v423
      %v425 = vpop.xlane.xlu0 %424
      %v426 = vadd.f32 %v355, %v356
      %427 = vadd.xlane.f32.xlu0 %v426
      %v428 = vpop.xlane.xlu0 %427
      %v429 = vadd.f32 %v357, %v358
      %430 = vadd.xlane.f32.xlu0 %v429
      %v431 = vpop.xlane.xlu0 %430
      %v432 = vadd.f32 %v359, %v360
      %433 = vadd.xlane.f32.xlu0 %v432
      %v434 = vpop.xlane.xlu0 %433
      %v435 = vadd.f32 %v361, %v362
      %436 = vadd.xlane.f32.xlu0 %v435
      %v437 = vpop.xlane.xlu0 %436
      %v438 = vadd.f32 %v363, %v364
      %439 = vadd.xlane.f32.xlu0 %v438
      %v440 = vpop.xlane.xlu0 %439
      %v441 = vadd.f32 %v365, %v366
      %442 = vadd.xlane.f32.xlu0 %v441
      %v443 = vpop.xlane.xlu0 %442
      %v444 = vadd.f32 %v367, %v368
      %445 = vadd.xlane.f32.xlu0 %v444
      %v446 = vpop.xlane.xlu0 %445
      %v447 = vadd.f32 %v369, %v370
      %448 = vadd.xlane.f32.xlu0 %v447
      %v449 = vpop.xlane.xlu0 %448
      %v450 = vadd.f32 %v371, %v372
      %451 = vadd.xlane.f32.xlu0 %v450
      %v452 = vpop.xlane.xlu0 %451
      %v453 = vadd.f32 %v373, %v374
      %454 = vadd.xlane.f32.xlu0 %v453
      %v455 = vpop.xlane.xlu0 %454
      %v456 = vadd.f32 %v375, %v376
      %457 = vadd.xlane.f32.xlu0 %v456
      %v458 = vpop.xlane.xlu0 %457
      %v459 = vadd.f32 %v377, %v378
      %460 = vadd.xlane.f32.xlu0 %v459
      %v461 = vpop.xlane.xlu0 %460
      %v462 = vadd.f32 %v379, %v380
      %463 = vadd.xlane.f32.xlu0 %v462
      %v464 = vpop.xlane.xlu0 %463
      %v465 = vadd.f32 %v381, %v382
      %466 = vadd.xlane.f32.xlu0 %v465
      %v467 = vpop.xlane.xlu0 %466
      %v468 = vadd.f32 %v383, %v384
      %469 = vadd.xlane.f32.xlu0 %v468
      %v470 = vpop.xlane.xlu0 %469
      %v471 = vadd.f32 %v385, %v386
      %472 = vadd.xlane.f32.xlu0 %v471
      %v473 = vpop.xlane.xlu0 %472
      %v474 = vadd.f32 %v387, %v388
      %475 = vadd.xlane.f32.xlu0 %v474
      %v476 = vpop.xlane.xlu0 %475
      %v477 = vadd.f32 %v389, %v390
      %478 = vadd.xlane.f32.xlu0 %v477
      %v479 = vpop.xlane.xlu0 %478
      %v480 = vadd.f32 %v391, %v392
      %481 = vadd.xlane.f32.xlu0 %v480
      %v482 = vpop.xlane.xlu0 %481
      %v483 = vadd.f32 %v393, %v394
      %484 = vadd.xlane.f32.xlu0 %v483
      %v485 = vpop.xlane.xlu0 %484
      %v486 = vadd.f32 %v395, %v396
      %487 = vadd.xlane.f32.xlu0 %v486
      %v488 = vpop.xlane.xlu0 %487
      %v489 = vadd.f32 %v397, %v398
      %490 = vadd.xlane.f32.xlu0 %v489
      %v491 = vpop.xlane.xlu0 %490
      %v492 = vadd.f32 %v399, %v400
      %493 = vadd.xlane.f32.xlu0 %v492
      %v494 = vpop.xlane.xlu0 %493
      %v495 = vadd.f32 %v401, %v402
      %496 = vadd.xlane.f32.xlu0 %v495
      %v497 = vpop.xlane.xlu0 %496
      %v498 = vadd.f32 %v403, %v404
      %499 = vadd.xlane.f32.xlu0 %v498
      %v500 = vpop.xlane.xlu0 %499
      %v501 = vmul.f32 %v407, %v244
      %v502 = vmul.f32 %v410, %v244
      %v503 = vmul.f32 %v413, %v244
      %v504 = vmul.f32 %v416, %v244
      %v505 = vmul.f32 %v419, %v244
      %v506 = vmul.f32 %v422, %v244
      %v507 = vmul.f32 %v425, %v244
      %v508 = vmul.f32 %v428, %v244
      %v509 = vmul.f32 %v431, %v244
      %v510 = vmul.f32 %v434, %v244
      %v511 = vmul.f32 %v437, %v244
      %v512 = vmul.f32 %v440, %v244
      %v513 = vmul.f32 %v443, %v244
      %v514 = vmul.f32 %v446, %v244
      %v515 = vmul.f32 %v449, %v244
      %v516 = vmul.f32 %v452, %v244
      %v517 = vmul.f32 %v455, %v244
      %v518 = vmul.f32 %v458, %v244
      %v519 = vmul.f32 %v461, %v244
      %v520 = vmul.f32 %v464, %v244
      %v521 = vmul.f32 %v467, %v244
      %v522 = vmul.f32 %v470, %v244
      %v523 = vmul.f32 %v473, %v244
      %v524 = vmul.f32 %v476, %v244
      %v525 = vmul.f32 %v479, %v244
      %v526 = vmul.f32 %v482, %v244
      %v527 = vmul.f32 %v485, %v244
      %v528 = vmul.f32 %v488, %v244
      %v529 = vmul.f32 %v491, %v244
      %v530 = vmul.f32 %v494, %v244
      %v531 = vmul.f32 %v497, %v244
      %v532 = vmul.f32 %v500, %v244
      %v533 = vadd.f32 %v501, 1e-05
      %v534 = vadd.f32 %v502, 1e-05
      %v535 = vadd.f32 %v503, 1e-05
      %v536 = vadd.f32 %v504, 1e-05
      %v537 = vadd.f32 %v505, 1e-05
      %v538 = vadd.f32 %v506, 1e-05
      %v539 = vadd.f32 %v507, 1e-05
      %v540 = vadd.f32 %v508, 1e-05
      %v541 = vadd.f32 %v509, 1e-05
      %v542 = vadd.f32 %v510, 1e-05
      %v543 = vadd.f32 %v511, 1e-05
      %v544 = vadd.f32 %v512, 1e-05
      %v545 = vadd.f32 %v513, 1e-05
      %v546 = vadd.f32 %v514, 1e-05
      %v547 = vadd.f32 %v515, 1e-05
      %v548 = vadd.f32 %v516, 1e-05
      %v549 = vadd.f32 %v517, 1e-05
      %v550 = vadd.f32 %v518, 1e-05
      %v551 = vadd.f32 %v519, 1e-05
      %v552 = vadd.f32 %v520, 1e-05
      %v553 = vadd.f32 %v521, 1e-05
      %v554 = vadd.f32 %v522, 1e-05
      %v555 = vadd.f32 %v523, 1e-05
      %v556 = vadd.f32 %v524, 1e-05
      %v557 = vadd.f32 %v525, 1e-05
      %v558 = vadd.f32 %v526, 1e-05
      %v559 = vadd.f32 %v527, 1e-05
      %v560 = vadd.f32 %v528, 1e-05
      %v561 = vadd.f32 %v529, 1e-05
      %v562 = vadd.f32 %v530, 1e-05
      %v563 = vadd.f32 %v531, 1e-05
      %v564 = vadd.f32 %v532, 1e-05
      %v565 = vrsqrt.pop %v533
      %v566 = vrsqrt.pop %v534
      %v567 = vrsqrt.pop %v535
      %v568 = vrsqrt.pop %v536
      %v569 = vrsqrt.pop %v537
      %v570 = vrsqrt.pop %v538
      %v571 = vrsqrt.pop %v539
      %v572 = vrsqrt.pop %v540
      %v573 = vrsqrt.pop %v541
      %v574 = vrsqrt.pop %v542
      %v575 = vrsqrt.pop %v543
      %v576 = vrsqrt.pop %v544
      %v577 = vrsqrt.pop %v545
      %v578 = vrsqrt.pop %v546
      %v579 = vrsqrt.pop %v547
      %v580 = vrsqrt.pop %v548
      %v581 = vrsqrt.pop %v549
      %v582 = vrsqrt.pop %v550
      %v583 = vrsqrt.pop %v551
      %v584 = vrsqrt.pop %v552
      %v585 = vrsqrt.pop %v553
      %v586 = vrsqrt.pop %v554
      %v587 = vrsqrt.pop %v555
      %v588 = vrsqrt.pop %v556
      %v589 = vrsqrt.pop %v557
      %v590 = vrsqrt.pop %v558
      %v591 = vrsqrt.pop %v559
      %v592 = vrsqrt.pop %v560
      %v593 = vrsqrt.pop %v561
      %v594 = vrsqrt.pop %v562
      %v595 = vrsqrt.pop %v563
      %v596 = vrsqrt.pop %v564
      %v597 = vmul.f32 %v277, %v565
      %v598 = vmul.f32 %v278, %v565
      %v599 = vmul.f32 %v279, %v566
      %v600 = vmul.f32 %v280, %v566
      %v601 = vmul.f32 %v281, %v567
      %v602 = vmul.f32 %v282, %v567
      %v603 = vmul.f32 %v283, %v568
      %v604 = vmul.f32 %v284, %v568
      %v605 = vmul.f32 %v285, %v569
      %v606 = vmul.f32 %v286, %v569
      %v607 = vmul.f32 %v287, %v570
      %v608 = vmul.f32 %v288, %v570
      %v609 = vmul.f32 %v289, %v571
      %v610 = vmul.f32 %v290, %v571
      %v611 = vmul.f32 %v291, %v572
      %v612 = vmul.f32 %v292, %v572
      %v613 = vmul.f32 %v293, %v573
      %v614 = vmul.f32 %v294, %v573
      %v615 = vmul.f32 %v295, %v574
      %v616 = vmul.f32 %v296, %v574
      %v617 = vmul.f32 %v297, %v575
      %v618 = vmul.f32 %v298, %v575
      %v619 = vmul.f32 %v299, %v576
      %v620 = vmul.f32 %v300, %v576
      %v621 = vmul.f32 %v301, %v577
      %v622 = vmul.f32 %v302, %v577
      %v623 = vmul.f32 %v303, %v578
      %v624 = vmul.f32 %v304, %v578
      %v625 = vmul.f32 %v305, %v579
      %v626 = vmul.f32 %v306, %v579
      %v627 = vmul.f32 %v307, %v580
      %v628 = vmul.f32 %v308, %v580
      %v629 = vmul.f32 %v309, %v581
      %v630 = vmul.f32 %v310, %v581
      %v631 = vmul.f32 %v311, %v582
      %v632 = vmul.f32 %v312, %v582
      %v633 = vmul.f32 %v313, %v583
      %v634 = vmul.f32 %v314, %v583
      %v635 = vmul.f32 %v315, %v584
      %v636 = vmul.f32 %v316, %v584
      %v637 = vmul.f32 %v317, %v585
      %v638 = vmul.f32 %v318, %v585
      %v639 = vmul.f32 %v319, %v586
      %v640 = vmul.f32 %v320, %v586
      %v641 = vmul.f32 %v321, %v587
      %v642 = vmul.f32 %v322, %v587
      %v643 = vmul.f32 %v323, %v588
      %v644 = vmul.f32 %v324, %v588
      %v645 = vmul.f32 %v325, %v589
      %v646 = vmul.f32 %v326, %v589
      %v647 = vmul.f32 %v327, %v590
      %v648 = vmul.f32 %v328, %v590
      %v649 = vmul.f32 %v329, %v591
      %v650 = vmul.f32 %v330, %v591
      %v651 = vmul.f32 %v331, %v592
      %v652 = vmul.f32 %v332, %v592
      %v653 = vmul.f32 %v333, %v593
      %v654 = vmul.f32 %v334, %v593
      %v655 = vmul.f32 %v335, %v594
      %v656 = vmul.f32 %v336, %v594
      %v657 = vmul.f32 %v337, %v595
      %v658 = vmul.f32 %v338, %v595
      %v659 = vmul.f32 %v339, %v596
      %v660 = vmul.f32 %v340, %v596
      %v661 = vld [vmem:[#allocation6] sm:$0x3]
      %v663 = vlaneseq
      %v664 = vshrl.u32 %v663, 7
      %v665 = vsub.s32 0, %v664
      %v666 = vrot.slane %v661, %v665
      %v667 = vlaneseq
      %v668 = vshrl.u32 %v667, 7
      %v669 = vsub.s32 1, %v668
      %v670 = vrot.slane %v661, %v669
      %v673 = vmul.f32 %v597, %v666
      %v674 = vmul.f32 %v598, %v670
      %v675 = vmul.f32 %v599, %v666
      %v676 = vmul.f32 %v600, %v670
      %v677 = vmul.f32 %v601, %v666
      %v678 = vmul.f32 %v602, %v670
      %v679 = vmul.f32 %v603, %v666
      %v680 = vmul.f32 %v604, %v670
      %v681 = vmul.f32 %v605, %v666
      %v682 = vmul.f32 %v606, %v670
      %v683 = vmul.f32 %v607, %v666
      %v684 = vmul.f32 %v608, %v670
      %v685 = vmul.f32 %v609, %v666
      %v686 = vmul.f32 %v610, %v670
      %v687 = vmul.f32 %v611, %v666
      %v688 = vmul.f32 %v612, %v670
      %v689 = vmul.f32 %v613, %v666
      %v690 = vmul.f32 %v614, %v670
      %v691 = vmul.f32 %v615, %v666
      %v692 = vmul.f32 %v616, %v670
      %v693 = vmul.f32 %v617, %v666
      %v694 = vmul.f32 %v618, %v670
      %v695 = vmul.f32 %v619, %v666
      %v696 = vmul.f32 %v620, %v670
      %v697 = vmul.f32 %v621, %v666
      %v698 = vmul.f32 %v622, %v670
      %v699 = vmul.f32 %v623, %v666
      %v700 = vmul.f32 %v624, %v670
      %v701 = vmul.f32 %v625, %v666
      %v702 = vmul.f32 %v626, %v670
      %v703 = vmul.f32 %v627, %v666
      %v704 = vmul.f32 %v628, %v670
      %v705 = vmul.f32 %v629, %v666
      %v706 = vmul.f32 %v630, %v670
      %v707 = vmul.f32 %v631, %v666
      %v708 = vmul.f32 %v632, %v670
      %v709 = vmul.f32 %v633, %v666
      %v710 = vmul.f32 %v634, %v670
      %v711 = vmul.f32 %v635, %v666
      %v712 = vmul.f32 %v636, %v670
      %v713 = vmul.f32 %v637, %v666
      %v714 = vmul.f32 %v638, %v670
      %v715 = vmul.f32 %v639, %v666
      %v716 = vmul.f32 %v640, %v670
      %v717 = vmul.f32 %v641, %v666
      %v718 = vmul.f32 %v642, %v670
      %v719 = vmul.f32 %v643, %v666
      %v720 = vmul.f32 %v644, %v670
      %v721 = vmul.f32 %v645, %v666
      %v722 = vmul.f32 %v646, %v670
      %v723 = vmul.f32 %v647, %v666
      %v724 = vmul.f32 %v648, %v670
      %v725 = vmul.f32 %v649, %v666
      %v726 = vmul.f32 %v650, %v670
      %v727 = vmul.f32 %v651, %v666
      %v728 = vmul.f32 %v652, %v670
      %v729 = vmul.f32 %v653, %v666
      %v730 = vmul.f32 %v654, %v670
      %v731 = vmul.f32 %v655, %v666
      %v732 = vmul.f32 %v656, %v670
      %v733 = vmul.f32 %v657, %v666
      %v734 = vmul.f32 %v658, %v670
      %v735 = vmul.f32 %v659, %v666
      %v736 = vmul.f32 %v660, %v670
      %v737 = vld [vmem:[%s2] sm:$0x3]
      %v739 = vlaneseq
      %v740 = vshrl.u32 %v739, 7
      %v741 = vsub.s32 0, %v740
      %v742 = vrot.slane %v737, %v741
      %v743 = vlaneseq
      %v744 = vshrl.u32 %v743, 7
      %v745 = vsub.s32 1, %v744
      %v746 = vrot.slane %v737, %v745
      %v749 = vadd.f32 %v673, %v742
      %v750 = vadd.f32 %v674, %v746
      %v751 = vadd.f32 %v675, %v742
      %v752 = vadd.f32 %v676, %v746
      %v753 = vadd.f32 %v677, %v742
      %v754 = vadd.f32 %v678, %v746
      %v755 = vadd.f32 %v679, %v742
      %v756 = vadd.f32 %v680, %v746
      %v757 = vadd.f32 %v681, %v742
      %v758 = vadd.f32 %v682, %v746
      %v759 = vadd.f32 %v683, %v742
      %v760 = vadd.f32 %v684, %v746
      %v761 = vadd.f32 %v685, %v742
      %v762 = vadd.f32 %v686, %v746
      %v763 = vadd.f32 %v687, %v742
      %v764 = vadd.f32 %v688, %v746
      %v765 = vadd.f32 %v689, %v742
      %v766 = vadd.f32 %v690, %v746
      %v767 = vadd.f32 %v691, %v742
      %v768 = vadd.f32 %v692, %v746
      %v769 = vadd.f32 %v693, %v742
      %v770 = vadd.f32 %v694, %v746
      %v771 = vadd.f32 %v695, %v742
      %v772 = vadd.f32 %v696, %v746
      %v773 = vadd.f32 %v697, %v742
      %v774 = vadd.f32 %v698, %v746
      %v775 = vadd.f32 %v699, %v742
      %v776 = vadd.f32 %v700, %v746
      %v777 = vadd.f32 %v701, %v742
      %v778 = vadd.f32 %v702, %v746
      %v779 = vadd.f32 %v703, %v742
      %v780 = vadd.f32 %v704, %v746
      %v781 = vadd.f32 %v705, %v742
      %v782 = vadd.f32 %v706, %v746
      %v783 = vadd.f32 %v707, %v742
      %v784 = vadd.f32 %v708, %v746
      %v785 = vadd.f32 %v709, %v742
      %v786 = vadd.f32 %v710, %v746
      %v787 = vadd.f32 %v711, %v742
      %v788 = vadd.f32 %v712, %v746
      %v789 = vadd.f32 %v713, %v742
      %v790 = vadd.f32 %v714, %v746
      %v791 = vadd.f32 %v715, %v742
      %v792 = vadd.f32 %v716, %v746
      %v793 = vadd.f32 %v717, %v742
      %v794 = vadd.f32 %v718, %v746
      %v795 = vadd.f32 %v719, %v742
      %v796 = vadd.f32 %v720, %v746
      %v797 = vadd.f32 %v721, %v742
      %v798 = vadd.f32 %v722, %v746
      %v799 = vadd.f32 %v723, %v742
      %v800 = vadd.f32 %v724, %v746
      %v801 = vadd.f32 %v725, %v742
      %v802 = vadd.f32 %v726, %v746
      %v803 = vadd.f32 %v727, %v742
      %v804 = vadd.f32 %v728, %v746
      %v805 = vadd.f32 %v729, %v742
      %v806 = vadd.f32 %v730, %v746
      %v807 = vadd.f32 %v731, %v742
      %v808 = vadd.f32 %v732, %v746
      %v809 = vadd.f32 %v733, %v742
      %v810 = vadd.f32 %v734, %v746
      %v811 = vadd.f32 %v735, %v742
      %v812 = vadd.f32 %v736, %v746
      %v813 = vpack.c.bf16 %v751, %v749
      %v814 = vpack.c.bf16 %v752, %v750
      %v815 = vpack.c.bf16 %v755, %v753
      %v816 = vpack.c.bf16 %v756, %v754
      %v817 = vpack.c.bf16 %v759, %v757
      %v818 = vpack.c.bf16 %v760, %v758
      %v819 = vpack.c.bf16 %v763, %v761
      %v820 = vpack.c.bf16 %v764, %v762
      %v821 = vpack.c.bf16 %v767, %v765
      %v822 = vpack.c.bf16 %v768, %v766
      %v823 = vpack.c.bf16 %v771, %v769
      %v824 = vpack.c.bf16 %v772, %v770
      %v825 = vpack.c.bf16 %v775, %v773
      %v826 = vpack.c.bf16 %v776, %v774
      %v827 = vpack.c.bf16 %v779, %v777
      %v828 = vpack.c.bf16 %v780, %v778
      %v829 = vpack.c.bf16 %v783, %v781
      %v830 = vpack.c.bf16 %v784, %v782
      %v831 = vpack.c.bf16 %v787, %v785
      %v832 = vpack.c.bf16 %v788, %v786
      %v833 = vpack.c.bf16 %v791, %v789
      %v834 = vpack.c.bf16 %v792, %v790
      %v835 = vpack.c.bf16 %v795, %v793
      %v836 = vpack.c.bf16 %v796, %v794
      %v837 = vpack.c.bf16 %v799, %v797
      %v838 = vpack.c.bf16 %v800, %v798
      %v839 = vpack.c.bf16 %v803, %v801
      %v840 = vpack.c.bf16 %v804, %v802
      %v841 = vpack.c.bf16 %v807, %v805
      %v842 = vpack.c.bf16 %v808, %v806
      %v843 = vpack.c.bf16 %v811, %v809
      %v844 = vpack.c.bf16 %v812, %v810
      %v877 = vunpack.c.l.b16 %v813
      %v878 = vunpack.c.l.b16 %v814
      %v879 = vunpack.c.h.b16 %v813
      %v880 = vunpack.c.h.b16 %v814
      %v881 = vunpack.c.l.b16 %v815
      %v882 = vunpack.c.l.b16 %v816
      %v883 = vunpack.c.h.b16 %v815
      %v884 = vunpack.c.h.b16 %v816
      %v885 = vunpack.c.l.b16 %v817
      %v886 = vunpack.c.l.b16 %v818
      %v887 = vunpack.c.h.b16 %v817
      %v888 = vunpack.c.h.b16 %v818
      %v889 = vunpack.c.l.b16 %v819
      %v890 = vunpack.c.l.b16 %v820
      %v891 = vunpack.c.h.b16 %v819
      %v892 = vunpack.c.h.b16 %v820
      %v893 = vunpack.c.l.b16 %v821
      %v894 = vunpack.c.l.b16 %v822
      %v895 = vunpack.c.h.b16 %v821
      %v896 = vunpack.c.h.b16 %v822
      %v897 = vunpack.c.l.b16 %v823
      %v898 = vunpack.c.l.b16 %v824
      %v899 = vunpack.c.h.b16 %v823
      %v900 = vunpack.c.h.b16 %v824
      %v901 = vunpack.c.l.b16 %v825
      %v902 = vunpack.c.l.b16 %v826
      %v903 = vunpack.c.h.b16 %v825
      %v904 = vunpack.c.h.b16 %v826
      %v905 = vunpack.c.l.b16 %v827
      %v906 = vunpack.c.l.b16 %v828
      %v907 = vunpack.c.h.b16 %v827
      %v908 = vunpack.c.h.b16 %v828
      %v909 = vunpack.c.l.b16 %v829
      %v910 = vunpack.c.l.b16 %v830
      %v911 = vunpack.c.h.b16 %v829
      %v912 = vunpack.c.h.b16 %v830
      %v913 = vunpack.c.l.b16 %v831
      %v914 = vunpack.c.l.b16 %v832
      %v915 = vunpack.c.h.b16 %v831
      %v916 = vunpack.c.h.b16 %v832
      %v917 = vunpack.c.l.b16 %v833
      %v918 = vunpack.c.l.b16 %v834
      %v919 = vunpack.c.h.b16 %v833
      %v920 = vunpack.c.h.b16 %v834
      %v921 = vunpack.c.l.b16 %v835
      %v922 = vunpack.c.l.b16 %v836
      %v923 = vunpack.c.h.b16 %v835
      %v924 = vunpack.c.h.b16 %v836
      %v925 = vunpack.c.l.b16 %v837
      %v926 = vunpack.c.l.b16 %v838
      %v927 = vunpack.c.h.b16 %v837
      %v928 = vunpack.c.h.b16 %v838
      %v929 = vunpack.c.l.b16 %v839
      %v930 = vunpack.c.l.b16 %v840
      %v931 = vunpack.c.h.b16 %v839
      %v932 = vunpack.c.h.b16 %v840
      %v933 = vunpack.c.l.b16 %v841
      %v934 = vunpack.c.l.b16 %v842
      %v935 = vunpack.c.h.b16 %v841
      %v936 = vunpack.c.h.b16 %v842
      %v937 = vunpack.c.l.b16 %v843
      %v938 = vunpack.c.l.b16 %v844
      %v939 = vunpack.c.h.b16 %v843
      %v940 = vunpack.c.h.b16 %v844
      %v941 = vpack.c.b16 %v878, %v877
      %v942 = vpack.c.b16 %v880, %v879
      %v943 = vpack.c.b16 %v882, %v881
      %v944 = vpack.c.b16 %v884, %v883
      %v945 = vpack.c.b16 %v886, %v885
      %v946 = vpack.c.b16 %v888, %v887
      %v947 = vpack.c.b16 %v890, %v889
      %v948 = vpack.c.b16 %v892, %v891
      %v949 = vpack.c.b16 %v894, %v893
      %v950 = vpack.c.b16 %v896, %v895
      %v951 = vpack.c.b16 %v898, %v897
      %v952 = vpack.c.b16 %v900, %v899
      %v953 = vpack.c.b16 %v902, %v901
      %v954 = vpack.c.b16 %v904, %v903
      %v955 = vpack.c.b16 %v906, %v905
      %v956 = vpack.c.b16 %v908, %v907
      %v957 = vpack.c.b16 %v910, %v909
      %v958 = vpack.c.b16 %v912, %v911
      %v959 = vpack.c.b16 %v914, %v913
      %v960 = vpack.c.b16 %v916, %v915
      %v961 = vpack.c.b16 %v918, %v917
      %v962 = vpack.c.b16 %v920, %v919
      %v963 = vpack.c.b16 %v922, %v921
      %v964 = vpack.c.b16 %v924, %v923
      %v965 = vpack.c.b16 %v926, %v925
      %v966 = vpack.c.b16 %v928, %v927
      %v967 = vpack.c.b16 %v930, %v929
      %v968 = vpack.c.b16 %v932, %v931
      %v969 = vpack.c.b16 %v934, %v933
      %v970 = vpack.c.b16 %v936, %v935
      %v971 = vpack.c.b16 %v938, %v937
      %v972 = vpack.c.b16 %v940, %v939
      %1005 = vst [vmem:[#allocation2] sm:$0xff] %v941
      %1006 = vst [vmem:[#allocation2 + $0x8] sm:$0xff] %v942
      %1007 = vst [vmem:[#allocation2 + $0x10] sm:$0xff] %v943
      %1008 = vst [vmem:[#allocation2 + $0x18] sm:$0xff] %v944
      %1009 = vst [vmem:[#allocation2 + $0x20] sm:$0xff] %v945
      %1010 = vst [vmem:[#allocation2 + $0x28] sm:$0xff] %v946
      %1011 = vst [vmem:[#allocation2 + $0x30] sm:$0xff] %v947
      %1012 = vst [vmem:[#allocation2 + $0x38] sm:$0xff] %v948
      %1013 = vst [vmem:[#allocation2 + $0x40] sm:$0xff] %v949
      %1014 = vst [vmem:[#allocation2 + $0x48] sm:$0xff] %v950
      %1015 = vst [vmem:[#allocation2 + $0x50] sm:$0xff] %v951
      %1016 = vst [vmem:[#allocation2 + $0x58] sm:$0xff] %v952
      %1017 = vst [vmem:[#allocation2 + $0x60] sm:$0xff] %v953
      %1018 = vst [vmem:[#allocation2 + $0x68] sm:$0xff] %v954
      %1019 = vst [vmem:[#allocation2 + $0x70] sm:$0xff] %v955
      %1020 = vst [vmem:[#allocation2 + $0x78] sm:$0xff] %v956
      %1021 = vst [vmem:[#allocation2 + $0x80] sm:$0xff] %v957
      %1022 = vst [vmem:[#allocation2 + $0x88] sm:$0xff] %v958
      %1023 = vst [vmem:[#allocation2 + $0x90] sm:$0xff] %v959
      %1024 = vst [vmem:[#allocation2 + $0x98] sm:$0xff] %v960
      %1025 = vst [vmem:[#allocation2 + $0xa0] sm:$0xff] %v961
      %1026 = vst [vmem:[#allocation2 + $0xa8] sm:$0xff] %v962
      %1027 = vst [vmem:[#allocation2 + $0xb0] sm:$0xff] %v963
      %1028 = vst [vmem:[#allocation2 + $0xb8] sm:$0xff] %v964
      %1029 = vst [vmem:[#allocation2 + $0xc0] sm:$0xff] %v965
      %1030 = vst [vmem:[#allocation2 + $0xc8] sm:$0xff] %v966
      %1031 = vst [vmem:[#allocation2 + $0xd0] sm:$0xff] %v967
      %1032 = vst [vmem:[#allocation2 + $0xd8] sm:$0xff] %v968
      %1033 = vst [vmem:[#allocation2 + $0xe0] sm:$0xff] %v969
      %1034 = vst [vmem:[#allocation2 + $0xe8] sm:$0xff] %v970
      %1035 = vst [vmem:[#allocation2 + $0xf0] sm:$0xff] %v971
      %1036 = vst [vmem:[#allocation2 + $0xf8] sm:$0xff] %v972
      %1037 = vst [vmem:[#allocation11] sm:$0xff] 0.0
      %1038 = vst [vmem:[#allocation11 + $0x8] sm:$0xff] 0.0
      %1039 = vst [vmem:[#allocation11 + $0x10] sm:$0xff] 0.0
      %1040 = vst [vmem:[#allocation11 + $0x18] sm:$0xff] 0.0
      %1041 = vst [vmem:[#allocation11 + $0x20] sm:$0xff] 0.0
      %1042 = vst [vmem:[#allocation11 + $0x28] sm:$0xff] 0.0
      %1043 = vst [vmem:[#allocation11 + $0x30] sm:$0xff] 0.0
      %1044 = vst [vmem:[#allocation11 + $0x38] sm:$0xff] 0.0
      %1045 = vst [vmem:[#allocation11 + $0x40] sm:$0xff] 0.0
      %1046 = vst [vmem:[#allocation11 + $0x48] sm:$0xff] 0.0
      %1047 = vst [vmem:[#allocation11 + $0x50] sm:$0xff] 0.0
      %1048 = vst [vmem:[#allocation11 + $0x58] sm:$0xff] 0.0
      %1049 = vst [vmem:[#allocation11 + $0x60] sm:$0xff] 0.0
      %1050 = vst [vmem:[#allocation11 + $0x68] sm:$0xff] 0.0
      %1051 = vst [vmem:[#allocation11 + $0x70] sm:$0xff] 0.0
      %1052 = vst [vmem:[#allocation11 + $0x78] sm:$0xff] 0.0
      %1053 = vst [vmem:[#allocation11 + $0x80] sm:$0xff] 0.0
      %1054 = vst [vmem:[#allocation11 + $0x88] sm:$0xff] 0.0
      %1055 = vst [vmem:[#allocation11 + $0x90] sm:$0xff] 0.0
      %1056 = vst [vmem:[#allocation11 + $0x98] sm:$0xff] 0.0
      %1057 = vst [vmem:[#allocation11 + $0xa0] sm:$0xff] 0.0
      %1058 = vst [vmem:[#allocation11 + $0xa8] sm:$0xff] 0.0
      %1059 = vst [vmem:[#allocation11 + $0xb0] sm:$0xff] 0.0
      %1060 = vst [vmem:[#allocation11 + $0xb8] sm:$0xff] 0.0
      %1061 = vst [vmem:[#allocation11 + $0xc0] sm:$0xff] 0.0
      %1062 = vst [vmem:[#allocation11 + $0xc8] sm:$0xff] 0.0
      %1063 = vst [vmem:[#allocation11 + $0xd0] sm:$0xff] 0.0
      %1064 = vst [vmem:[#allocation11 + $0xd8] sm:$0xff] 0.0
      %1065 = vst [vmem:[#allocation11 + $0xe0] sm:$0xff] 0.0
      %1066 = vst [vmem:[#allocation11 + $0xe8] sm:$0xff] 0.0
      %1067 = vst [vmem:[#allocation11 + $0xf0] sm:$0xff] 0.0
      %1068 = vst [vmem:[#allocation11 + $0xf8] sm:$0xff] 0.0
      %1069 = vst [vmem:[#allocation11 + $0x100] sm:$0xff] 0.0
      %1070 = vst [vmem:[#allocation11 + $0x108] sm:$0xff] 0.0
      %1071 = vst [vmem:[#allocation11 + $0x110] sm:$0xff] 0.0
      %1072 = vst [vmem:[#allocation11 + $0x118] sm:$0xff] 0.0
      %1073 = vst [vmem:[#allocation11 + $0x120] sm:$0xff] 0.0
      %1074 = vst [vmem:[#allocation11 + $0x128] sm:$0xff] 0.0
      %1075 = vst [vmem:[#allocation11 + $0x130] sm:$0xff] 0.0
      %1076 = vst [vmem:[#allocation11 + $0x138] sm:$0xff] 0.0
      %1077 = vst [vmem:[#allocation11 + $0x140] sm:$0xff] 0.0
      %1078 = vst [vmem:[#allocation11 + $0x148] sm:$0xff] 0.0
      %1079 = vst [vmem:[#allocation11 + $0x150] sm:$0xff] 0.0
      %1080 = vst [vmem:[#allocation11 + $0x158] sm:$0xff] 0.0
      %1081 = vst [vmem:[#allocation11 + $0x160] sm:$0xff] 0.0
      %1082 = vst [vmem:[#allocation11 + $0x168] sm:$0xff] 0.0
      %1083 = vst [vmem:[#allocation11 + $0x170] sm:$0xff] 0.0
      %1084 = vst [vmem:[#allocation11 + $0x178] sm:$0xff] 0.0
      %1085 = vst [vmem:[#allocation11 + $0x180] sm:$0xff] 0.0
      %1086 = vst [vmem:[#allocation11 + $0x188] sm:$0xff] 0.0
      %1087 = vst [vmem:[#allocation11 + $0x190] sm:$0xff] 0.0
      %1088 = vst [vmem:[#allocation11 + $0x198] sm:$0xff] 0.0
      %1089 = vst [vmem:[#allocation11 + $0x1a0] sm:$0xff] 0.0
      %1090 = vst [vmem:[#allocation11 + $0x1a8] sm:$0xff] 0.0
      %1091 = vst [vmem:[#allocation11 + $0x1b0] sm:$0xff] 0.0
      %1092 = vst [vmem:[#allocation11 + $0x1b8] sm:$0xff] 0.0
      %1093 = vst [vmem:[#allocation11 + $0x1c0] sm:$0xff] 0.0
      %1094 = vst [vmem:[#allocation11 + $0x1c8] sm:$0xff] 0.0
      %1095 = vst [vmem:[#allocation11 + $0x1d0] sm:$0xff] 0.0
      %1096 = vst [vmem:[#allocation11 + $0x1d8] sm:$0xff] 0.0
      %1097 = vst [vmem:[#allocation11 + $0x1e0] sm:$0xff] 0.0
      %1098 = vst [vmem:[#allocation11 + $0x1e8] sm:$0xff] 0.0
      %1099 = vst [vmem:[#allocation11 + $0x1f0] sm:$0xff] 0.0
      %1100 = vst [vmem:[#allocation11 + $0x1f8] sm:$0xff] 0.0
    $region49: #{tpu_custom_call.1} parent=1 // pred_fallthru
      _
    %v1101 = vld [vmem:[#allocation2] sm:$0xff]
    %v1102 = vld [vmem:[#allocation2 + $0x8] sm:$0xff]
    %v1103 = vld [vmem:[#allocation2 + $0x10] sm:$0xff]
    %v1104 = vld [vmem:[#allocation2 + $0x18] sm:$0xff]
    %v1105 = vld [vmem:[#allocation2 + $0x20] sm:$0xff]
    %v1106 = vld [vmem:[#allocation2 + $0x28] sm:$0xff]
    %v1107 = vld [vmem:[#allocation2 + $0x30] sm:$0xff]
    %v1108 = vld [vmem:[#allocation2 + $0x38] sm:$0xff]
    %v1109 = vld [vmem:[#allocation2 + $0x40] sm:$0xff]
    %v1110 = vld [vmem:[#allocation2 + $0x48] sm:$0xff]
    %v1111 = vld [vmem:[#allocation2 + $0x50] sm:$0xff]
    %v1112 = vld [vmem:[#allocation2 + $0x58] sm:$0xff]
    %v1113 = vld [vmem:[#allocation2 + $0x60] sm:$0xff]
    %v1114 = vld [vmem:[#allocation2 + $0x68] sm:$0xff]
    %v1115 = vld [vmem:[#allocation2 + $0x70] sm:$0xff]
    %v1116 = vld [vmem:[#allocation2 + $0x78] sm:$0xff]
    %v1117 = vld [vmem:[#allocation2 + $0x80] sm:$0xff]
    %v1118 = vld [vmem:[#allocation2 + $0x88] sm:$0xff]
    %v1119 = vld [vmem:[#allocation2 + $0x90] sm:$0xff]
    %v1120 = vld [vmem:[#allocation2 + $0x98] sm:$0xff]
    %v1121 = vld [vmem:[#allocation2 + $0xa0] sm:$0xff]
    %v1122 = vld [vmem:[#allocation2 + $0xa8] sm:$0xff]
    %v1123 = vld [vmem:[#allocation2 + $0xb0] sm:$0xff]
    %v1124 = vld [vmem:[#allocation2 + $0xb8] sm:$0xff]
    %v1125 = vld [vmem:[#allocation2 + $0xc0] sm:$0xff]
    %v1126 = vld [vmem:[#allocation2 + $0xc8] sm:$0xff]
    %v1127 = vld [vmem:[#allocation2 + $0xd0] sm:$0xff]
    %v1128 = vld [vmem:[#allocation2 + $0xd8] sm:$0xff]
    %v1129 = vld [vmem:[#allocation2 + $0xe0] sm:$0xff]
    %v1130 = vld [vmem:[#allocation2 + $0xe8] sm:$0xff]
    %v1131 = vld [vmem:[#allocation2 + $0xf0] sm:$0xff]
    %v1132 = vld [vmem:[#allocation2 + $0xf8] sm:$0xff]
    %v1133 = vld [vmem:[#allocation8] sm:$0xff]
    %v1134 = vld [vmem:[#allocation8 + $0x8] sm:$0xff]
    %v1135 = vld [vmem:[#allocation8 + $0x10] sm:$0xff]
    %v1136 = vld [vmem:[#allocation8 + $0x18] sm:$0xff]
    %v1137 = vld [vmem:[#allocation8 + $0x20] sm:$0xff]
    %v1138 = vld [vmem:[#allocation8 + $0x28] sm:$0xff]
    %v1139 = vld [vmem:[#allocation8 + $0x30] sm:$0xff]
    %v1140 = vld [vmem:[#allocation8 + $0x38] sm:$0xff]
    %v1141 = vld [vmem:[#allocation8 + $0x40] sm:$0xff]
    %v1142 = vld [vmem:[#allocation8 + $0x48] sm:$0xff]
    %v1143 = vld [vmem:[#allocation8 + $0x50] sm:$0xff]
    %v1144 = vld [vmem:[#allocation8 + $0x58] sm:$0xff]
    %v1145 = vld [vmem:[#allocation8 + $0x60] sm:$0xff]
    %v1146 = vld [vmem:[#allocation8 + $0x68] sm:$0xff]
    %v1147 = vld [vmem:[#allocation8 + $0x70] sm:$0xff]
    %v1148 = vld [vmem:[#allocation8 + $0x78] sm:$0xff]
    %v1149 = vld [vmem:[#allocation8 + $0x80] sm:$0xff]
    %v1150 = vld [vmem:[#allocation8 + $0x88] sm:$0xff]
    %v1151 = vld [vmem:[#allocation8 + $0x90] sm:$0xff]
    %v1152 = vld [vmem:[#allocation8 + $0x98] sm:$0xff]
    %v1153 = vld [vmem:[#allocation8 + $0xa0] sm:$0xff]
    %v1154 = vld [vmem:[#allocation8 + $0xa8] sm:$0xff]
    %v1155 = vld [vmem:[#allocation8 + $0xb0] sm:$0xff]
    %v1156 = vld [vmem:[#allocation8 + $0xb8] sm:$0xff]
    %v1157 = vld [vmem:[#allocation8 + $0xc0] sm:$0xff]
    %v1158 = vld [vmem:[#allocation8 + $0xc8] sm:$0xff]
    %v1159 = vld [vmem:[#allocation8 + $0xd0] sm:$0xff]
    %v1160 = vld [vmem:[#allocation8 + $0xd8] sm:$0xff]
    %v1161 = vld [vmem:[#allocation8 + $0xe0] sm:$0xff]
    %v1162 = vld [vmem:[#allocation8 + $0xe8] sm:$0xff]
    %v1163 = vld [vmem:[#allocation8 + $0xf0] sm:$0xff]
    %v1164 = vld [vmem:[#allocation8 + $0xf8] sm:$0xff]
    %v1165 = vld [vmem:[#allocation8 + $0x100] sm:$0xff]
    %v1166 = vld [vmem:[#allocation8 + $0x108] sm:$0xff]
    %v1167 = vld [vmem:[#allocation8 + $0x110] sm:$0xff]
    %v1168 = vld [vmem:[#allocation8 + $0x118] sm:$0xff]
    %v1169 = vld [vmem:[#allocation8 + $0x120] sm:$0xff]
    %v1170 = vld [vmem:[#allocation8 + $0x128] sm:$0xff]
    %v1171 = vld [vmem:[#allocation8 + $0x130] sm:$0xff]
    %v1172 = vld [vmem:[#allocation8 + $0x138] sm:$0xff]
    %v1173 = vld [vmem:[#allocation8 + $0x140] sm:$0xff]
    %v1174 = vld [vmem:[#allocation8 + $0x148] sm:$0xff]
    %v1175 = vld [vmem:[#allocation8 + $0x150] sm:$0xff]
    %v1176 = vld [vmem:[#allocation8 + $0x158] sm:$0xff]
    %v1177 = vld [vmem:[#allocation8 + $0x160] sm:$0xff]
    %v1178 = vld [vmem:[#allocation8 + $0x168] sm:$0xff]
    %v1179 = vld [vmem:[#allocation8 + $0x170] sm:$0xff]
    %v1180 = vld [vmem:[#allocation8 + $0x178] sm:$0xff]
    %v1181 = vld [vmem:[#allocation8 + $0x180] sm:$0xff]
    %v1182 = vld [vmem:[#allocation8 + $0x188] sm:$0xff]
    %v1183 = vld [vmem:[#allocation8 + $0x190] sm:$0xff]
    %v1184 = vld [vmem:[#allocation8 + $0x198] sm:$0xff]
    %v1185 = vld [vmem:[#allocation8 + $0x1a0] sm:$0xff]
    %v1186 = vld [vmem:[#allocation8 + $0x1a8] sm:$0xff]
    %v1187 = vld [vmem:[#allocation8 + $0x1b0] sm:$0xff]
    %v1188 = vld [vmem:[#allocation8 + $0x1b8] sm:$0xff]
    %v1189 = vld [vmem:[#allocation8 + $0x1c0] sm:$0xff]
    %v1190 = vld [vmem:[#allocation8 + $0x1c8] sm:$0xff]
    %v1191 = vld [vmem:[#allocation8 + $0x1d0] sm:$0xff]
    %v1192 = vld [vmem:[#allocation8 + $0x1d8] sm:$0xff]
    %v1193 = vld [vmem:[#allocation8 + $0x1e0] sm:$0xff]
    %v1194 = vld [vmem:[#allocation8 + $0x1e8] sm:$0xff]
    %v1195 = vld [vmem:[#allocation8 + $0x1f0] sm:$0xff]
    %v1196 = vld [vmem:[#allocation8 + $0x1f8] sm:$0xff]
    %v1197 = vld [vmem:[%s4] sm:$0xf]
    %v1199 = vlaneseq
    %v1200 = vshrl.u32 %v1199, 7
    %v1201 = vsub.s32 0, %v1200
    %v1202 = vrot.slane %v1197, %v1201
    %v1203 = vlaneseq
    %v1204 = vshrl.u32 %v1203, 7
    %v1205 = vsub.s32 1, %v1204
    %v1206 = vrot.slane %v1197, %v1205
    %v1207 = vlaneseq
    %v1208 = vshrl.u32 %v1207, 7
    %v1209 = vsub.s32 2, %v1208
    %v1210 = vrot.slane %v1197, %v1209
    %v1211 = vlaneseq
    %v1212 = vshrl.u32 %v1211, 7
    %v1213 = vsub.s32 3, %v1212
    %v1214 = vrot.slane %v1197, %v1213
    %v1251 = vunpack.c.l.b16 %v1101
    %v1252 = vunpack.c.h.b16 %v1101
    %v1253 = vunpack.c.l.b16 %v1102
    %v1254 = vunpack.c.h.b16 %v1102
    %v1255 = vunpack.c.l.b16 %v1103
    %v1256 = vunpack.c.h.b16 %v1103
    %v1257 = vunpack.c.l.b16 %v1104
    %v1258 = vunpack.c.h.b16 %v1104
    %v1259 = vunpack.c.l.b16 %v1105
    %v1260 = vunpack.c.h.b16 %v1105
    %v1261 = vunpack.c.l.b16 %v1106
    %v1262 = vunpack.c.h.b16 %v1106
    %v1263 = vunpack.c.l.b16 %v1107
    %v1264 = vunpack.c.h.b16 %v1107
    %v1265 = vunpack.c.l.b16 %v1108
    %v1266 = vunpack.c.h.b16 %v1108
    %v1267 = vunpack.c.l.b16 %v1109
    %v1268 = vunpack.c.h.b16 %v1109
    %v1269 = vunpack.c.l.b16 %v1110
    %v1270 = vunpack.c.h.b16 %v1110
    %v1271 = vunpack.c.l.b16 %v1111
    %v1272 = vunpack.c.h.b16 %v1111
    %v1273 = vunpack.c.l.b16 %v1112
    %v1274 = vunpack.c.h.b16 %v1112
    %v1275 = vunpack.c.l.b16 %v1113
    %v1276 = vunpack.c.h.b16 %v1113
    %v1277 = vunpack.c.l.b16 %v1114
    %v1278 = vunpack.c.h.b16 %v1114
    %v1279 = vunpack.c.l.b16 %v1115
    %v1280 = vunpack.c.h.b16 %v1115
    %v1281 = vunpack.c.l.b16 %v1116
    %v1282 = vunpack.c.h.b16 %v1116
    %v1283 = vunpack.c.l.b16 %v1117
    %v1284 = vunpack.c.h.b16 %v1117
    %v1285 = vunpack.c.l.b16 %v1118
    %v1286 = vunpack.c.h.b16 %v1118
    %v1287 = vunpack.c.l.b16 %v1119
    %v1288 = vunpack.c.h.b16 %v1119
    %v1289 = vunpack.c.l.b16 %v1120
    %v1290 = vunpack.c.h.b16 %v1120
    %v1291 = vunpack.c.l.b16 %v1121
    %v1292 = vunpack.c.h.b16 %v1121
    %v1293 = vunpack.c.l.b16 %v1122
    %v1294 = vunpack.c.h.b16 %v1122
    %v1295 = vunpack.c.l.b16 %v1123
    %v1296 = vunpack.c.h.b16 %v1123
    %v1297 = vunpack.c.l.b16 %v1124
    %v1298 = vunpack.c.h.b16 %v1124
    %v1299 = vunpack.c.l.b16 %v1125
    %v1300 = vunpack.c.h.b16 %v1125
    %v1301 = vunpack.c.l.b16 %v1126
    %v1302 = vunpack.c.h.b16 %v1126
    %v1303 = vunpack.c.l.b16 %v1127
    %v1304 = vunpack.c.h.b16 %v1127
    %v1305 = vunpack.c.l.b16 %v1128
    %v1306 = vunpack.c.h.b16 %v1128
    %v1307 = vunpack.c.l.b16 %v1129
    %v1308 = vunpack.c.h.b16 %v1129
    %v1309 = vunpack.c.l.b16 %v1130
    %v1310 = vunpack.c.h.b16 %v1130
    %v1311 = vunpack.c.l.b16 %v1131
    %v1312 = vunpack.c.h.b16 %v1131
    %v1313 = vunpack.c.l.b16 %v1132
    %v1314 = vunpack.c.h.b16 %v1132
    %v1315 = vpack.c.b16 %v1253, %v1251
    %v1316 = vpack.c.b16 %v1254, %v1252
    %v1317 = vpack.c.b16 %v1257, %v1255
    %v1318 = vpack.c.b16 %v1258, %v1256
    %v1319 = vpack.c.b16 %v1261, %v1259
    %v1320 = vpack.c.b16 %v1262, %v1260
    %v1321 = vpack.c.b16 %v1265, %v1263
    %v1322 = vpack.c.b16 %v1266, %v1264
    %v1323 = vpack.c.b16 %v1269, %v1267
    %v1324 = vpack.c.b16 %v1270, %v1268
    %v1325 = vpack.c.b16 %v1273, %v1271
    %v1326 = vpack.c.b16 %v1274, %v1272
    %v1327 = vpack.c.b16 %v1277, %v1275
    %v1328 = vpack.c.b16 %v1278, %v1276
    %v1329 = vpack.c.b16 %v1281, %v1279
    %v1330 = vpack.c.b16 %v1282, %v1280
    %v1331 = vpack.c.b16 %v1285, %v1283
    %v1332 = vpack.c.b16 %v1286, %v1284
    %v1333 = vpack.c.b16 %v1289, %v1287
    %v1334 = vpack.c.b16 %v1290, %v1288
    %v1335 = vpack.c.b16 %v1293, %v1291
    %v1336 = vpack.c.b16 %v1294, %v1292
    %v1337 = vpack.c.b16 %v1297, %v1295
    %v1338 = vpack.c.b16 %v1298, %v1296
    %v1339 = vpack.c.b16 %v1301, %v1299
    %v1340 = vpack.c.b16 %v1302, %v1300
    %v1341 = vpack.c.b16 %v1305, %v1303
    %v1342 = vpack.c.b16 %v1306, %v1304
    %v1343 = vpack.c.b16 %v1309, %v1307
    %v1344 = vpack.c.b16 %v1310, %v1308
    %v1345 = vpack.c.b16 %v1313, %v1311
    %v1346 = vpack.c.b16 %v1314, %v1312
    %v1443 = vunpack.c.l.b16 %v1133
    %v1444 = vunpack.c.h.b16 %v1133
    %v1445 = vunpack.c.l.b16 %v1134
    %v1446 = vunpack.c.h.b16 %v1134
    %v1447 = vunpack.c.l.b16 %v1135
    %v1448 = vunpack.c.h.b16 %v1135
    %v1449 = vunpack.c.l.b16 %v1136
    %v1450 = vunpack.c.h.b16 %v1136
    %v1451 = vunpack.c.l.b16 %v1137
    %v1452 = vunpack.c.h.b16 %v1137
    %v1453 = vunpack.c.l.b16 %v1138
    %v1454 = vunpack.c.h.b16 %v1138
    %v1455 = vunpack.c.l.b16 %v1139
    %v1456 = vunpack.c.h.b16 %v1139
    %v1457 = vunpack.c.l.b16 %v1140
    %v1458 = vunpack.c.h.b16 %v1140
    %v1459 = vunpack.c.l.b16 %v1141
    %v1460 = vunpack.c.h.b16 %v1141
    %v1461 = vunpack.c.l.b16 %v1142
    %v1462 = vunpack.c.h.b16 %v1142
    %v1463 = vunpack.c.l.b16 %v1143
    %v1464 = vunpack.c.h.b16 %v1143
    %v1465 = vunpack.c.l.b16 %v1144
    %v1466 = vunpack.c.h.b16 %v1144
    %v1467 = vunpack.c.l.b16 %v1145
    %v1468 = vunpack.c.h.b16 %v1145
    %v1469 = vunpack.c.l.b16 %v1146
    %v1470 = vunpack.c.h.b16 %v1146
    %v1471 = vunpack.c.l.b16 %v1147
    %v1472 = vunpack.c.h.b16 %v1147
    %v1473 = vunpack.c.l.b16 %v1148
    %v1474 = vunpack.c.h.b16 %v1148
    %v1475 = vunpack.c.l.b16 %v1149
    %v1476 = vunpack.c.h.b16 %v1149
    %v1477 = vunpack.c.l.b16 %v1150
    %v1478 = vunpack.c.h.b16 %v1150
    %v1479 = vunpack.c.l.b16 %v1151
    %v1480 = vunpack.c.h.b16 %v1151
    %v1481 = vunpack.c.l.b16 %v1152
    %v1482 = vunpack.c.h.b16 %v1152
    %v1483 = vunpack.c.l.b16 %v1153
    %v1484 = vunpack.c.h.b16 %v1153
    %v1485 = vunpack.c.l.b16 %v1154
    %v1486 = vunpack.c.h.b16 %v1154
    %v1487 = vunpack.c.l.b16 %v1155
    %v1488 = vunpack.c.h.b16 %v1155
    %v1489 = vunpack.c.l.b16 %v1156
    %v1490 = vunpack.c.h.b16 %v1156
    %v1491 = vunpack.c.l.b16 %v1157
    %v1492 = vunpack.c.h.b16 %v1157
    %v1493 = vunpack.c.l.b16 %v1158
    %v1494 = vunpack.c.h.b16 %v1158
    %v1495 = vunpack.c.l.b16 %v1159
    %v1496 = vunpack.c.h.b16 %v1159
    %v1497 = vunpack.c.l.b16 %v1160
    %v1498 = vunpack.c.h.b16 %v1160
    %v1499 = vunpack.c.l.b16 %v1161
    %v1500 = vunpack.c.h.b16 %v1161
    %v1501 = vunpack.c.l.b16 %v1162
    %v1502 = vunpack.c.h.b16 %v1162
    %v1503 = vunpack.c.l.b16 %v1163
    %v1504 = vunpack.c.h.b16 %v1163
    %v1505 = vunpack.c.l.b16 %v1164
    %v1506 = vunpack.c.h.b16 %v1164
    %v1507 = vunpack.c.l.b16 %v1165
    %v1508 = vunpack.c.h.b16 %v1165
    %v1509 = vunpack.c.l.b16 %v1166
    %v1510 = vunpack.c.h.b16 %v1166
    %v1511 = vunpack.c.l.b16 %v1167
    %v1512 = vunpack.c.h.b16 %v1167
    %v1513 = vunpack.c.l.b16 %v1168
    %v1514 = vunpack.c.h.b16 %v1168
    %v1515 = vunpack.c.l.b16 %v1169
    %v1516 = vunpack.c.h.b16 %v1169
    %v1517 = vunpack.c.l.b16 %v1170
    %v1518 = vunpack.c.h.b16 %v1170
    %v1519 = vunpack.c.l.b16 %v1171
    %v1520 = vunpack.c.h.b16 %v1171
    %v1521 = vunpack.c.l.b16 %v1172
    %v1522 = vunpack.c.h.b16 %v1172
    %v1523 = vunpack.c.l.b16 %v1173
    %v1524 = vunpack.c.h.b16 %v1173
    %v1525 = vunpack.c.l.b16 %v1174
    %v1526 = vunpack.c.h.b16 %v1174
    %v1527 = vunpack.c.l.b16 %v1175
    %v1528 = vunpack.c.h.b16 %v1175
    %v1529 = vunpack.c.l.b16 %v1176
    %v1530 = vunpack.c.h.b16 %v1176
    %v1531 = vunpack.c.l.b16 %v1177
    %v1532 = vunpack.c.h.b16 %v1177
    %v1533 = vunpack.c.l.b16 %v1178
    %v1534 = vunpack.c.h.b16 %v1178
    %v1535 = vunpack.c.l.b16 %v1179
    %v1536 = vunpack.c.h.b16 %v1179
    %v1537 = vunpack.c.l.b16 %v1180
    %v1538 = vunpack.c.h.b16 %v1180
    %v1539 = vunpack.c.l.b16 %v1181
    %v1540 = vunpack.c.h.b16 %v1181
    %v1541 = vunpack.c.l.b16 %v1182
    %v1542 = vunpack.c.h.b16 %v1182
    %v1543 = vunpack.c.l.b16 %v1183
    %v1544 = vunpack.c.h.b16 %v1183
    %v1545 = vunpack.c.l.b16 %v1184
    %v1546 = vunpack.c.h.b16 %v1184
    %v1547 = vunpack.c.l.b16 %v1185
    %v1548 = vunpack.c.h.b16 %v1185
    %v1549 = vunpack.c.l.b16 %v1186
    %v1550 = vunpack.c.h.b16 %v1186
    %v1551 = vunpack.c.l.b16 %v1187
    %v1552 = vunpack.c.h.b16 %v1187
    %v1553 = vunpack.c.l.b16 %v1188
    %v1554 = vunpack.c.h.b16 %v1188
    %v1555 = vunpack.c.l.b16 %v1189
    %v1556 = vunpack.c.h.b16 %v1189
    %v1557 = vunpack.c.l.b16 %v1190
    %v1558 = vunpack.c.h.b16 %v1190
    %v1559 = vunpack.c.l.b16 %v1191
    %v1560 = vunpack.c.h.b16 %v1191
    %v1561 = vunpack.c.l.b16 %v1192
    %v1562 = vunpack.c.h.b16 %v1192
    %v1563 = vunpack.c.l.b16 %v1193
    %v1564 = vunpack.c.h.b16 %v1193
    %v1565 = vunpack.c.l.b16 %v1194
    %v1566 = vunpack.c.h.b16 %v1194
    %v1567 = vunpack.c.l.b16 %v1195
    %v1568 = vunpack.c.h.b16 %v1195
    %v1569 = vunpack.c.l.b16 %v1196
    %v1570 = vunpack.c.h.b16 %v1196
    %v1571 = vpack.c.b16 %v1447, %v1443
    %v1572 = vpack.c.b16 %v1448, %v1444
    %v1573 = vpack.c.b16 %v1449, %v1445
    %v1574 = vpack.c.b16 %v1450, %v1446
    %v1575 = vpack.c.b16 %v1455, %v1451
    %v1576 = vpack.c.b16 %v1456, %v1452
    %v1577 = vpack.c.b16 %v1457, %v1453
    %v1578 = vpack.c.b16 %v1458, %v1454
    %v1579 = vpack.c.b16 %v1463, %v1459
    %v1580 = vpack.c.b16 %v1464, %v1460
    %v1581 = vpack.c.b16 %v1465, %v1461
    %v1582 = vpack.c.b16 %v1466, %v1462
    %v1583 = vpack.c.b16 %v1471, %v1467
    %v1584 = vpack.c.b16 %v1472, %v1468
    %v1585 = vpack.c.b16 %v1473, %v1469
    %v1586 = vpack.c.b16 %v1474, %v1470
    %v1587 = vpack.c.b16 %v1479, %v1475
    %v1588 = vpack.c.b16 %v1480, %v1476
    %v1589 = vpack.c.b16 %v1481, %v1477
    %v1590 = vpack.c.b16 %v1482, %v1478
    %v1591 = vpack.c.b16 %v1487, %v1483
    %v1592 = vpack.c.b16 %v1488, %v1484
    %v1593 = vpack.c.b16 %v1489, %v1485
    %v1594 = vpack.c.b16 %v1490, %v1486
    %v1595 = vpack.c.b16 %v1495, %v1491
    %v1596 = vpack.c.b16 %v1496, %v1492
    %v1597 = vpack.c.b16 %v1497, %v1493
    %v1598 = vpack.c.b16 %v1498, %v1494
    %v1599 = vpack.c.b16 %v1503, %v1499
    %v1600 = vpack.c.b16 %v1504, %v1500
    %v1601 = vpack.c.b16 %v1505, %v1501
    %v1602 = vpack.c.b16 %v1506, %v1502
    %v1603 = vpack.c.b16 %v1511, %v1507
    %v1604 = vpack.c.b16 %v1512, %v1508
    %v1605 = vpack.c.b16 %v1513, %v1509
    %v1606 = vpack.c.b16 %v1514, %v1510
    %v1607 = vpack.c.b16 %v1519, %v1515
    %v1608 = vpack.c.b16 %v1520, %v1516
    %v1609 = vpack.c.b16 %v1521, %v1517
    %v1610 = vpack.c.b16 %v1522, %v1518
    %v1611 = vpack.c.b16 %v1527, %v1523
    %v1612 = vpack.c.b16 %v1528, %v1524
    %v1613 = vpack.c.b16 %v1529, %v1525
    %v1614 = vpack.c.b16 %v1530, %v1526
    %v1615 = vpack.c.b16 %v1535, %v1531
    %v1616 = vpack.c.b16 %v1536, %v1532
    %v1617 = vpack.c.b16 %v1537, %v1533
    %v1618 = vpack.c.b16 %v1538, %v1534
    %v1619 = vpack.c.b16 %v1543, %v1539
    %v1620 = vpack.c.b16 %v1544, %v1540
    %v1621 = vpack.c.b16 %v1545, %v1541
    %v1622 = vpack.c.b16 %v1546, %v1542
    %v1623 = vpack.c.b16 %v1551, %v1547
    %v1624 = vpack.c.b16 %v1552, %v1548
    %v1625 = vpack.c.b16 %v1553, %v1549
    %v1626 = vpack.c.b16 %v1554, %v1550
    %v1627 = vpack.c.b16 %v1559, %v1555
    %v1628 = vpack.c.b16 %v1560, %v1556
    %v1629 = vpack.c.b16 %v1561, %v1557
    %v1630 = vpack.c.b16 %v1562, %v1558
    %v1631 = vpack.c.b16 %v1567, %v1563
    %v1632 = vpack.c.b16 %v1568, %v1564
    %v1633 = vpack.c.b16 %v1569, %v1565
    %v1634 = vpack.c.b16 %v1570, %v1566
    %1699 = vmatprep.subr.bf16.mxu0 %v1600
    %1700 = vmatpush1.bf16.msra.mxu0 %v1599
    %1701 = vmatprep.subr.bf16.mxu0 %v1596
    %1702 = vmatpush1.bf16.msra.mxu0 %v1595
    %1703 = vmatprep.subr.bf16.mxu0 %v1592
    %1704 = vmatpush1.bf16.msra.mxu0 %v1591
    %1705 = vmatprep.subr.bf16.mxu0 %v1588
    %1706 = vmatpush1.bf16.msra.mxu0 %v1587
    %1707 = vmatprep.subr.bf16.mxu0 %v1584
    %1708 = vmatpush1.bf16.msra.mxu0 %v1583
    %1709 = vmatprep.subr.bf16.mxu0 %v1580
    %1710 = vmatpush1.bf16.msra.mxu0 %v1579
    %1711 = vmatprep.subr.bf16.mxu0 %v1576
    %1712 = vmatpush1.bf16.msra.mxu0 %v1575
    %1713 = vmatprep.subr.bf16.mxu0 %v1572
    %1714 = vmatpush1.bf16.msra.mxu0 %v1571
    %1715 = vmatprep.subr.bf16.mxu0 %v1632
    %1716 = vmatpush2.bf16.msra.mxu0 %v1631
    %1717 = vmatprep.subr.bf16.mxu0 %v1628
    %1718 = vmatpush2.bf16.msra.mxu0 %v1627
    %1719 = vmatprep.subr.bf16.mxu0 %v1624
    %1720 = vmatpush2.bf16.msra.mxu0 %v1623
    %1721 = vmatprep.subr.bf16.mxu0 %v1620
    %1722 = vmatpush2.bf16.msra.mxu0 %v1619
    %1723 = vmatprep.subr.bf16.mxu0 %v1616
    %1724 = vmatpush2.bf16.msra.mxu0 %v1615
    %1725 = vmatprep.subr.bf16.mxu0 %v1612
    %1726 = vmatpush2.bf16.msra.mxu0 %v1611
    %1727 = vmatprep.subr.bf16.mxu0 %v1608
    %1728 = vmatpush2.bf16.msra.mxu0 %v1607
    %1729 = vmatprep.subr.bf16.mxu0 %v1604
    %1730 = vmatpush2.bf16.msra.mxu0 %v1603
    %1731 = vmatprep.mubr.bf16.mxu0 %v1316
    %1732 = vmatmul.mubr.bf16.gmra.mxu0 %v1315
    %v1733 = vpop.f32.mrf.mxu0
    %v1734 = vadd.f32 %v1202, %v1733
    %v1735 = vpop.f32.mrf.mxu0
    %v1736 = vadd.f32 %v1206, %v1735
    %v1737 = vpop.f32.mrf.mxu0
    %v1738 = vadd.f32 %v1202, %v1737
    %v1739 = vpop.f32.mrf.mxu0
    %v1740 = vadd.f32 %v1206, %v1739
    %1741 = vmatprep.mubr.bf16.mxu0 %v1318
    %1742 = vmatmul.mubr.bf16.gmra.mxu0 %v1317
    %v1743 = vpop.f32.mrf.mxu0
    %v1744 = vadd.f32 %v1202, %v1743
    %v1745 = vpop.f32.mrf.mxu0
    %v1746 = vadd.f32 %v1206, %v1745
    %v1747 = vpop.f32.mrf.mxu0
    %v1748 = vadd.f32 %v1202, %v1747
    %v1749 = vpop.f32.mrf.mxu0
    %v1750 = vadd.f32 %v1206, %v1749
    %1751 = vmatprep.mubr.bf16.mxu0 %v1320
    %1752 = vmatmul.mubr.bf16.gmra.mxu0 %v1319
    %v1753 = vpop.f32.mrf.mxu0
    %v1754 = vadd.f32 %v1202, %v1753
    %v1755 = vpop.f32.mrf.mxu0
    %v1756 = vadd.f32 %v1206, %v1755
    %v1757 = vpop.f32.mrf.mxu0
    %v1758 = vadd.f32 %v1202, %v1757
    %v1759 = vpop.f32.mrf.mxu0
    %v1760 = vadd.f32 %v1206, %v1759
    %1761 = vmatprep.mubr.bf16.mxu0 %v1322
    %1762 = vmatmul.mubr.bf16.gmra.mxu0 %v1321
    %v1763 = vpop.f32.mrf.mxu0
    %v1764 = vadd.f32 %v1202, %v1763
    %v1765 = vpop.f32.mrf.mxu0
    %v1766 = vadd.f32 %v1206, %v1765
    %v1767 = vpop.f32.mrf.mxu0
    %v1768 = vadd.f32 %v1202, %v1767
    %v1769 = vpop.f32.mrf.mxu0
    %v1770 = vadd.f32 %v1206, %v1769
    %1771 = vmatprep.mubr.bf16.mxu0 %v1324
    %1772 = vmatmul.mubr.bf16.gmra.mxu0 %v1323
    %v1773 = vpop.f32.mrf.mxu0
    %v1774 = vadd.f32 %v1202, %v1773
    %v1775 = vpop.f32.mrf.mxu0
    %v1776 = vadd.f32 %v1206, %v1775
    %v1777 = vpop.f32.mrf.mxu0
    %v1778 = vadd.f32 %v1202, %v1777
    %v1779 = vpop.f32.mrf.mxu0
    %v1780 = vadd.f32 %v1206, %v1779
    %1781 = vmatprep.mubr.bf16.mxu0 %v1326
    %1782 = vmatmul.mubr.bf16.gmra.mxu0 %v1325
    %v1783 = vpop.f32.mrf.mxu0
    %v1784 = vadd.f32 %v1202, %v1783
    %v1785 = vpop.f32.mrf.mxu0
    %v1786 = vadd.f32 %v1206, %v1785
    %v1787 = vpop.f32.mrf.mxu0
    %v1788 = vadd.f32 %v1202, %v1787
    %v1789 = vpop.f32.mrf.mxu0
    %v1790 = vadd.f32 %v1206, %v1789
    %1791 = vmatprep.mubr.bf16.mxu0 %v1328
    %1792 = vmatmul.mubr.bf16.gmra.mxu0 %v1327
    %v1793 = vpop.f32.mrf.mxu0
    %v1794 = vadd.f32 %v1202, %v1793
    %v1795 = vpop.f32.mrf.mxu0
    %v1796 = vadd.f32 %v1206, %v1795
    %v1797 = vpop.f32.mrf.mxu0
    %v1798 = vadd.f32 %v1202, %v1797
    %v1799 = vpop.f32.mrf.mxu0
    %v1800 = vadd.f32 %v1206, %v1799
    %1801 = vmatprep.mubr.bf16.mxu0 %v1330
    %1802 = vmatmul.mubr.bf16.gmra.mxu0 %v1329
    %v1803 = vpop.f32.mrf.mxu0
    %v1804 = vadd.f32 %v1202, %v1803
    %v1805 = vpop.f32.mrf.mxu0
    %v1806 = vadd.f32 %v1206, %v1805
    %v1807 = vpop.f32.mrf.mxu0
    %v1808 = vadd.f32 %v1202, %v1807
    %v1809 = vpop.f32.mrf.mxu0
    %v1810 = vadd.f32 %v1206, %v1809
    %1811 = vmatprep.mubr.bf16.mxu0 %v1332
    %1812 = vmatmul.mubr.bf16.gmra.mxu0 %v1331
    %v1813 = vpop.f32.mrf.mxu0
    %v1814 = vadd.f32 %v1202, %v1813
    %v1815 = vpop.f32.mrf.mxu0
    %v1816 = vadd.f32 %v1206, %v1815
    %v1817 = vpop.f32.mrf.mxu0
    %v1818 = vadd.f32 %v1202, %v1817
    %v1819 = vpop.f32.mrf.mxu0
    %v1820 = vadd.f32 %v1206, %v1819
    %1821 = vmatprep.mubr.bf16.mxu0 %v1334
    %1822 = vmatmul.mubr.bf16.gmra.mxu0 %v1333
    %v1823 = vpop.f32.mrf.mxu0
    %v1824 = vadd.f32 %v1202, %v1823
    %v1825 = vpop.f32.mrf.mxu0
    %v1826 = vadd.f32 %v1206, %v1825
    %v1827 = vpop.f32.mrf.mxu0
    %v1828 = vadd.f32 %v1202, %v1827
    %v1829 = vpop.f32.mrf.mxu0
    %v1830 = vadd.f32 %v1206, %v1829
    %1831 = vmatprep.mubr.bf16.mxu0 %v1336
    %1832 = vmatmul.mubr.bf16.gmra.mxu0 %v1335
    %v1833 = vpop.f32.mrf.mxu0
    %v1834 = vadd.f32 %v1202, %v1833
    %v1835 = vpop.f32.mrf.mxu0
    %v1836 = vadd.f32 %v1206, %v1835
    %v1837 = vpop.f32.mrf.mxu0
    %v1838 = vadd.f32 %v1202, %v1837
    %v1839 = vpop.f32.mrf.mxu0
    %v1840 = vadd.f32 %v1206, %v1839
    %1841 = vmatprep.mubr.bf16.mxu0 %v1338
    %1842 = vmatmul.mubr.bf16.gmra.mxu0 %v1337
    %v1843 = vpop.f32.mrf.mxu0
    %v1844 = vadd.f32 %v1202, %v1843
    %v1845 = vpop.f32.mrf.mxu0
    %v1846 = vadd.f32 %v1206, %v1845
    %v1847 = vpop.f32.mrf.mxu0
    %v1848 = vadd.f32 %v1202, %v1847
    %v1849 = vpop.f32.mrf.mxu0
    %v1850 = vadd.f32 %v1206, %v1849
    %1851 = vmatprep.mubr.bf16.mxu0 %v1340
    %1852 = vmatmul.mubr.bf16.gmra.mxu0 %v1339
    %v1853 = vpop.f32.mrf.mxu0
    %v1854 = vadd.f32 %v1202, %v1853
    %v1855 = vpop.f32.mrf.mxu0
    %v1856 = vadd.f32 %v1206, %v1855
    %v1857 = vpop.f32.mrf.mxu0
    %v1858 = vadd.f32 %v1202, %v1857
    %v1859 = vpop.f32.mrf.mxu0
    %v1860 = vadd.f32 %v1206, %v1859
    %1861 = vmatprep.mubr.bf16.mxu0 %v1342
    %1862 = vmatmul.mubr.bf16.gmra.mxu0 %v1341
    %v1863 = vpop.f32.mrf.mxu0
    %v1864 = vadd.f32 %v1202, %v1863
    %v1865 = vpop.f32.mrf.mxu0
    %v1866 = vadd.f32 %v1206, %v1865
    %v1867 = vpop.f32.mrf.mxu0
    %v1868 = vadd.f32 %v1202, %v1867
    %v1869 = vpop.f32.mrf.mxu0
    %v1870 = vadd.f32 %v1206, %v1869
    %1871 = vmatprep.mubr.bf16.mxu0 %v1344
    %1872 = vmatmul.mubr.bf16.gmra.mxu0 %v1343
    %v1873 = vpop.f32.mrf.mxu0
    %v1874 = vadd.f32 %v1202, %v1873
    %v1875 = vpop.f32.mrf.mxu0
    %v1876 = vadd.f32 %v1206, %v1875
    %v1877 = vpop.f32.mrf.mxu0
    %v1878 = vadd.f32 %v1202, %v1877
    %v1879 = vpop.f32.mrf.mxu0
    %v1880 = vadd.f32 %v1206, %v1879
    %1881 = vmatprep.mubr.bf16.mxu0 %v1346
    %1882 = vmatmul.mubr.bf16.gmra.mxu0 %v1345
    %v1883 = vpop.f32.mrf.mxu0
    %v1884 = vadd.f32 %v1202, %v1883
    %v1885 = vpop.f32.mrf.mxu0
    %v1886 = vadd.f32 %v1206, %v1885
    %v1887 = vpop.f32.mrf.mxu0
    %v1888 = vadd.f32 %v1202, %v1887
    %v1889 = vpop.f32.mrf.mxu0
    %v1890 = vadd.f32 %v1206, %v1889
    %1891 = vdwg.mxu0
    %1892 = vmatprep.subr.bf16.mxu0 %v1602
    %1893 = vmatpush1.bf16.msra.mxu0 %v1601
    %1894 = vmatprep.subr.bf16.mxu0 %v1598
    %1895 = vmatpush1.bf16.msra.mxu0 %v1597
    %1896 = vmatprep.subr.bf16.mxu0 %v1594
    %1897 = vmatpush1.bf16.msra.mxu0 %v1593
    %1898 = vmatprep.subr.bf16.mxu0 %v1590
    %1899 = vmatpush1.bf16.msra.mxu0 %v1589
    %1900 = vmatprep.subr.bf16.mxu0 %v1586
    %1901 = vmatpush1.bf16.msra.mxu0 %v1585
    %1902 = vmatprep.subr.bf16.mxu0 %v1582
    %1903 = vmatpush1.bf16.msra.mxu0 %v1581
    %1904 = vmatprep.subr.bf16.mxu0 %v1578
    %1905 = vmatpush1.bf16.msra.mxu0 %v1577
    %1906 = vmatprep.subr.bf16.mxu0 %v1574
    %1907 = vmatpush1.bf16.msra.mxu0 %v1573
    %1908 = vmatprep.subr.bf16.mxu0 %v1634
    %1909 = vmatpush2.bf16.msra.mxu0 %v1633
    %1910 = vmatprep.subr.bf16.mxu0 %v1630
    %1911 = vmatpush2.bf16.msra.mxu0 %v1629
    %1912 = vmatprep.subr.bf16.mxu0 %v1626
    %1913 = vmatpush2.bf16.msra.mxu0 %v1625
    %1914 = vmatprep.subr.bf16.mxu0 %v1622
    %1915 = vmatpush2.bf16.msra.mxu0 %v1621
    %1916 = vmatprep.subr.bf16.mxu0 %v1618
    %1917 = vmatpush2.bf16.msra.mxu0 %v1617
    %1918 = vmatprep.subr.bf16.mxu0 %v1614
    %1919 = vmatpush2.bf16.msra.mxu0 %v1613
    %1920 = vmatprep.subr.bf16.mxu0 %v1610
    %1921 = vmatpush2.bf16.msra.mxu0 %v1609
    %1922 = vmatprep.subr.bf16.mxu0 %v1606
    %1923 = vmatpush2.bf16.msra.mxu0 %v1605
    %1924 = vmatprep.mubr.bf16.mxu0 %v1316
    %1925 = vmatmul.mubr.bf16.gmra.mxu0 %v1315
    %v1926 = vpop.f32.mrf.mxu0
    %v1927 = vadd.f32 %v1210, %v1926
    %v1928 = vpop.f32.mrf.mxu0
    %v1929 = vadd.f32 %v1214, %v1928
    %v1930 = vpop.f32.mrf.mxu0
    %v1931 = vadd.f32 %v1210, %v1930
    %v1932 = vpop.f32.mrf.mxu0
    %v1933 = vadd.f32 %v1214, %v1932
    %1934 = vmatprep.mubr.bf16.mxu0 %v1318
    %1935 = vmatmul.mubr.bf16.gmra.mxu0 %v1317
    %v1936 = vpop.f32.mrf.mxu0
    %v1937 = vadd.f32 %v1210, %v1936
    %v1938 = vpop.f32.mrf.mxu0
    %v1939 = vadd.f32 %v1214, %v1938
    %v1940 = vpop.f32.mrf.mxu0
    %v1941 = vadd.f32 %v1210, %v1940
    %v1942 = vpop.f32.mrf.mxu0
    %v1943 = vadd.f32 %v1214, %v1942
    %1944 = vmatprep.mubr.bf16.mxu0 %v1320
    %1945 = vmatmul.mubr.bf16.gmra.mxu0 %v1319
    %v1946 = vpop.f32.mrf.mxu0
    %v1947 = vadd.f32 %v1210, %v1946
    %v1948 = vpop.f32.mrf.mxu0
    %v1949 = vadd.f32 %v1214, %v1948
    %v1950 = vpop.f32.mrf.mxu0
    %v1951 = vadd.f32 %v1210, %v1950
    %v1952 = vpop.f32.mrf.mxu0
    %v1953 = vadd.f32 %v1214, %v1952
    %1954 = vmatprep.mubr.bf16.mxu0 %v1322
    %1955 = vmatmul.mubr.bf16.gmra.mxu0 %v1321
    %v1956 = vpop.f32.mrf.mxu0
    %v1957 = vadd.f32 %v1210, %v1956
    %v1958 = vpop.f32.mrf.mxu0
    %v1959 = vadd.f32 %v1214, %v1958
    %v1960 = vpop.f32.mrf.mxu0
    %v1961 = vadd.f32 %v1210, %v1960
    %v1962 = vpop.f32.mrf.mxu0
    %v1963 = vadd.f32 %v1214, %v1962
    %1964 = vmatprep.mubr.bf16.mxu0 %v1324
    %1965 = vmatmul.mubr.bf16.gmra.mxu0 %v1323
    %v1966 = vpop.f32.mrf.mxu0
    %v1967 = vadd.f32 %v1210, %v1966
    %v1968 = vpop.f32.mrf.mxu0
    %v1969 = vadd.f32 %v1214, %v1968
    %v1970 = vpop.f32.mrf.mxu0
    %v1971 = vadd.f32 %v1210, %v1970
    %v1972 = vpop.f32.mrf.mxu0
    %v1973 = vadd.f32 %v1214, %v1972
    %1974 = vmatprep.mubr.bf16.mxu0 %v1326
    %1975 = vmatmul.mubr.bf16.gmra.mxu0 %v1325
    %v1976 = vpop.f32.mrf.mxu0
    %v1977 = vadd.f32 %v1210, %v1976
    %v1978 = vpop.f32.mrf.mxu0
    %v1979 = vadd.f32 %v1214, %v1978
    %v1980 = vpop.f32.mrf.mxu0
    %v1981 = vadd.f32 %v1210, %v1980
    %v1982 = vpop.f32.mrf.mxu0
    %v1983 = vadd.f32 %v1214, %v1982
    %1984 = vmatprep.mubr.bf16.mxu0 %v1328
    %1985 = vmatmul.mubr.bf16.gmra.mxu0 %v1327
    %v1986 = vpop.f32.mrf.mxu0
    %v1987 = vadd.f32 %v1210, %v1986
    %v1988 = vpop.f32.mrf.mxu0
    %v1989 = vadd.f32 %v1214, %v1988
    %v1990 = vpop.f32.mrf.mxu0
    %v1991 = vadd.f32 %v1210, %v1990
    %v1992 = vpop.f32.mrf.mxu0
    %v1993 = vadd.f32 %v1214, %v1992
    %1994 = vmatprep.mubr.bf16.mxu0 %v1330
    %1995 = vmatmul.mubr.bf16.gmra.mxu0 %v1329
    %v1996 = vpop.f32.mrf.mxu0
    %v1997 = vadd.f32 %v1210, %v1996
    %v1998 = vpop.f32.mrf.mxu0
    %v1999 = vadd.f32 %v1214, %v1998
    %v2000 = vpop.f32.mrf.mxu0
    %v2001 = vadd.f32 %v1210, %v2000
    %v2002 = vpop.f32.mrf.mxu0
    %v2003 = vadd.f32 %v1214, %v2002
    %2004 = vmatprep.mubr.bf16.mxu0 %v1332
    %2005 = vmatmul.mubr.bf16.gmra.mxu0 %v1331
    %v2006 = vpop.f32.mrf.mxu0
    %v2007 = vadd.f32 %v1210, %v2006
    %v2008 = vpop.f32.mrf.mxu0
    %v2009 = vadd.f32 %v1214, %v2008
    %v2010 = vpop.f32.mrf.mxu0
    %v2011 = vadd.f32 %v1210, %v2010
    %v2012 = vpop.f32.mrf.mxu0
    %v2013 = vadd.f32 %v1214, %v2012
    %2014 = vmatprep.mubr.bf16.mxu0 %v1334
    %2015 = vmatmul.mubr.bf16.gmra.mxu0 %v1333
    %v2016 = vpop.f32.mrf.mxu0
    %v2017 = vadd.f32 %v1210, %v2016
    %v2018 = vpop.f32.mrf.mxu0
    %v2019 = vadd.f32 %v1214, %v2018
    %v2020 = vpop.f32.mrf.mxu0
    %v2021 = vadd.f32 %v1210, %v2020
    %v2022 = vpop.f32.mrf.mxu0
    %v2023 = vadd.f32 %v1214, %v2022
    %2024 = vmatprep.mubr.bf16.mxu0 %v1336
    %2025 = vmatmul.mubr.bf16.gmra.mxu0 %v1335
    %v2026 = vpop.f32.mrf.mxu0
    %v2027 = vadd.f32 %v1210, %v2026
    %v2028 = vpop.f32.mrf.mxu0
    %v2029 = vadd.f32 %v1214, %v2028
    %v2030 = vpop.f32.mrf.mxu0
    %v2031 = vadd.f32 %v1210, %v2030
    %v2032 = vpop.f32.mrf.mxu0
    %v2033 = vadd.f32 %v1214, %v2032
    %2034 = vmatprep.mubr.bf16.mxu0 %v1338
    %2035 = vmatmul.mubr.bf16.gmra.mxu0 %v1337
    %v2036 = vpop.f32.mrf.mxu0
    %v2037 = vadd.f32 %v1210, %v2036
    %v2038 = vpop.f32.mrf.mxu0
    %v2039 = vadd.f32 %v1214, %v2038
    %v2040 = vpop.f32.mrf.mxu0
    %v2041 = vadd.f32 %v1210, %v2040
    %v2042 = vpop.f32.mrf.mxu0
    %v2043 = vadd.f32 %v1214, %v2042
    %2044 = vmatprep.mubr.bf16.mxu0 %v1340
    %2045 = vmatmul.mubr.bf16.gmra.mxu0 %v1339
    %v2046 = vpop.f32.mrf.mxu0
    %v2047 = vadd.f32 %v1210, %v2046
    %v2048 = vpop.f32.mrf.mxu0
    %v2049 = vadd.f32 %v1214, %v2048
    %v2050 = vpop.f32.mrf.mxu0
    %v2051 = vadd.f32 %v1210, %v2050
    %v2052 = vpop.f32.mrf.mxu0
    %v2053 = vadd.f32 %v1214, %v2052
    %2054 = vmatprep.mubr.bf16.mxu0 %v1342
    %2055 = vmatmul.mubr.bf16.gmra.mxu0 %v1341
    %v2056 = vpop.f32.mrf.mxu0
    %v2057 = vadd.f32 %v1210, %v2056
    %v2058 = vpop.f32.mrf.mxu0
    %v2059 = vadd.f32 %v1214, %v2058
    %v2060 = vpop.f32.mrf.mxu0
    %v2061 = vadd.f32 %v1210, %v2060
    %v2062 = vpop.f32.mrf.mxu0
    %v2063 = vadd.f32 %v1214, %v2062
    %2064 = vmatprep.mubr.bf16.mxu0 %v1344
    %2065 = vmatmul.mubr.bf16.gmra.mxu0 %v1343
    %v2066 = vpop.f32.mrf.mxu0
    %v2067 = vadd.f32 %v1210, %v2066
    %v2068 = vpop.f32.mrf.mxu0
    %v2069 = vadd.f32 %v1214, %v2068
    %v2070 = vpop.f32.mrf.mxu0
    %v2071 = vadd.f32 %v1210, %v2070
    %v2072 = vpop.f32.mrf.mxu0
    %v2073 = vadd.f32 %v1214, %v2072
    %2074 = vmatprep.mubr.bf16.mxu0 %v1346
    %2075 = vmatmul.mubr.bf16.gmra.mxu0 %v1345
    %v2076 = vpop.f32.mrf.mxu0
    %v2077 = vadd.f32 %v1210, %v2076
    %v2078 = vpop.f32.mrf.mxu0
    %v2079 = vadd.f32 %v1214, %v2078
    %v2080 = vpop.f32.mrf.mxu0
    %v2081 = vadd.f32 %v1210, %v2080
    %v2082 = vpop.f32.mrf.mxu0
    %v2083 = vadd.f32 %v1214, %v2082
    %2084 = vdwg.mxu0
    %v2085 = vmul.f32 %v1734, 0.5
    %v2086 = vmul.f32 %v1736, 0.5
    %v2087 = vmul.f32 %v1927, 0.5
    %v2088 = vmul.f32 %v1929, 0.5
    %v2089 = vmul.f32 %v1738, 0.5
    %v2090 = vmul.f32 %v1740, 0.5
    %v2091 = vmul.f32 %v1931, 0.5
    %v2092 = vmul.f32 %v1933, 0.5
    %v2093 = vmul.f32 %v1744, 0.5
    %v2094 = vmul.f32 %v1746, 0.5
    %v2095 = vmul.f32 %v1937, 0.5
    %v2096 = vmul.f32 %v1939, 0.5
    %v2097 = vmul.f32 %v1748, 0.5
    %v2098 = vmul.f32 %v1750, 0.5
    %v2099 = vmul.f32 %v1941, 0.5
    %v2100 = vmul.f32 %v1943, 0.5
    %v2101 = vmul.f32 %v1754, 0.5
    %v2102 = vmul.f32 %v1756, 0.5
    %v2103 = vmul.f32 %v1947, 0.5
    %v2104 = vmul.f32 %v1949, 0.5
    %v2105 = vmul.f32 %v1758, 0.5
    %v2106 = vmul.f32 %v1760, 0.5
    %v2107 = vmul.f32 %v1951, 0.5
    %v2108 = vmul.f32 %v1953, 0.5
    %v2109 = vmul.f32 %v1764, 0.5
    %v2110 = vmul.f32 %v1766, 0.5
    %v2111 = vmul.f32 %v1957, 0.5
    %v2112 = vmul.f32 %v1959, 0.5
    %v2113 = vmul.f32 %v1768, 0.5
    %v2114 = vmul.f32 %v1770, 0.5
    %v2115 = vmul.f32 %v1961, 0.5
    %v2116 = vmul.f32 %v1963, 0.5
    %v2117 = vmul.f32 %v1774, 0.5
    %v2118 = vmul.f32 %v1776, 0.5
    %v2119 = vmul.f32 %v1967, 0.5
    %v2120 = vmul.f32 %v1969, 0.5
    %v2121 = vmul.f32 %v1778, 0.5
    %v2122 = vmul.f32 %v1780, 0.5
    %v2123 = vmul.f32 %v1971, 0.5
    %v2124 = vmul.f32 %v1973, 0.5
    %v2125 = vmul.f32 %v1784, 0.5
    %v2126 = vmul.f32 %v1786, 0.5
    %v2127 = vmul.f32 %v1977, 0.5
    %v2128 = vmul.f32 %v1979, 0.5
    %v2129 = vmul.f32 %v1788, 0.5
    %v2130 = vmul.f32 %v1790, 0.5
    %v2131 = vmul.f32 %v1981, 0.5
    %v2132 = vmul.f32 %v1983, 0.5
    %v2133 = vmul.f32 %v1794, 0.5
    %v2134 = vmul.f32 %v1796, 0.5
    %v2135 = vmul.f32 %v1987, 0.5
    %v2136 = vmul.f32 %v1989, 0.5
    %v2137 = vmul.f32 %v1798, 0.5
    %v2138 = vmul.f32 %v1800, 0.5
    %v2139 = vmul.f32 %v1991, 0.5
    %v2140 = vmul.f32 %v1993, 0.5
    %v2141 = vmul.f32 %v1804, 0.5
    %v2142 = vmul.f32 %v1806, 0.5
    %v2143 = vmul.f32 %v1997, 0.5
    %v2144 = vmul.f32 %v1999, 0.5
    %v2145 = vmul.f32 %v1808, 0.5
    %v2146 = vmul.f32 %v1810, 0.5
    %v2147 = vmul.f32 %v2001, 0.5
    %v2148 = vmul.f32 %v2003, 0.5
    %v2149 = vmul.f32 %v1814, 0.5
    %v2150 = vmul.f32 %v1816, 0.5
    %v2151 = vmul.f32 %v2007, 0.5
    %v2152 = vmul.f32 %v2009, 0.5
    %v2153 = vmul.f32 %v1818, 0.5
    %v2154 = vmul.f32 %v1820, 0.5
    %v2155 = vmul.f32 %v2011, 0.5
    %v2156 = vmul.f32 %v2013, 0.5
    %v2157 = vmul.f32 %v1824, 0.5
    %v2158 = vmul.f32 %v1826, 0.5
    %v2159 = vmul.f32 %v2017, 0.5
    %v2160 = vmul.f32 %v2019, 0.5
    %v2161 = vmul.f32 %v1828, 0.5
    %v2162 = vmul.f32 %v1830, 0.5
    %v2163 = vmul.f32 %v2021, 0.5
    %v2164 = vmul.f32 %v2023, 0.5
    %v2165 = vmul.f32 %v1834, 0.5
    %v2166 = vmul.f32 %v1836, 0.5
    %v2167 = vmul.f32 %v2027, 0.5
    %v2168 = vmul.f32 %v2029, 0.5
    %v2169 = vmul.f32 %v1838, 0.5
    %v2170 = vmul.f32 %v1840, 0.5
    %v2171 = vmul.f32 %v2031, 0.5
    %v2172 = vmul.f32 %v2033, 0.5
    %v2173 = vmul.f32 %v1844, 0.5
    %v2174 = vmul.f32 %v1846, 0.5
    %v2175 = vmul.f32 %v2037, 0.5
    %v2176 = vmul.f32 %v2039, 0.5
    %v2177 = vmul.f32 %v1848, 0.5
    %v2178 = vmul.f32 %v1850, 0.5
    %v2179 = vmul.f32 %v2041, 0.5
    %v2180 = vmul.f32 %v2043, 0.5
    %v2181 = vmul.f32 %v1854, 0.5
    %v2182 = vmul.f32 %v1856, 0.5
    %v2183 = vmul.f32 %v2047, 0.5
    %v2184 = vmul.f32 %v2049, 0.5
    %v2185 = vmul.f32 %v1858, 0.5
    %v2186 = vmul.f32 %v1860, 0.5
    %v2187 = vmul.f32 %v2051, 0.5
    %v2188 = vmul.f32 %v2053, 0.5
    %v2189 = vmul.f32 %v1864, 0.5
    %v2190 = vmul.f32 %v1866, 0.5
    %v2191 = vmul.f32 %v2057, 0.5
    %v2192 = vmul.f32 %v2059, 0.5
    %v2193 = vmul.f32 %v1868, 0.5
    %v2194 = vmul.f32 %v1870, 0.5
    %v2195 = vmul.f32 %v2061, 0.5
    %v2196 = vmul.f32 %v2063, 0.5
    %v2197 = vmul.f32 %v1874, 0.5
    %v2198 = vmul.f32 %v1876, 0.5
    %v2199 = vmul.f32 %v2067, 0.5
    %v2200 = vmul.f32 %v2069, 0.5
    %v2201 = vmul.f32 %v1878, 0.5
    %v2202 = vmul.f32 %v1880, 0.5
    %v2203 = vmul.f32 %v2071, 0.5
    %v2204 = vmul.f32 %v2073, 0.5
    %v2205 = vmul.f32 %v1884, 0.5
    %v2206 = vmul.f32 %v1886, 0.5
    %v2207 = vmul.f32 %v2077, 0.5
    %v2208 = vmul.f32 %v2079, 0.5
    %v2209 = vmul.f32 %v1888, 0.5
    %v2210 = vmul.f32 %v1890, 0.5
    %v2211 = vmul.f32 %v2081, 0.5
    %v2212 = vmul.f32 %v2083, 0.5
    %v2213 = vmul.f32 %v1734, 0.70710677
    %v2214 = vmul.f32 %v1736, 0.70710677
    %v2215 = vmul.f32 %v1927, 0.70710677
    %v2216 = vmul.f32 %v1929, 0.70710677
    %v2217 = vmul.f32 %v1738, 0.70710677
    %v2218 = vmul.f32 %v1740, 0.70710677
    %v2219 = vmul.f32 %v1931, 0.70710677
    %v2220 = vmul.f32 %v1933, 0.70710677
    %v2221 = vmul.f32 %v1744, 0.70710677
    %v2222 = vmul.f32 %v1746, 0.70710677
    %v2223 = vmul.f32 %v1937, 0.70710677
    %v2224 = vmul.f32 %v1939, 0.70710677
    %v2225 = vmul.f32 %v1748, 0.70710677
    %v2226 = vmul.f32 %v1750, 0.70710677
    %v2227 = vmul.f32 %v1941, 0.70710677
    %v2228 = vmul.f32 %v1943, 0.70710677
    %v2229 = vmul.f32 %v1754, 0.70710677
    %v2230 = vmul.f32 %v1756, 0.70710677
    %v2231 = vmul.f32 %v1947, 0.70710677
    %v2232 = vmul.f32 %v1949, 0.70710677
    %v2233 = vmul.f32 %v1758, 0.70710677
    %v2234 = vmul.f32 %v1760, 0.70710677
    %v2235 = vmul.f32 %v1951, 0.70710677
    %v2236 = vmul.f32 %v1953, 0.70710677
    %v2237 = vmul.f32 %v1764, 0.70710677
    %v2238 = vmul.f32 %v1766, 0.70710677
    %v2239 = vmul.f32 %v1957, 0.70710677
    %v2240 = vmul.f32 %v1959, 0.70710677
    %v2241 = vmul.f32 %v1768, 0.70710677
    %v2242 = vmul.f32 %v1770, 0.70710677
    %v2243 = vmul.f32 %v1961, 0.70710677
    %v2244 = vmul.f32 %v1963, 0.70710677
    %v2245 = vmul.f32 %v1774, 0.70710677
    %v2246 = vmul.f32 %v1776, 0.70710677
    %v2247 = vmul.f32 %v1967, 0.70710677
    %v2248 = vmul.f32 %v1969, 0.70710677
    %v2249 = vmul.f32 %v1778, 0.70710677
    %v2250 = vmul.f32 %v1780, 0.70710677
    %v2251 = vmul.f32 %v1971, 0.70710677
    %v2252 = vmul.f32 %v1973, 0.70710677
    %v2253 = vmul.f32 %v1784, 0.70710677
    %v2254 = vmul.f32 %v1786, 0.70710677
    %v2255 = vmul.f32 %v1977, 0.70710677
    %v2256 = vmul.f32 %v1979, 0.70710677
    %v2257 = vmul.f32 %v1788, 0.70710677
    %v2258 = vmul.f32 %v1790, 0.70710677
    %v2259 = vmul.f32 %v1981, 0.70710677
    %v2260 = vmul.f32 %v1983, 0.70710677
    %v2261 = vmul.f32 %v1794, 0.70710677
    %v2262 = vmul.f32 %v1796, 0.70710677
    %v2263 = vmul.f32 %v1987, 0.70710677
    %v2264 = vmul.f32 %v1989, 0.70710677
    %v2265 = vmul.f32 %v1798, 0.70710677
    %v2266 = vmul.f32 %v1800, 0.70710677
    %v2267 = vmul.f32 %v1991, 0.70710677
    %v2268 = vmul.f32 %v1993, 0.70710677
    %v2269 = vmul.f32 %v1804, 0.70710677
    %v2270 = vmul.f32 %v1806, 0.70710677
    %v2271 = vmul.f32 %v1997, 0.70710677
    %v2272 = vmul.f32 %v1999, 0.70710677
    %v2273 = vmul.f32 %v1808, 0.70710677
    %v2274 = vmul.f32 %v1810, 0.70710677
    %v2275 = vmul.f32 %v2001, 0.70710677
    %v2276 = vmul.f32 %v2003, 0.70710677
    %v2277 = vmul.f32 %v1814, 0.70710677
    %v2278 = vmul.f32 %v1816, 0.70710677
    %v2279 = vmul.f32 %v2007, 0.70710677
    %v2280 = vmul.f32 %v2009, 0.70710677
    %v2281 = vmul.f32 %v1818, 0.70710677
    %v2282 = vmul.f32 %v1820, 0.70710677
    %v2283 = vmul.f32 %v2011, 0.70710677
    %v2284 = vmul.f32 %v2013, 0.70710677
    %v2285 = vmul.f32 %v1824, 0.70710677
    %v2286 = vmul.f32 %v1826, 0.70710677
    %v2287 = vmul.f32 %v2017, 0.70710677
    %v2288 = vmul.f32 %v2019, 0.70710677
    %v2289 = vmul.f32 %v1828, 0.70710677
    %v2290 = vmul.f32 %v1830, 0.70710677
    %v2291 = vmul.f32 %v2021, 0.70710677
    %v2292 = vmul.f32 %v2023, 0.70710677
    %v2293 = vmul.f32 %v1834, 0.70710677
    %v2294 = vmul.f32 %v1836, 0.70710677
    %v2295 = vmul.f32 %v2027, 0.70710677
    %v2296 = vmul.f32 %v2029, 0.70710677
    %v2297 = vmul.f32 %v1838, 0.70710677
    %v2298 = vmul.f32 %v1840, 0.70710677
    %v2299 = vmul.f32 %v2031, 0.70710677
    %v2300 = vmul.f32 %v2033, 0.70710677
    %v2301 = vmul.f32 %v1844, 0.70710677
    %v2302 = vmul.f32 %v1846, 0.70710677
    %v2303 = vmul.f32 %v2037, 0.70710677
    %v2304 = vmul.f32 %v2039, 0.70710677
    %v2305 = vmul.f32 %v1848, 0.70710677
    %v2306 = vmul.f32 %v1850, 0.70710677
    %v2307 = vmul.f32 %v2041, 0.70710677
    %v2308 = vmul.f32 %v2043, 0.70710677
    %v2309 = vmul.f32 %v1854, 0.70710677
    %v2310 = vmul.f32 %v1856, 0.70710677
    %v2311 = vmul.f32 %v2047, 0.70710677
    %v2312 = vmul.f32 %v2049, 0.70710677
    %v2313 = vmul.f32 %v1858, 0.70710677
    %v2314 = vmul.f32 %v1860, 0.70710677
    %v2315 = vmul.f32 %v2051, 0.70710677
    %v2316 = vmul.f32 %v2053, 0.70710677
    %v2317 = vmul.f32 %v1864, 0.70710677
    %v2318 = vmul.f32 %v1866, 0.70710677
    %v2319 = vmul.f32 %v2057, 0.70710677
    %v2320 = vmul.f32 %v2059, 0.70710677
    %v2321 = vmul.f32 %v1868, 0.70710677
    %v2322 = vmul.f32 %v1870, 0.70710677
    %v2323 = vmul.f32 %v2061, 0.70710677
    %v2324 = vmul.f32 %v2063, 0.70710677
    %v2325 = vmul.f32 %v1874, 0.70710677
    %v2326 = vmul.f32 %v1876, 0.70710677
    %v2327 = vmul.f32 %v2067, 0.70710677
    %v2328 = vmul.f32 %v2069, 0.70710677
    %v2329 = vmul.f32 %v1878, 0.70710677
    %v2330 = vmul.f32 %v1880, 0.70710677
    %v2331 = vmul.f32 %v2071, 0.70710677
    %v2332 = vmul.f32 %v2073, 0.70710677
    %v2333 = vmul.f32 %v1884, 0.70710677
    %v2334 = vmul.f32 %v1886, 0.70710677
    %v2335 = vmul.f32 %v2077, 0.70710677
    %v2336 = vmul.f32 %v2079, 0.70710677
    %v2337 = vmul.f32 %v1888, 0.70710677
    %v2338 = vmul.f32 %v1890, 0.70710677
    %v2339 = vmul.f32 %v2081, 0.70710677
    %v2340 = vmul.f32 %v2083, 0.70710677
    %v2341 = verf.f32.pop %v2213
    %v2342 = verf.f32.pop %v2214
    %v2343 = verf.f32.pop %v2215
    %v2344 = verf.f32.pop %v2216
    %v2345 = verf.f32.pop %v2217
    %v2346 = verf.f32.pop %v2218
    %v2347 = verf.f32.pop %v2219
    %v2348 = verf.f32.pop %v2220
    %v2349 = verf.f32.pop %v2221
    %v2350 = verf.f32.pop %v2222
    %v2351 = verf.f32.pop %v2223
    %v2352 = verf.f32.pop %v2224
    %v2353 = verf.f32.pop %v2225
    %v2354 = verf.f32.pop %v2226
    %v2355 = verf.f32.pop %v2227
    %v2356 = verf.f32.pop %v2228
    %v2357 = verf.f32.pop %v2229
    %v2358 = verf.f32.pop %v2230
    %v2359 = verf.f32.pop %v2231
    %v2360 = verf.f32.pop %v2232
    %v2361 = verf.f32.pop %v2233
    %v2362 = verf.f32.pop %v2234
    %v2363 = verf.f32.pop %v2235
    %v2364 = verf.f32.pop %v2236
    %v2365 = verf.f32.pop %v2237
    %v2366 = verf.f32.pop %v2238
    %v2367 = verf.f32.pop %v2239
    %v2368 = verf.f32.pop %v2240
    %v2369 = verf.f32.pop %v2241
    %v2370 = verf.f32.pop %v2242
    %v2371 = verf.f32.pop %v2243
    %v2372 = verf.f32.pop %v2244
    %v2373 = verf.f32.pop %v2245
    %v2374 = verf.f32.pop %v2246
    %v2375 = verf.f32.pop %v2247
    %v2376 = verf.f32.pop %v2248
    %v2377 = verf.f32.pop %v2249
    %v2378 = verf.f32.pop %v2250
    %v2379 = verf.f32.pop %v2251
    %v2380 = verf.f32.pop %v2252
    %v2381 = verf.f32.pop %v2253
    %v2382 = verf.f32.pop %v2254
    %v2383 = verf.f32.pop %v2255
    %v2384 = verf.f32.pop %v2256
    %v2385 = verf.f32.pop %v2257
    %v2386 = verf.f32.pop %v2258
    %v2387 = verf.f32.pop %v2259
    %v2388 = verf.f32.pop %v2260
    %v2389 = verf.f32.pop %v2261
    %v2390 = verf.f32.pop %v2262
    %v2391 = verf.f32.pop %v2263
    %v2392 = verf.f32.pop %v2264
    %v2393 = verf.f32.pop %v2265
    %v2394 = verf.f32.pop %v2266
    %v2395 = verf.f32.pop %v2267
    %v2396 = verf.f32.pop %v2268
    %v2397 = verf.f32.pop %v2269
    %v2398 = verf.f32.pop %v2270
    %v2399 = verf.f32.pop %v2271
    %v2400 = verf.f32.pop %v2272
    %v2401 = verf.f32.pop %v2273
    %v2402 = verf.f32.pop %v2274
    %v2403 = verf.f32.pop %v2275
    %v2404 = verf.f32.pop %v2276
    %v2405 = verf.f32.pop %v2277
    %v2406 = verf.f32.pop %v2278
    %v2407 = verf.f32.pop %v2279
    %v2408 = verf.f32.pop %v2280
    %v2409 = verf.f32.pop %v2281
    %v2410 = verf.f32.pop %v2282
    %v2411 = verf.f32.pop %v2283
    %v2412 = verf.f32.pop %v2284
    %v2413 = verf.f32.pop %v2285
    %v2414 = verf.f32.pop %v2286
    %v2415 = verf.f32.pop %v2287
    %v2416 = verf.f32.pop %v2288
    %v2417 = verf.f32.pop %v2289
    %v2418 = verf.f32.pop %v2290
    %v2419 = verf.f32.pop %v2291
    %v2420 = verf.f32.pop %v2292
    %v2421 = verf.f32.pop %v2293
    %v2422 = verf.f32.pop %v2294
    %v2423 = verf.f32.pop %v2295
    %v2424 = verf.f32.pop %v2296
    %v2425 = verf.f32.pop %v2297
    %v2426 = verf.f32.pop %v2298
    %v2427 = verf.f32.pop %v2299
    %v2428 = verf.f32.pop %v2300
    %v2429 = verf.f32.pop %v2301
    %v2430 = verf.f32.pop %v2302
    %v2431 = verf.f32.pop %v2303
    %v2432 = verf.f32.pop %v2304
    %v2433 = verf.f32.pop %v2305
    %v2434 = verf.f32.pop %v2306
    %v2435 = verf.f32.pop %v2307
    %v2436 = verf.f32.pop %v2308
    %v2437 = verf.f32.pop %v2309
    %v2438 = verf.f32.pop %v2310
    %v2439 = verf.f32.pop %v2311
    %v2440 = verf.f32.pop %v2312
    %v2441 = verf.f32.pop %v2313
    %v2442 = verf.f32.pop %v2314
    %v2443 = verf.f32.pop %v2315
    %v2444 = verf.f32.pop %v2316
    %v2445 = verf.f32.pop %v2317
    %v2446 = verf.f32.pop %v2318
    %v2447 = verf.f32.pop %v2319
    %v2448 = verf.f32.pop %v2320
    %v2449 = verf.f32.pop %v2321
    %v2450 = verf.f32.pop %v2322
    %v2451 = verf.f32.pop %v2323
    %v2452 = verf.f32.pop %v2324
    %v2453 = verf.f32.pop %v2325
    %v2454 = verf.f32.pop %v2326
    %v2455 = verf.f32.pop %v2327
    %v2456 = verf.f32.pop %v2328
    %v2457 = verf.f32.pop %v2329
    %v2458 = verf.f32.pop %v2330
    %v2459 = verf.f32.pop %v2331
    %v2460 = verf.f32.pop %v2332
    %v2461 = verf.f32.pop %v2333
    %v2462 = verf.f32.pop %v2334
    %v2463 = verf.f32.pop %v2335
    %v2464 = verf.f32.pop %v2336
    %v2465 = verf.f32.pop %v2337
    %v2466 = verf.f32.pop %v2338
    %v2467 = verf.f32.pop %v2339
    %v2468 = verf.f32.pop %v2340
    %v2469 = vadd.f32 %v2341, 1.0
    %v2470 = vadd.f32 %v2342, 1.0
    %v2471 = vadd.f32 %v2343, 1.0
    %v2472 = vadd.f32 %v2344, 1.0
    %v2473 = vadd.f32 %v2345, 1.0
    %v2474 = vadd.f32 %v2346, 1.0
    %v2475 = vadd.f32 %v2347, 1.0
    %v2476 = vadd.f32 %v2348, 1.0
    %v2477 = vadd.f32 %v2349, 1.0
    %v2478 = vadd.f32 %v2350, 1.0
    %v2479 = vadd.f32 %v2351, 1.0
    %v2480 = vadd.f32 %v2352, 1.0
    %v2481 = vadd.f32 %v2353, 1.0
    %v2482 = vadd.f32 %v2354, 1.0
    %v2483 = vadd.f32 %v2355, 1.0
    %v2484 = vadd.f32 %v2356, 1.0
    %v2485 = vadd.f32 %v2357, 1.0
    %v2486 = vadd.f32 %v2358, 1.0
    %v2487 = vadd.f32 %v2359, 1.0
    %v2488 = vadd.f32 %v2360, 1.0
    %v2489 = vadd.f32 %v2361, 1.0
    %v2490 = vadd.f32 %v2362, 1.0
    %v2491 = vadd.f32 %v2363, 1.0
    %v2492 = vadd.f32 %v2364, 1.0
    %v2493 = vadd.f32 %v2365, 1.0
    %v2494 = vadd.f32 %v2366, 1.0
    %v2495 = vadd.f32 %v2367, 1.0
    %v2496 = vadd.f32 %v2368, 1.0
    %v2497 = vadd.f32 %v2369, 1.0
    %v2498 = vadd.f32 %v2370, 1.0
    %v2499 = vadd.f32 %v2371, 1.0
    %v2500 = vadd.f32 %v2372, 1.0
    %v2501 = vadd.f32 %v2373, 1.0
    %v2502 = vadd.f32 %v2374, 1.0
    %v2503 = vadd.f32 %v2375, 1.0
    %v2504 = vadd.f32 %v2376, 1.0
    %v2505 = vadd.f32 %v2377, 1.0
    %v2506 = vadd.f32 %v2378, 1.0
    %v2507 = vadd.f32 %v2379, 1.0
    %v2508 = vadd.f32 %v2380, 1.0
    %v2509 = vadd.f32 %v2381, 1.0
    %v2510 = vadd.f32 %v2382, 1.0
    %v2511 = vadd.f32 %v2383, 1.0
    %v2512 = vadd.f32 %v2384, 1.0
    %v2513 = vadd.f32 %v2385, 1.0
    %v2514 = vadd.f32 %v2386, 1.0
    %v2515 = vadd.f32 %v2387, 1.0
    %v2516 = vadd.f32 %v2388, 1.0
    %v2517 = vadd.f32 %v2389, 1.0
    %v2518 = vadd.f32 %v2390, 1.0
    %v2519 = vadd.f32 %v2391, 1.0
    %v2520 = vadd.f32 %v2392, 1.0
    %v2521 = vadd.f32 %v2393, 1.0
    %v2522 = vadd.f32 %v2394, 1.0
    %v2523 = vadd.f32 %v2395, 1.0
    %v2524 = vadd.f32 %v2396, 1.0
    %v2525 = vadd.f32 %v2397, 1.0
    %v2526 = vadd.f32 %v2398, 1.0
    %v2527 = vadd.f32 %v2399, 1.0
    %v2528 = vadd.f32 %v2400, 1.0
    %v2529 = vadd.f32 %v2401, 1.0
    %v2530 = vadd.f32 %v2402, 1.0
    %v2531 = vadd.f32 %v2403, 1.0
    %v2532 = vadd.f32 %v2404, 1.0
    %v2533 = vadd.f32 %v2405, 1.0
    %v2534 = vadd.f32 %v2406, 1.0
    %v2535 = vadd.f32 %v2407, 1.0
    %v2536 = vadd.f32 %v2408, 1.0
    %v2537 = vadd.f32 %v2409, 1.0
    %v2538 = vadd.f32 %v2410, 1.0
    %v2539 = vadd.f32 %v2411, 1.0
    %v2540 = vadd.f32 %v2412, 1.0
    %v2541 = vadd.f32 %v2413, 1.0
    %v2542 = vadd.f32 %v2414, 1.0
    %v2543 = vadd.f32 %v2415, 1.0
    %v2544 = vadd.f32 %v2416, 1.0
    %v2545 = vadd.f32 %v2417, 1.0
    %v2546 = vadd.f32 %v2418, 1.0
    %v2547 = vadd.f32 %v2419, 1.0
    %v2548 = vadd.f32 %v2420, 1.0
    %v2549 = vadd.f32 %v2421, 1.0
    %v2550 = vadd.f32 %v2422, 1.0
    %v2551 = vadd.f32 %v2423, 1.0
    %v2552 = vadd.f32 %v2424, 1.0
    %v2553 = vadd.f32 %v2425, 1.0
    %v2554 = vadd.f32 %v2426, 1.0
    %v2555 = vadd.f32 %v2427, 1.0
    %v2556 = vadd.f32 %v2428, 1.0
    %v2557 = vadd.f32 %v2429, 1.0
    %v2558 = vadd.f32 %v2430, 1.0
    %v2559 = vadd.f32 %v2431, 1.0
    %v2560 = vadd.f32 %v2432, 1.0
    %v2561 = vadd.f32 %v2433, 1.0
    %v2562 = vadd.f32 %v2434, 1.0
    %v2563 = vadd.f32 %v2435, 1.0
    %v2564 = vadd.f32 %v2436, 1.0
    %v2565 = vadd.f32 %v2437, 1.0
    %v2566 = vadd.f32 %v2438, 1.0
    %v2567 = vadd.f32 %v2439, 1.0
    %v2568 = vadd.f32 %v2440, 1.0
    %v2569 = vadd.f32 %v2441, 1.0
    %v2570 = vadd.f32 %v2442, 1.0
    %v2571 = vadd.f32 %v2443, 1.0
    %v2572 = vadd.f32 %v2444, 1.0
    %v2573 = vadd.f32 %v2445, 1.0
    %v2574 = vadd.f32 %v2446, 1.0
    %v2575 = vadd.f32 %v2447, 1.0
    %v2576 = vadd.f32 %v2448, 1.0
    %v2577 = vadd.f32 %v2449, 1.0
    %v2578 = vadd.f32 %v2450, 1.0
    %v2579 = vadd.f32 %v2451, 1.0
    %v2580 = vadd.f32 %v2452, 1.0
    %v2581 = vadd.f32 %v2453, 1.0
    %v2582 = vadd.f32 %v2454, 1.0
    %v2583 = vadd.f32 %v2455, 1.0
    %v2584 = vadd.f32 %v2456, 1.0
    %v2585 = vadd.f32 %v2457, 1.0
    %v2586 = vadd.f32 %v2458, 1.0
    %v2587 = vadd.f32 %v2459, 1.0
    %v2588 = vadd.f32 %v2460, 1.0
    %v2589 = vadd.f32 %v2461, 1.0
    %v2590 = vadd.f32 %v2462, 1.0
    %v2591 = vadd.f32 %v2463, 1.0
    %v2592 = vadd.f32 %v2464, 1.0
    %v2593 = vadd.f32 %v2465, 1.0
    %v2594 = vadd.f32 %v2466, 1.0
    %v2595 = vadd.f32 %v2467, 1.0
    %v2596 = vadd.f32 %v2468, 1.0
    %v2597 = vmul.f32 %v2085, %v2469
    %v2598 = vmul.f32 %v2086, %v2470
    %v2599 = vmul.f32 %v2087, %v2471
    %v2600 = vmul.f32 %v2088, %v2472
    %v2601 = vmul.f32 %v2089, %v2473
    %v2602 = vmul.f32 %v2090, %v2474
    %v2603 = vmul.f32 %v2091, %v2475
    %v2604 = vmul.f32 %v2092, %v2476
    %v2605 = vmul.f32 %v2093, %v2477
    %v2606 = vmul.f32 %v2094, %v2478
    %v2607 = vmul.f32 %v2095, %v2479
    %v2608 = vmul.f32 %v2096, %v2480
    %v2609 = vmul.f32 %v2097, %v2481
    %v2610 = vmul.f32 %v2098, %v2482
    %v2611 = vmul.f32 %v2099, %v2483
    %v2612 = vmul.f32 %v2100, %v2484
    %v2613 = vmul.f32 %v2101, %v2485
    %v2614 = vmul.f32 %v2102, %v2486
    %v2615 = vmul.f32 %v2103, %v2487
    %v2616 = vmul.f32 %v2104, %v2488
    %v2617 = vmul.f32 %v2105, %v2489
    %v2618 = vmul.f32 %v2106, %v2490
    %v2619 = vmul.f32 %v2107, %v2491
    %v2620 = vmul.f32 %v2108, %v2492
    %v2621 = vmul.f32 %v2109, %v2493
    %v2622 = vmul.f32 %v2110, %v2494
    %v2623 = vmul.f32 %v2111, %v2495
    %v2624 = vmul.f32 %v2112, %v2496
    %v2625 = vmul.f32 %v2113, %v2497
    %v2626 = vmul.f32 %v2114, %v2498
    %v2627 = vmul.f32 %v2115, %v2499
    %v2628 = vmul.f32 %v2116, %v2500
    %v2629 = vmul.f32 %v2117, %v2501
    %v2630 = vmul.f32 %v2118, %v2502
    %v2631 = vmul.f32 %v2119, %v2503
    %v2632 = vmul.f32 %v2120, %v2504
    %v2633 = vmul.f32 %v2121, %v2505
    %v2634 = vmul.f32 %v2122, %v2506
    %v2635 = vmul.f32 %v2123, %v2507
    %v2636 = vmul.f32 %v2124, %v2508
    %v2637 = vmul.f32 %v2125, %v2509
    %v2638 = vmul.f32 %v2126, %v2510
    %v2639 = vmul.f32 %v2127, %v2511
    %v2640 = vmul.f32 %v2128, %v2512
    %v2641 = vmul.f32 %v2129, %v2513
    %v2642 = vmul.f32 %v2130, %v2514
    %v2643 = vmul.f32 %v2131, %v2515
    %v2644 = vmul.f32 %v2132, %v2516
    %v2645 = vmul.f32 %v2133, %v2517
    %v2646 = vmul.f32 %v2134, %v2518
    %v2647 = vmul.f32 %v2135, %v2519
    %v2648 = vmul.f32 %v2136, %v2520
    %v2649 = vmul.f32 %v2137, %v2521
    %v2650 = vmul.f32 %v2138, %v2522
    %v2651 = vmul.f32 %v2139, %v2523
    %v2652 = vmul.f32 %v2140, %v2524
    %v2653 = vmul.f32 %v2141, %v2525
    %v2654 = vmul.f32 %v2142, %v2526
    %v2655 = vmul.f32 %v2143, %v2527
    %v2656 = vmul.f32 %v2144, %v2528
    %v2657 = vmul.f32 %v2145, %v2529
    %v2658 = vmul.f32 %v2146, %v2530
    %v2659 = vmul.f32 %v2147, %v2531
    %v2660 = vmul.f32 %v2148, %v2532
    %v2661 = vmul.f32 %v2149, %v2533
    %v2662 = vmul.f32 %v2150, %v2534
    %v2663 = vmul.f32 %v2151, %v2535
    %v2664 = vmul.f32 %v2152, %v2536
    %v2665 = vmul.f32 %v2153, %v2537
    %v2666 = vmul.f32 %v2154, %v2538
    %v2667 = vmul.f32 %v2155, %v2539
    %v2668 = vmul.f32 %v2156, %v2540
    %v2669 = vmul.f32 %v2157, %v2541
    %v2670 = vmul.f32 %v2158, %v2542
    %v2671 = vmul.f32 %v2159, %v2543
    %v2672 = vmul.f32 %v2160, %v2544
    %v2673 = vmul.f32 %v2161, %v2545
    %v2674 = vmul.f32 %v2162, %v2546
    %v2675 = vmul.f32 %v2163, %v2547
    %v2676 = vmul.f32 %v2164, %v2548
    %v2677 = vmul.f32 %v2165, %v2549
    %v2678 = vmul.f32 %v2166, %v2550
    %v2679 = vmul.f32 %v2167, %v2551
    %v2680 = vmul.f32 %v2168, %v2552
    %v2681 = vmul.f32 %v2169, %v2553
    %v2682 = vmul.f32 %v2170, %v2554
    %v2683 = vmul.f32 %v2171, %v2555
    %v2684 = vmul.f32 %v2172, %v2556
    %v2685 = vmul.f32 %v2173, %v2557
    %v2686 = vmul.f32 %v2174, %v2558
    %v2687 = vmul.f32 %v2175, %v2559
    %v2688 = vmul.f32 %v2176, %v2560
    %v2689 = vmul.f32 %v2177, %v2561
    %v2690 = vmul.f32 %v2178, %v2562
    %v2691 = vmul.f32 %v2179, %v2563
    %v2692 = vmul.f32 %v2180, %v2564
    %v2693 = vmul.f32 %v2181, %v2565
    %v2694 = vmul.f32 %v2182, %v2566
    %v2695 = vmul.f32 %v2183, %v2567
    %v2696 = vmul.f32 %v2184, %v2568
    %v2697 = vmul.f32 %v2185, %v2569
    %v2698 = vmul.f32 %v2186, %v2570
    %v2699 = vmul.f32 %v2187, %v2571
    %v2700 = vmul.f32 %v2188, %v2572
    %v2701 = vmul.f32 %v2189, %v2573
    %v2702 = vmul.f32 %v2190, %v2574
    %v2703 = vmul.f32 %v2191, %v2575
    %v2704 = vmul.f32 %v2192, %v2576
    %v2705 = vmul.f32 %v2193, %v2577
    %v2706 = vmul.f32 %v2194, %v2578
    %v2707 = vmul.f32 %v2195, %v2579
    %v2708 = vmul.f32 %v2196, %v2580
    %v2709 = vmul.f32 %v2197, %v2581
    %v2710 = vmul.f32 %v2198, %v2582
    %v2711 = vmul.f32 %v2199, %v2583
    %v2712 = vmul.f32 %v2200, %v2584
    %v2713 = vmul.f32 %v2201, %v2585
    %v2714 = vmul.f32 %v2202, %v2586
    %v2715 = vmul.f32 %v2203, %v2587
    %v2716 = vmul.f32 %v2204, %v2588
    %v2717 = vmul.f32 %v2205, %v2589
    %v2718 = vmul.f32 %v2206, %v2590
    %v2719 = vmul.f32 %v2207, %v2591
    %v2720 = vmul.f32 %v2208, %v2592
    %v2721 = vmul.f32 %v2209, %v2593
    %v2722 = vmul.f32 %v2210, %v2594
    %v2723 = vmul.f32 %v2211, %v2595
    %v2724 = vmul.f32 %v2212, %v2596
    %v2725 = vld [vmem:[#allocation11] sm:$0xff]
    %v2726 = vld [vmem:[#allocation11 + $0x8] sm:$0xff]
    %v2727 = vld [vmem:[#allocation11 + $0x10] sm:$0xff]
    %v2728 = vld [vmem:[#allocation11 + $0x18] sm:$0xff]
    %v2729 = vld [vmem:[#allocation11 + $0x20] sm:$0xff]
    %v2730 = vld [vmem:[#allocation11 + $0x28] sm:$0xff]
    %v2731 = vld [vmem:[#allocation11 + $0x30] sm:$0xff]
    %v2732 = vld [vmem:[#allocation11 + $0x38] sm:$0xff]
    %v2733 = vld [vmem:[#allocation11 + $0x40] sm:$0xff]
    %v2734 = vld [vmem:[#allocation11 + $0x48] sm:$0xff]
    %v2735 = vld [vmem:[#allocation11 + $0x50] sm:$0xff]
    %v2736 = vld [vmem:[#allocation11 + $0x58] sm:$0xff]
    %v2737 = vld [vmem:[#allocation11 + $0x60] sm:$0xff]
    %v2738 = vld [vmem:[#allocation11 + $0x68] sm:$0xff]
    %v2739 = vld [vmem:[#allocation11 + $0x70] sm:$0xff]
    %v2740 = vld [vmem:[#allocation11 + $0x78] sm:$0xff]
    %v2741 = vld [vmem:[#allocation11 + $0x80] sm:$0xff]
    %v2742 = vld [vmem:[#allocation11 + $0x88] sm:$0xff]
    %v2743 = vld [vmem:[#allocation11 + $0x90] sm:$0xff]
    %v2744 = vld [vmem:[#allocation11 + $0x98] sm:$0xff]
    %v2745 = vld [vmem:[#allocation11 + $0xa0] sm:$0xff]
    %v2746 = vld [vmem:[#allocation11 + $0xa8] sm:$0xff]
    %v2747 = vld [vmem:[#allocation11 + $0xb0] sm:$0xff]
    %v2748 = vld [vmem:[#allocation11 + $0xb8] sm:$0xff]
    %v2749 = vld [vmem:[#allocation11 + $0xc0] sm:$0xff]
    %v2750 = vld [vmem:[#allocation11 + $0xc8] sm:$0xff]
    %v2751 = vld [vmem:[#allocation11 + $0xd0] sm:$0xff]
    %v2752 = vld [vmem:[#allocation11 + $0xd8] sm:$0xff]
    %v2753 = vld [vmem:[#allocation11 + $0xe0] sm:$0xff]
    %v2754 = vld [vmem:[#allocation11 + $0xe8] sm:$0xff]
    %v2755 = vld [vmem:[#allocation11 + $0xf0] sm:$0xff]
    %v2756 = vld [vmem:[#allocation11 + $0xf8] sm:$0xff]
    %v2757 = vld [vmem:[#allocation11 + $0x100] sm:$0xff]
    %v2758 = vld [vmem:[#allocation11 + $0x108] sm:$0xff]
    %v2759 = vld [vmem:[#allocation11 + $0x110] sm:$0xff]
    %v2760 = vld [vmem:[#allocation11 + $0x118] sm:$0xff]
    %v2761 = vld [vmem:[#allocation11 + $0x120] sm:$0xff]
    %v2762 = vld [vmem:[#allocation11 + $0x128] sm:$0xff]
    %v2763 = vld [vmem:[#allocation11 + $0x130] sm:$0xff]
    %v2764 = vld [vmem:[#allocation11 + $0x138] sm:$0xff]
    %v2765 = vld [vmem:[#allocation11 + $0x140] sm:$0xff]
    %v2766 = vld [vmem:[#allocation11 + $0x148] sm:$0xff]
    %v2767 = vld [vmem:[#allocation11 + $0x150] sm:$0xff]
    %v2768 = vld [vmem:[#allocation11 + $0x158] sm:$0xff]
    %v2769 = vld [vmem:[#allocation11 + $0x160] sm:$0xff]
    %v2770 = vld [vmem:[#allocation11 + $0x168] sm:$0xff]
    %v2771 = vld [vmem:[#allocation11 + $0x170] sm:$0xff]
    %v2772 = vld [vmem:[#allocation11 + $0x178] sm:$0xff]
    %v2773 = vld [vmem:[#allocation11 + $0x180] sm:$0xff]
    %v2774 = vld [vmem:[#allocation11 + $0x188] sm:$0xff]
    %v2775 = vld [vmem:[#allocation11 + $0x190] sm:$0xff]
    %v2776 = vld [vmem:[#allocation11 + $0x198] sm:$0xff]
    %v2777 = vld [vmem:[#allocation11 + $0x1a0] sm:$0xff]
    %v2778 = vld [vmem:[#allocation11 + $0x1a8] sm:$0xff]
    %v2779 = vld [vmem:[#allocation11 + $0x1b0] sm:$0xff]
    %v2780 = vld [vmem:[#allocation11 + $0x1b8] sm:$0xff]
    %v2781 = vld [vmem:[#allocation11 + $0x1c0] sm:$0xff]
    %v2782 = vld [vmem:[#allocation11 + $0x1c8] sm:$0xff]
    %v2783 = vld [vmem:[#allocation11 + $0x1d0] sm:$0xff]
    %v2784 = vld [vmem:[#allocation11 + $0x1d8] sm:$0xff]
    %v2785 = vld [vmem:[#allocation11 + $0x1e0] sm:$0xff]
    %v2786 = vld [vmem:[#allocation11 + $0x1e8] sm:$0xff]
    %v2787 = vld [vmem:[#allocation11 + $0x1f0] sm:$0xff]
    %v2788 = vld [vmem:[#allocation11 + $0x1f8] sm:$0xff]
    %v2789 = vpack.c.bf16 %v2601, %v2597
    %v2790 = vpack.c.bf16 %v2602, %v2598
    %v2791 = vpack.c.bf16 %v2603, %v2599
    %v2792 = vpack.c.bf16 %v2604, %v2600
    %v2793 = vpack.c.bf16 %v2609, %v2605
    %v2794 = vpack.c.bf16 %v2610, %v2606
    %v2795 = vpack.c.bf16 %v2611, %v2607
    %v2796 = vpack.c.bf16 %v2612, %v2608
    %v2797 = vpack.c.bf16 %v2617, %v2613
    %v2798 = vpack.c.bf16 %v2618, %v2614
    %v2799 = vpack.c.bf16 %v2619, %v2615
    %v2800 = vpack.c.bf16 %v2620, %v2616
    %v2801 = vpack.c.bf16 %v2625, %v2621
    %v2802 = vpack.c.bf16 %v2626, %v2622
    %v2803 = vpack.c.bf16 %v2627, %v2623
    %v2804 = vpack.c.bf16 %v2628, %v2624
    %v2805 = vpack.c.bf16 %v2633, %v2629
    %v2806 = vpack.c.bf16 %v2634, %v2630
    %v2807 = vpack.c.bf16 %v2635, %v2631
    %v2808 = vpack.c.bf16 %v2636, %v2632
    %v2809 = vpack.c.bf16 %v2641, %v2637
    %v2810 = vpack.c.bf16 %v2642, %v2638
    %v2811 = vpack.c.bf16 %v2643, %v2639
    %v2812 = vpack.c.bf16 %v2644, %v2640
    %v2813 = vpack.c.bf16 %v2649, %v2645
    %v2814 = vpack.c.bf16 %v2650, %v2646
    %v2815 = vpack.c.bf16 %v2651, %v2647
    %v2816 = vpack.c.bf16 %v2652, %v2648
    %v2817 = vpack.c.bf16 %v2657, %v2653
    %v2818 = vpack.c.bf16 %v2658, %v2654
    %v2819 = vpack.c.bf16 %v2659, %v2655
    %v2820 = vpack.c.bf16 %v2660, %v2656
    %v2821 = vpack.c.bf16 %v2665, %v2661
    %v2822 = vpack.c.bf16 %v2666, %v2662
    %v2823 = vpack.c.bf16 %v2667, %v2663
    %v2824 = vpack.c.bf16 %v2668, %v2664
    %v2825 = vpack.c.bf16 %v2673, %v2669
    %v2826 = vpack.c.bf16 %v2674, %v2670
    %v2827 = vpack.c.bf16 %v2675, %v2671
    %v2828 = vpack.c.bf16 %v2676, %v2672
    %v2829 = vpack.c.bf16 %v2681, %v2677
    %v2830 = vpack.c.bf16 %v2682, %v2678
    %v2831 = vpack.c.bf16 %v2683, %v2679
    %v2832 = vpack.c.bf16 %v2684, %v2680
    %v2833 = vpack.c.bf16 %v2689, %v2685
    %v2834 = vpack.c.bf16 %v2690, %v2686
    %v2835 = vpack.c.bf16 %v2691, %v2687
    %v2836 = vpack.c.bf16 %v2692, %v2688
    %v2837 = vpack.c.bf16 %v2697, %v2693
    %v2838 = vpack.c.bf16 %v2698, %v2694
    %v2839 = vpack.c.bf16 %v2699, %v2695
    %v2840 = vpack.c.bf16 %v2700, %v2696
    %v2841 = vpack.c.bf16 %v2705, %v2701
    %v2842 = vpack.c.bf16 %v2706, %v2702
    %v2843 = vpack.c.bf16 %v2707, %v2703
    %v2844 = vpack.c.bf16 %v2708, %v2704
    %v2845 = vpack.c.bf16 %v2713, %v2709
    %v2846 = vpack.c.bf16 %v2714, %v2710
    %v2847 = vpack.c.bf16 %v2715, %v2711
    %v2848 = vpack.c.bf16 %v2716, %v2712
    %v2849 = vpack.c.bf16 %v2721, %v2717
    %v2850 = vpack.c.bf16 %v2722, %v2718
    %v2851 = vpack.c.bf16 %v2723, %v2719
    %v2852 = vpack.c.bf16 %v2724, %v2720
    %v2853 = vld [vmem:[#allocation9] sm:$0xff]
    %v2854 = vld [vmem:[#allocation9 + $0x8] sm:$0xff]
    %v2855 = vld [vmem:[#allocation9 + $0x10] sm:$0xff]
    %v2856 = vld [vmem:[#allocation9 + $0x18] sm:$0xff]
    %v2857 = vld [vmem:[#allocation9 + $0x20] sm:$0xff]
    %v2858 = vld [vmem:[#allocation9 + $0x28] sm:$0xff]
    %v2859 = vld [vmem:[#allocation9 + $0x30] sm:$0xff]
    %v2860 = vld [vmem:[#allocation9 + $0x38] sm:$0xff]
    %v2861 = vld [vmem:[#allocation9 + $0x40] sm:$0xff]
    %v2862 = vld [vmem:[#allocation9 + $0x48] sm:$0xff]
    %v2863 = vld [vmem:[#allocation9 + $0x50] sm:$0xff]
    %v2864 = vld [vmem:[#allocation9 + $0x58] sm:$0xff]
    %v2865 = vld [vmem:[#allocation9 + $0x60] sm:$0xff]
    %v2866 = vld [vmem:[#allocation9 + $0x68] sm:$0xff]
    %v2867 = vld [vmem:[#allocation9 + $0x70] sm:$0xff]
    %v2868 = vld [vmem:[#allocation9 + $0x78] sm:$0xff]
    %v2869 = vld [vmem:[#allocation9 + $0x80] sm:$0xff]
    %v2870 = vld [vmem:[#allocation9 + $0x88] sm:$0xff]
    %v2871 = vld [vmem:[#allocation9 + $0x90] sm:$0xff]
    %v2872 = vld [vmem:[#allocation9 + $0x98] sm:$0xff]
    %v2873 = vld [vmem:[#allocation9 + $0xa0] sm:$0xff]
    %v2874 = vld [vmem:[#allocation9 + $0xa8] sm:$0xff]
    %v2875 = vld [vmem:[#allocation9 + $0xb0] sm:$0xff]
    %v2876 = vld [vmem:[#allocation9 + $0xb8] sm:$0xff]
    %v2877 = vld [vmem:[#allocation9 + $0xc0] sm:$0xff]
    %v2878 = vld [vmem:[#allocation9 + $0xc8] sm:$0xff]
    %v2879 = vld [vmem:[#allocation9 + $0xd0] sm:$0xff]
    %v2880 = vld [vmem:[#allocation9 + $0xd8] sm:$0xff]
    %v2881 = vld [vmem:[#allocation9 + $0xe0] sm:$0xff]
    %v2882 = vld [vmem:[#allocation9 + $0xe8] sm:$0xff]
    %v2883 = vld [vmem:[#allocation9 + $0xf0] sm:$0xff]
    %v2884 = vld [vmem:[#allocation9 + $0xf8] sm:$0xff]
    %v2885 = vld [vmem:[#allocation9 + $0x100] sm:$0xff]
    %v2886 = vld [vmem:[#allocation9 + $0x108] sm:$0xff]
    %v2887 = vld [vmem:[#allocation9 + $0x110] sm:$0xff]
    %v2888 = vld [vmem:[#allocation9 + $0x118] sm:$0xff]
    %v2889 = vld [vmem:[#allocation9 + $0x120] sm:$0xff]
    %v2890 = vld [vmem:[#allocation9 + $0x128] sm:$0xff]
    %v2891 = vld [vmem:[#allocation9 + $0x130] sm:$0xff]
    %v2892 = vld [vmem:[#allocation9 + $0x138] sm:$0xff]
    %v2893 = vld [vmem:[#allocation9 + $0x140] sm:$0xff]
    %v2894 = vld [vmem:[#allocation9 + $0x148] sm:$0xff]
    %v2895 = vld [vmem:[#allocation9 + $0x150] sm:$0xff]
    %v2896 = vld [vmem:[#allocation9 + $0x158] sm:$0xff]
    %v2897 = vld [vmem:[#allocation9 + $0x160] sm:$0xff]
    %v2898 = vld [vmem:[#allocation9 + $0x168] sm:$0xff]
    %v2899 = vld [vmem:[#allocation9 + $0x170] sm:$0xff]
    %v2900 = vld [vmem:[#allocation9 + $0x178] sm:$0xff]
    %v2901 = vld [vmem:[#allocation9 + $0x180] sm:$0xff]
    %v2902 = vld [vmem:[#allocation9 + $0x188] sm:$0xff]
    %v2903 = vld [vmem:[#allocation9 + $0x190] sm:$0xff]
    %v2904 = vld [vmem:[#allocation9 + $0x198] sm:$0xff]
    %v2905 = vld [vmem:[#allocation9 + $0x1a0] sm:$0xff]
    %v2906 = vld [vmem:[#allocation9 + $0x1a8] sm:$0xff]
    %v2907 = vld [vmem:[#allocation9 + $0x1b0] sm:$0xff]
    %v2908 = vld [vmem:[#allocation9 + $0x1b8] sm:$0xff]
    %v2909 = vld [vmem:[#allocation9 + $0x1c0] sm:$0xff]
    %v2910 = vld [vmem:[#allocation9 + $0x1c8] sm:$0xff]
    %v2911 = vld [vmem:[#allocation9 + $0x1d0] sm:$0xff]
    %v2912 = vld [vmem:[#allocation9 + $0x1d8] sm:$0xff]
    %v2913 = vld [vmem:[#allocation9 + $0x1e0] sm:$0xff]
    %v2914 = vld [vmem:[#allocation9 + $0x1e8] sm:$0xff]
    %v2915 = vld [vmem:[#allocation9 + $0x1f0] sm:$0xff]
    %v2916 = vld [vmem:[#allocation9 + $0x1f8] sm:$0xff]
    %v2981 = vunpack.c.l.b16 %v2853
    %v2982 = vunpack.c.h.b16 %v2853
    %v2983 = vunpack.c.l.b16 %v2854
    %v2984 = vunpack.c.h.b16 %v2854
    %v2985 = vunpack.c.l.b16 %v2855
    %v2986 = vunpack.c.h.b16 %v2855
    %v2987 = vunpack.c.l.b16 %v2856
    %v2988 = vunpack.c.h.b16 %v2856
    %v2989 = vunpack.c.l.b16 %v2857
    %v2990 = vunpack.c.h.b16 %v2857
    %v2991 = vunpack.c.l.b16 %v2858
    %v2992 = vunpack.c.h.b16 %v2858
    %v2993 = vunpack.c.l.b16 %v2859
    %v2994 = vunpack.c.h.b16 %v2859
    %v2995 = vunpack.c.l.b16 %v2860
    %v2996 = vunpack.c.h.b16 %v2860
    %v2997 = vunpack.c.l.b16 %v2861
    %v2998 = vunpack.c.h.b16 %v2861
    %v2999 = vunpack.c.l.b16 %v2862
    %v3000 = vunpack.c.h.b16 %v2862
    %v3001 = vunpack.c.l.b16 %v2863
    %v3002 = vunpack.c.h.b16 %v2863
    %v3003 = vunpack.c.l.b16 %v2864
    %v3004 = vunpack.c.h.b16 %v2864
    %v3005 = vunpack.c.l.b16 %v2865
    %v3006 = vunpack.c.h.b16 %v2865
    %v3007 = vunpack.c.l.b16 %v2866
    %v3008 = vunpack.c.h.b16 %v2866
    %v3009 = vunpack.c.l.b16 %v2867
    %v3010 = vunpack.c.h.b16 %v2867
    %v3011 = vunpack.c.l.b16 %v2868
    %v3012 = vunpack.c.h.b16 %v2868
    %v3013 = vunpack.c.l.b16 %v2869
    %v3014 = vunpack.c.h.b16 %v2869
    %v3015 = vunpack.c.l.b16 %v2870
    %v3016 = vunpack.c.h.b16 %v2870
    %v3017 = vunpack.c.l.b16 %v2871
    %v3018 = vunpack.c.h.b16 %v2871
    %v3019 = vunpack.c.l.b16 %v2872
    %v3020 = vunpack.c.h.b16 %v2872
    %v3021 = vunpack.c.l.b16 %v2873
    %v3022 = vunpack.c.h.b16 %v2873
    %v3023 = vunpack.c.l.b16 %v2874
    %v3024 = vunpack.c.h.b16 %v2874
    %v3025 = vunpack.c.l.b16 %v2875
    %v3026 = vunpack.c.h.b16 %v2875
    %v3027 = vunpack.c.l.b16 %v2876
    %v3028 = vunpack.c.h.b16 %v2876
    %v3029 = vunpack.c.l.b16 %v2877
    %v3030 = vunpack.c.h.b16 %v2877
    %v3031 = vunpack.c.l.b16 %v2878
    %v3032 = vunpack.c.h.b16 %v2878
    %v3033 = vunpack.c.l.b16 %v2879
    %v3034 = vunpack.c.h.b16 %v2879
    %v3035 = vunpack.c.l.b16 %v2880
    %v3036 = vunpack.c.h.b16 %v2880
    %v3037 = vunpack.c.l.b16 %v2881
    %v3038 = vunpack.c.h.b16 %v2881
    %v3039 = vunpack.c.l.b16 %v2882
    %v3040 = vunpack.c.h.b16 %v2882
    %v3041 = vunpack.c.l.b16 %v2883
    %v3042 = vunpack.c.h.b16 %v2883
    %v3043 = vunpack.c.l.b16 %v2884
    %v3044 = vunpack.c.h.b16 %v2884
    %v3045 = vunpack.c.l.b16 %v2885
    %v3046 = vunpack.c.h.b16 %v2885
    %v3047 = vunpack.c.l.b16 %v2886
    %v3048 = vunpack.c.h.b16 %v2886
    %v3049 = vunpack.c.l.b16 %v2887
    %v3050 = vunpack.c.h.b16 %v2887
    %v3051 = vunpack.c.l.b16 %v2888
    %v3052 = vunpack.c.h.b16 %v2888
    %v3053 = vunpack.c.l.b16 %v2889
    %v3054 = vunpack.c.h.b16 %v2889
    %v3055 = vunpack.c.l.b16 %v2890
    %v3056 = vunpack.c.h.b16 %v2890
    %v3057 = vunpack.c.l.b16 %v2891
    %v3058 = vunpack.c.h.b16 %v2891
    %v3059 = vunpack.c.l.b16 %v2892
    %v3060 = vunpack.c.h.b16 %v2892
    %v3061 = vunpack.c.l.b16 %v2893
    %v3062 = vunpack.c.h.b16 %v2893
    %v3063 = vunpack.c.l.b16 %v2894
    %v3064 = vunpack.c.h.b16 %v2894
    %v3065 = vunpack.c.l.b16 %v2895
    %v3066 = vunpack.c.h.b16 %v2895
    %v3067 = vunpack.c.l.b16 %v2896
    %v3068 = vunpack.c.h.b16 %v2896
    %v3069 = vunpack.c.l.b16 %v2897
    %v3070 = vunpack.c.h.b16 %v2897
    %v3071 = vunpack.c.l.b16 %v2898
    %v3072 = vunpack.c.h.b16 %v2898
    %v3073 = vunpack.c.l.b16 %v2899
    %v3074 = vunpack.c.h.b16 %v2899
    %v3075 = vunpack.c.l.b16 %v2900
    %v3076 = vunpack.c.h.b16 %v2900
    %v3077 = vunpack.c.l.b16 %v2901
    %v3078 = vunpack.c.h.b16 %v2901
    %v3079 = vunpack.c.l.b16 %v2902
    %v3080 = vunpack.c.h.b16 %v2902
    %v3081 = vunpack.c.l.b16 %v2903
    %v3082 = vunpack.c.h.b16 %v2903
    %v3083 = vunpack.c.l.b16 %v2904
    %v3084 = vunpack.c.h.b16 %v2904
    %v3085 = vunpack.c.l.b16 %v2905
    %v3086 = vunpack.c.h.b16 %v2905
    %v3087 = vunpack.c.l.b16 %v2906
    %v3088 = vunpack.c.h.b16 %v2906
    %v3089 = vunpack.c.l.b16 %v2907
    %v3090 = vunpack.c.h.b16 %v2907
    %v3091 = vunpack.c.l.b16 %v2908
    %v3092 = vunpack.c.h.b16 %v2908
    %v3093 = vunpack.c.l.b16 %v2909
    %v3094 = vunpack.c.h.b16 %v2909
    %v3095 = vunpack.c.l.b16 %v2910
    %v3096 = vunpack.c.h.b16 %v2910
    %v3097 = vunpack.c.l.b16 %v2911
    %v3098 = vunpack.c.h.b16 %v2911
    %v3099 = vunpack.c.l.b16 %v2912
    %v3100 = vunpack.c.h.b16 %v2912
    %v3101 = vunpack.c.l.b16 %v2913
    %v3102 = vunpack.c.h.b16 %v2913
    %v3103 = vunpack.c.l.b16 %v2914
    %v3104 = vunpack.c.h.b16 %v2914
    %v3105 = vunpack.c.l.b16 %v2915
    %v3106 = vunpack.c.h.b16 %v2915
    %v3107 = vunpack.c.l.b16 %v2916
    %v3108 = vunpack.c.h.b16 %v2916
    %v3109 = vpack.c.b16 %v2983, %v2981
    %v3110 = vpack.c.b16 %v2984, %v2982
    %v3111 = vpack.c.b16 %v2987, %v2985
    %v3112 = vpack.c.b16 %v2988, %v2986
    %v3113 = vpack.c.b16 %v2991, %v2989
    %v3114 = vpack.c.b16 %v2992, %v2990
    %v3115 = vpack.c.b16 %v2995, %v2993
    %v3116 = vpack.c.b16 %v2996, %v2994
    %v3117 = vpack.c.b16 %v2999, %v2997
    %v3118 = vpack.c.b16 %v3000, %v2998
    %v3119 = vpack.c.b16 %v3003, %v3001
    %v3120 = vpack.c.b16 %v3004, %v3002
    %v3121 = vpack.c.b16 %v3007, %v3005
    %v3122 = vpack.c.b16 %v3008, %v3006
    %v3123 = vpack.c.b16 %v3011, %v3009
    %v3124 = vpack.c.b16 %v3012, %v3010
    %v3125 = vpack.c.b16 %v3015, %v3013
    %v3126 = vpack.c.b16 %v3016, %v3014
    %v3127 = vpack.c.b16 %v3019, %v3017
    %v3128 = vpack.c.b16 %v3020, %v3018
    %v3129 = vpack.c.b16 %v3023, %v3021
    %v3130 = vpack.c.b16 %v3024, %v3022
    %v3131 = vpack.c.b16 %v3027, %v3025
    %v3132 = vpack.c.b16 %v3028, %v3026
    %v3133 = vpack.c.b16 %v3031, %v3029
    %v3134 = vpack.c.b16 %v3032, %v3030
    %v3135 = vpack.c.b16 %v3035, %v3033
    %v3136 = vpack.c.b16 %v3036, %v3034
    %v3137 = vpack.c.b16 %v3039, %v3037
    %v3138 = vpack.c.b16 %v3040, %v3038
    %v3139 = vpack.c.b16 %v3043, %v3041
    %v3140 = vpack.c.b16 %v3044, %v3042
    %v3141 = vpack.c.b16 %v3047, %v3045
    %v3142 = vpack.c.b16 %v3048, %v3046
    %v3143 = vpack.c.b16 %v3051, %v3049
    %v3144 = vpack.c.b16 %v3052, %v3050
    %v3145 = vpack.c.b16 %v3055, %v3053
    %v3146 = vpack.c.b16 %v3056, %v3054
    %v3147 = vpack.c.b16 %v3059, %v3057
    %v3148 = vpack.c.b16 %v3060, %v3058
    %v3149 = vpack.c.b16 %v3063, %v3061
    %v3150 = vpack.c.b16 %v3064, %v3062
    %v3151 = vpack.c.b16 %v3067, %v3065
    %v3152 = vpack.c.b16 %v3068, %v3066
    %v3153 = vpack.c.b16 %v3071, %v3069
    %v3154 = vpack.c.b16 %v3072, %v3070
    %v3155 = vpack.c.b16 %v3075, %v3073
    %v3156 = vpack.c.b16 %v3076, %v3074
    %v3157 = vpack.c.b16 %v3079, %v3077
    %v3158 = vpack.c.b16 %v3080, %v3078
    %v3159 = vpack.c.b16 %v3083, %v3081
    %v3160 = vpack.c.b16 %v3084, %v3082
    %v3161 = vpack.c.b16 %v3087, %v3085
    %v3162 = vpack.c.b16 %v3088, %v3086
    %v3163 = vpack.c.b16 %v3091, %v3089
    %v3164 = vpack.c.b16 %v3092, %v3090
    %v3165 = vpack.c.b16 %v3095, %v3093
    %v3166 = vpack.c.b16 %v3096, %v3094
    %v3167 = vpack.c.b16 %v3099, %v3097
    %v3168 = vpack.c.b16 %v3100, %v3098
    %v3169 = vpack.c.b16 %v3103, %v3101
    %v3170 = vpack.c.b16 %v3104, %v3102
    %v3171 = vpack.c.b16 %v3107, %v3105
    %v3172 = vpack.c.b16 %v3108, %v3106
    %3237 = vmatprep.subr.bf16.mxu0 %v3124
    %3238 = vmatpush1.bf16.msra.mxu0 %v3123
    %3239 = vmatprep.subr.bf16.mxu0 %v3122
    %3240 = vmatpush1.bf16.msra.mxu0 %v3121
    %3241 = vmatprep.subr.bf16.mxu0 %v3120
    %3242 = vmatpush1.bf16.msra.mxu0 %v3119
    %3243 = vmatprep.subr.bf16.mxu0 %v3118
    %3244 = vmatpush1.bf16.msra.mxu0 %v3117
    %3245 = vmatprep.subr.bf16.mxu0 %v3116
    %3246 = vmatpush1.bf16.msra.mxu0 %v3115
    %3247 = vmatprep.subr.bf16.mxu0 %v3114
    %3248 = vmatpush1.bf16.msra.mxu0 %v3113
    %3249 = vmatprep.subr.bf16.mxu0 %v3112
    %3250 = vmatpush1.bf16.msra.mxu0 %v3111
    %3251 = vmatprep.subr.bf16.mxu0 %v3110
    %3252 = vmatpush1.bf16.msra.mxu0 %v3109
    %3253 = vmatprep.subr.bf16.mxu0 %v3140
    %3254 = vmatpush2.bf16.msra.mxu0 %v3139
    %3255 = vmatprep.subr.bf16.mxu0 %v3138
    %3256 = vmatpush2.bf16.msra.mxu0 %v3137
    %3257 = vmatprep.subr.bf16.mxu0 %v3136
    %3258 = vmatpush2.bf16.msra.mxu0 %v3135
    %3259 = vmatprep.subr.bf16.mxu0 %v3134
    %3260 = vmatpush2.bf16.msra.mxu0 %v3133
    %3261 = vmatprep.subr.bf16.mxu0 %v3132
    %3262 = vmatpush2.bf16.msra.mxu0 %v3131
    %3263 = vmatprep.subr.bf16.mxu0 %v3130
    %3264 = vmatpush2.bf16.msra.mxu0 %v3129
    %3265 = vmatprep.subr.bf16.mxu0 %v3128
    %3266 = vmatpush2.bf16.msra.mxu0 %v3127
    %3267 = vmatprep.subr.bf16.mxu0 %v3126
    %3268 = vmatpush2.bf16.msra.mxu0 %v3125
    %3269 = vmatprep.mubr.bf16.mxu0 %v2790
    %3270 = vmatmul.mubr.bf16.gmra.mxu0 %v2789
    %v3271 = vpop.f32.mrf.mxu0
    %v3272 = vadd.f32 0.0, %v3271
    %v3273 = vpop.f32.mrf.mxu0
    %v3274 = vadd.f32 0.0, %v3273
    %v3275 = vpop.f32.mrf.mxu0
    %v3276 = vadd.f32 0.0, %v3275
    %v3277 = vpop.f32.mrf.mxu0
    %v3278 = vadd.f32 0.0, %v3277
    %3279 = vmatprep.mubr.bf16.mxu0 %v2794
    %3280 = vmatmul.mubr.bf16.gmra.mxu0 %v2793
    %v3281 = vpop.f32.mrf.mxu0
    %v3282 = vadd.f32 0.0, %v3281
    %v3283 = vpop.f32.mrf.mxu0
    %v3284 = vadd.f32 0.0, %v3283
    %v3285 = vpop.f32.mrf.mxu0
    %v3286 = vadd.f32 0.0, %v3285
    %v3287 = vpop.f32.mrf.mxu0
    %v3288 = vadd.f32 0.0, %v3287
    %3289 = vmatprep.mubr.bf16.mxu0 %v2798
    %3290 = vmatmul.mubr.bf16.gmra.mxu0 %v2797
    %v3291 = vpop.f32.mrf.mxu0
    %v3292 = vadd.f32 0.0, %v3291
    %v3293 = vpop.f32.mrf.mxu0
    %v3294 = vadd.f32 0.0, %v3293
    %v3295 = vpop.f32.mrf.mxu0
    %v3296 = vadd.f32 0.0, %v3295
    %v3297 = vpop.f32.mrf.mxu0
    %v3298 = vadd.f32 0.0, %v3297
    %3299 = vmatprep.mubr.bf16.mxu0 %v2802
    %3300 = vmatmul.mubr.bf16.gmra.mxu0 %v2801
    %v3301 = vpop.f32.mrf.mxu0
    %v3302 = vadd.f32 0.0, %v3301
    %v3303 = vpop.f32.mrf.mxu0
    %v3304 = vadd.f32 0.0, %v3303
    %v3305 = vpop.f32.mrf.mxu0
    %v3306 = vadd.f32 0.0, %v3305
    %v3307 = vpop.f32.mrf.mxu0
    %v3308 = vadd.f32 0.0, %v3307
    %3309 = vmatprep.mubr.bf16.mxu0 %v2806
    %3310 = vmatmul.mubr.bf16.gmra.mxu0 %v2805
    %v3311 = vpop.f32.mrf.mxu0
    %v3312 = vadd.f32 0.0, %v3311
    %v3313 = vpop.f32.mrf.mxu0
    %v3314 = vadd.f32 0.0, %v3313
    %v3315 = vpop.f32.mrf.mxu0
    %v3316 = vadd.f32 0.0, %v3315
    %v3317 = vpop.f32.mrf.mxu0
    %v3318 = vadd.f32 0.0, %v3317
    %3319 = vmatprep.mubr.bf16.mxu0 %v2810
    %3320 = vmatmul.mubr.bf16.gmra.mxu0 %v2809
    %v3321 = vpop.f32.mrf.mxu0
    %v3322 = vadd.f32 0.0, %v3321
    %v3323 = vpop.f32.mrf.mxu0
    %v3324 = vadd.f32 0.0, %v3323
    %v3325 = vpop.f32.mrf.mxu0
    %v3326 = vadd.f32 0.0, %v3325
    %v3327 = vpop.f32.mrf.mxu0
    %v3328 = vadd.f32 0.0, %v3327
    %3329 = vmatprep.mubr.bf16.mxu0 %v2814
    %3330 = vmatmul.mubr.bf16.gmra.mxu0 %v2813
    %v3331 = vpop.f32.mrf.mxu0
    %v3332 = vadd.f32 0.0, %v3331
    %v3333 = vpop.f32.mrf.mxu0
    %v3334 = vadd.f32 0.0, %v3333
    %v3335 = vpop.f32.mrf.mxu0
    %v3336 = vadd.f32 0.0, %v3335
    %v3337 = vpop.f32.mrf.mxu0
    %v3338 = vadd.f32 0.0, %v3337
    %3339 = vmatprep.mubr.bf16.mxu0 %v2818
    %3340 = vmatmul.mubr.bf16.gmra.mxu0 %v2817
    %v3341 = vpop.f32.mrf.mxu0
    %v3342 = vadd.f32 0.0, %v3341
    %v3343 = vpop.f32.mrf.mxu0
    %v3344 = vadd.f32 0.0, %v3343
    %v3345 = vpop.f32.mrf.mxu0
    %v3346 = vadd.f32 0.0, %v3345
    %v3347 = vpop.f32.mrf.mxu0
    %v3348 = vadd.f32 0.0, %v3347
    %3349 = vmatprep.mubr.bf16.mxu0 %v2822
    %3350 = vmatmul.mubr.bf16.gmra.mxu0 %v2821
    %v3351 = vpop.f32.mrf.mxu0
    %v3352 = vadd.f32 0.0, %v3351
    %v3353 = vpop.f32.mrf.mxu0
    %v3354 = vadd.f32 0.0, %v3353
    %v3355 = vpop.f32.mrf.mxu0
    %v3356 = vadd.f32 0.0, %v3355
    %v3357 = vpop.f32.mrf.mxu0
    %v3358 = vadd.f32 0.0, %v3357
    %3359 = vmatprep.mubr.bf16.mxu0 %v2826
    %3360 = vmatmul.mubr.bf16.gmra.mxu0 %v2825
    %v3361 = vpop.f32.mrf.mxu0
    %v3362 = vadd.f32 0.0, %v3361
    %v3363 = vpop.f32.mrf.mxu0
    %v3364 = vadd.f32 0.0, %v3363
    %v3365 = vpop.f32.mrf.mxu0
    %v3366 = vadd.f32 0.0, %v3365
    %v3367 = vpop.f32.mrf.mxu0
    %v3368 = vadd.f32 0.0, %v3367
    %3369 = vmatprep.mubr.bf16.mxu0 %v2830
    %3370 = vmatmul.mubr.bf16.gmra.mxu0 %v2829
    %v3371 = vpop.f32.mrf.mxu0
    %v3372 = vadd.f32 0.0, %v3371
    %v3373 = vpop.f32.mrf.mxu0
    %v3374 = vadd.f32 0.0, %v3373
    %v3375 = vpop.f32.mrf.mxu0
    %v3376 = vadd.f32 0.0, %v3375
    %v3377 = vpop.f32.mrf.mxu0
    %v3378 = vadd.f32 0.0, %v3377
    %3379 = vmatprep.mubr.bf16.mxu0 %v2834
    %3380 = vmatmul.mubr.bf16.gmra.mxu0 %v2833
    %v3381 = vpop.f32.mrf.mxu0
    %v3382 = vadd.f32 0.0, %v3381
    %v3383 = vpop.f32.mrf.mxu0
    %v3384 = vadd.f32 0.0, %v3383
    %v3385 = vpop.f32.mrf.mxu0
    %v3386 = vadd.f32 0.0, %v3385
    %v3387 = vpop.f32.mrf.mxu0
    %v3388 = vadd.f32 0.0, %v3387
    %3389 = vmatprep.mubr.bf16.mxu0 %v2838
    %3390 = vmatmul.mubr.bf16.gmra.mxu0 %v2837
    %v3391 = vpop.f32.mrf.mxu0
    %v3392 = vadd.f32 0.0, %v3391
    %v3393 = vpop.f32.mrf.mxu0
    %v3394 = vadd.f32 0.0, %v3393
    %v3395 = vpop.f32.mrf.mxu0
    %v3396 = vadd.f32 0.0, %v3395
    %v3397 = vpop.f32.mrf.mxu0
    %v3398 = vadd.f32 0.0, %v3397
    %3399 = vmatprep.mubr.bf16.mxu0 %v2842
    %3400 = vmatmul.mubr.bf16.gmra.mxu0 %v2841
    %v3401 = vpop.f32.mrf.mxu0
    %v3402 = vadd.f32 0.0, %v3401
    %v3403 = vpop.f32.mrf.mxu0
    %v3404 = vadd.f32 0.0, %v3403
    %v3405 = vpop.f32.mrf.mxu0
    %v3406 = vadd.f32 0.0, %v3405
    %v3407 = vpop.f32.mrf.mxu0
    %v3408 = vadd.f32 0.0, %v3407
    %3409 = vmatprep.mubr.bf16.mxu0 %v2846
    %3410 = vmatmul.mubr.bf16.gmra.mxu0 %v2845
    %v3411 = vpop.f32.mrf.mxu0
    %v3412 = vadd.f32 0.0, %v3411
    %v3413 = vpop.f32.mrf.mxu0
    %v3414 = vadd.f32 0.0, %v3413
    %v3415 = vpop.f32.mrf.mxu0
    %v3416 = vadd.f32 0.0, %v3415
    %v3417 = vpop.f32.mrf.mxu0
    %v3418 = vadd.f32 0.0, %v3417
    %3419 = vmatprep.mubr.bf16.mxu0 %v2850
    %3420 = vmatmul.mubr.bf16.gmra.mxu0 %v2849
    %v3421 = vpop.f32.mrf.mxu0
    %v3422 = vadd.f32 0.0, %v3421
    %v3423 = vpop.f32.mrf.mxu0
    %v3424 = vadd.f32 0.0, %v3423
    %v3425 = vpop.f32.mrf.mxu0
    %v3426 = vadd.f32 0.0, %v3425
    %v3427 = vpop.f32.mrf.mxu0
    %v3428 = vadd.f32 0.0, %v3427
    %3429 = vdwg.mxu0
    %3430 = vmatprep.subr.bf16.mxu0 %v3156
    %3431 = vmatpush1.bf16.msra.mxu0 %v3155
    %3432 = vmatprep.subr.bf16.mxu0 %v3154
    %3433 = vmatpush1.bf16.msra.mxu0 %v3153
    %3434 = vmatprep.subr.bf16.mxu0 %v3152
    %3435 = vmatpush1.bf16.msra.mxu0 %v3151
    %3436 = vmatprep.subr.bf16.mxu0 %v3150
    %3437 = vmatpush1.bf16.msra.mxu0 %v3149
    %3438 = vmatprep.subr.bf16.mxu0 %v3148
    %3439 = vmatpush1.bf16.msra.mxu0 %v3147
    %3440 = vmatprep.subr.bf16.mxu0 %v3146
    %3441 = vmatpush1.bf16.msra.mxu0 %v3145
    %3442 = vmatprep.subr.bf16.mxu0 %v3144
    %3443 = vmatpush1.bf16.msra.mxu0 %v3143
    %3444 = vmatprep.subr.bf16.mxu0 %v3142
    %3445 = vmatpush1.bf16.msra.mxu0 %v3141
    %3446 = vmatprep.subr.bf16.mxu0 %v3172
    %3447 = vmatpush2.bf16.msra.mxu0 %v3171
    %3448 = vmatprep.subr.bf16.mxu0 %v3170
    %3449 = vmatpush2.bf16.msra.mxu0 %v3169
    %3450 = vmatprep.subr.bf16.mxu0 %v3168
    %3451 = vmatpush2.bf16.msra.mxu0 %v3167
    %3452 = vmatprep.subr.bf16.mxu0 %v3166
    %3453 = vmatpush2.bf16.msra.mxu0 %v3165
    %3454 = vmatprep.subr.bf16.mxu0 %v3164
    %3455 = vmatpush2.bf16.msra.mxu0 %v3163
    %3456 = vmatprep.subr.bf16.mxu0 %v3162
    %3457 = vmatpush2.bf16.msra.mxu0 %v3161
    %3458 = vmatprep.subr.bf16.mxu0 %v3160
    %3459 = vmatpush2.bf16.msra.mxu0 %v3159
    %3460 = vmatprep.subr.bf16.mxu0 %v3158
    %3461 = vmatpush2.bf16.msra.mxu0 %v3157
    %3462 = vmatprep.mubr.bf16.mxu0 %v2792
    %3463 = vmatmul.mubr.bf16.gmra.mxu0 %v2791
    %v3464 = vpop.f32.mrf.mxu0
    %v3465 = vadd.f32 %v3272, %v3464
    %v3466 = vpop.f32.mrf.mxu0
    %v3467 = vadd.f32 %v3274, %v3466
    %v3468 = vpop.f32.mrf.mxu0
    %v3469 = vadd.f32 %v3276, %v3468
    %v3470 = vpop.f32.mrf.mxu0
    %v3471 = vadd.f32 %v3278, %v3470
    %3472 = vmatprep.mubr.bf16.mxu0 %v2796
    %3473 = vmatmul.mubr.bf16.gmra.mxu0 %v2795
    %v3474 = vpop.f32.mrf.mxu0
    %v3475 = vadd.f32 %v3282, %v3474
    %v3476 = vpop.f32.mrf.mxu0
    %v3477 = vadd.f32 %v3284, %v3476
    %v3478 = vpop.f32.mrf.mxu0
    %v3479 = vadd.f32 %v3286, %v3478
    %v3480 = vpop.f32.mrf.mxu0
    %v3481 = vadd.f32 %v3288, %v3480
    %3482 = vmatprep.mubr.bf16.mxu0 %v2800
    %3483 = vmatmul.mubr.bf16.gmra.mxu0 %v2799
    %v3484 = vpop.f32.mrf.mxu0
    %v3485 = vadd.f32 %v3292, %v3484
    %v3486 = vpop.f32.mrf.mxu0
    %v3487 = vadd.f32 %v3294, %v3486
    %v3488 = vpop.f32.mrf.mxu0
    %v3489 = vadd.f32 %v3296, %v3488
    %v3490 = vpop.f32.mrf.mxu0
    %v3491 = vadd.f32 %v3298, %v3490
    %3492 = vmatprep.mubr.bf16.mxu0 %v2804
    %3493 = vmatmul.mubr.bf16.gmra.mxu0 %v2803
    %v3494 = vpop.f32.mrf.mxu0
    %v3495 = vadd.f32 %v3302, %v3494
    %v3496 = vpop.f32.mrf.mxu0
    %v3497 = vadd.f32 %v3304, %v3496
    %v3498 = vpop.f32.mrf.mxu0
    %v3499 = vadd.f32 %v3306, %v3498
    %v3500 = vpop.f32.mrf.mxu0
    %v3501 = vadd.f32 %v3308, %v3500
    %3502 = vmatprep.mubr.bf16.mxu0 %v2808
    %3503 = vmatmul.mubr.bf16.gmra.mxu0 %v2807
    %v3504 = vpop.f32.mrf.mxu0
    %v3505 = vadd.f32 %v3312, %v3504
    %v3506 = vpop.f32.mrf.mxu0
    %v3507 = vadd.f32 %v3314, %v3506
    %v3508 = vpop.f32.mrf.mxu0
    %v3509 = vadd.f32 %v3316, %v3508
    %v3510 = vpop.f32.mrf.mxu0
    %v3511 = vadd.f32 %v3318, %v3510
    %3512 = vmatprep.mubr.bf16.mxu0 %v2812
    %3513 = vmatmul.mubr.bf16.gmra.mxu0 %v2811
    %v3514 = vpop.f32.mrf.mxu0
    %v3515 = vadd.f32 %v3322, %v3514
    %v3516 = vpop.f32.mrf.mxu0
    %v3517 = vadd.f32 %v3324, %v3516
    %v3518 = vpop.f32.mrf.mxu0
    %v3519 = vadd.f32 %v3326, %v3518
    %v3520 = vpop.f32.mrf.mxu0
    %v3521 = vadd.f32 %v3328, %v3520
    %3522 = vmatprep.mubr.bf16.mxu0 %v2816
    %3523 = vmatmul.mubr.bf16.gmra.mxu0 %v2815
    %v3524 = vpop.f32.mrf.mxu0
    %v3525 = vadd.f32 %v3332, %v3524
    %v3526 = vpop.f32.mrf.mxu0
    %v3527 = vadd.f32 %v3334, %v3526
    %v3528 = vpop.f32.mrf.mxu0
    %v3529 = vadd.f32 %v3336, %v3528
    %v3530 = vpop.f32.mrf.mxu0
    %v3531 = vadd.f32 %v3338, %v3530
    %3532 = vmatprep.mubr.bf16.mxu0 %v2820
    %3533 = vmatmul.mubr.bf16.gmra.mxu0 %v2819
    %v3534 = vpop.f32.mrf.mxu0
    %v3535 = vadd.f32 %v3342, %v3534
    %v3536 = vpop.f32.mrf.mxu0
    %v3537 = vadd.f32 %v3344, %v3536
    %v3538 = vpop.f32.mrf.mxu0
    %v3539 = vadd.f32 %v3346, %v3538
    %v3540 = vpop.f32.mrf.mxu0
    %v3541 = vadd.f32 %v3348, %v3540
    %3542 = vmatprep.mubr.bf16.mxu0 %v2824
    %3543 = vmatmul.mubr.bf16.gmra.mxu0 %v2823
    %v3544 = vpop.f32.mrf.mxu0
    %v3545 = vadd.f32 %v3352, %v3544
    %v3546 = vpop.f32.mrf.mxu0
    %v3547 = vadd.f32 %v3354, %v3546
    %v3548 = vpop.f32.mrf.mxu0
    %v3549 = vadd.f32 %v3356, %v3548
    %v3550 = vpop.f32.mrf.mxu0
    %v3551 = vadd.f32 %v3358, %v3550
    %3552 = vmatprep.mubr.bf16.mxu0 %v2828
    %3553 = vmatmul.mubr.bf16.gmra.mxu0 %v2827
    %v3554 = vpop.f32.mrf.mxu0
    %v3555 = vadd.f32 %v3362, %v3554
    %v3556 = vpop.f32.mrf.mxu0
    %v3557 = vadd.f32 %v3364, %v3556
    %v3558 = vpop.f32.mrf.mxu0
    %v3559 = vadd.f32 %v3366, %v3558
    %v3560 = vpop.f32.mrf.mxu0
    %v3561 = vadd.f32 %v3368, %v3560
    %3562 = vmatprep.mubr.bf16.mxu0 %v2832
    %3563 = vmatmul.mubr.bf16.gmra.mxu0 %v2831
    %v3564 = vpop.f32.mrf.mxu0
    %v3565 = vadd.f32 %v3372, %v3564
    %v3566 = vpop.f32.mrf.mxu0
    %v3567 = vadd.f32 %v3374, %v3566
    %v3568 = vpop.f32.mrf.mxu0
    %v3569 = vadd.f32 %v3376, %v3568
    %v3570 = vpop.f32.mrf.mxu0
    %v3571 = vadd.f32 %v3378, %v3570
    %3572 = vmatprep.mubr.bf16.mxu0 %v2836
    %3573 = vmatmul.mubr.bf16.gmra.mxu0 %v2835
    %v3574 = vpop.f32.mrf.mxu0
    %v3575 = vadd.f32 %v3382, %v3574
    %v3576 = vpop.f32.mrf.mxu0
    %v3577 = vadd.f32 %v3384, %v3576
    %v3578 = vpop.f32.mrf.mxu0
    %v3579 = vadd.f32 %v3386, %v3578
    %v3580 = vpop.f32.mrf.mxu0
    %v3581 = vadd.f32 %v3388, %v3580
    %3582 = vmatprep.mubr.bf16.mxu0 %v2840
    %3583 = vmatmul.mubr.bf16.gmra.mxu0 %v2839
    %v3584 = vpop.f32.mrf.mxu0
    %v3585 = vadd.f32 %v3392, %v3584
    %v3586 = vpop.f32.mrf.mxu0
    %v3587 = vadd.f32 %v3394, %v3586
    %v3588 = vpop.f32.mrf.mxu0
    %v3589 = vadd.f32 %v3396, %v3588
    %v3590 = vpop.f32.mrf.mxu0
    %v3591 = vadd.f32 %v3398, %v3590
    %3592 = vmatprep.mubr.bf16.mxu0 %v2844
    %3593 = vmatmul.mubr.bf16.gmra.mxu0 %v2843
    %v3594 = vpop.f32.mrf.mxu0
    %v3595 = vadd.f32 %v3402, %v3594
    %v3596 = vpop.f32.mrf.mxu0
    %v3597 = vadd.f32 %v3404, %v3596
    %v3598 = vpop.f32.mrf.mxu0
    %v3599 = vadd.f32 %v3406, %v3598
    %v3600 = vpop.f32.mrf.mxu0
    %v3601 = vadd.f32 %v3408, %v3600
    %3602 = vmatprep.mubr.bf16.mxu0 %v2848
    %3603 = vmatmul.mubr.bf16.gmra.mxu0 %v2847
    %v3604 = vpop.f32.mrf.mxu0
    %v3605 = vadd.f32 %v3412, %v3604
    %v3606 = vpop.f32.mrf.mxu0
    %v3607 = vadd.f32 %v3414, %v3606
    %v3608 = vpop.f32.mrf.mxu0
    %v3609 = vadd.f32 %v3416, %v3608
    %v3610 = vpop.f32.mrf.mxu0
    %v3611 = vadd.f32 %v3418, %v3610
    %3612 = vmatprep.mubr.bf16.mxu0 %v2852
    %3613 = vmatmul.mubr.bf16.gmra.mxu0 %v2851
    %v3614 = vpop.f32.mrf.mxu0
    %v3615 = vadd.f32 %v3422, %v3614
    %v3616 = vpop.f32.mrf.mxu0
    %v3617 = vadd.f32 %v3424, %v3616
    %v3618 = vpop.f32.mrf.mxu0
    %v3619 = vadd.f32 %v3426, %v3618
    %v3620 = vpop.f32.mrf.mxu0
    %v3621 = vadd.f32 %v3428, %v3620
    %3622 = vdwg.mxu0
    %v3623 = vadd.f32 %v2725, %v3465
    %v3624 = vadd.f32 %v2726, %v3467
    %v3625 = vadd.f32 %v2727, %v3469
    %v3626 = vadd.f32 %v2728, %v3471
    %v3627 = vadd.f32 %v2729, %v3475
    %v3628 = vadd.f32 %v2730, %v3477
    %v3629 = vadd.f32 %v2731, %v3479
    %v3630 = vadd.f32 %v2732, %v3481
    %v3631 = vadd.f32 %v2733, %v3485
    %v3632 = vadd.f32 %v2734, %v3487
    %v3633 = vadd.f32 %v2735, %v3489
    %v3634 = vadd.f32 %v2736, %v3491
    %v3635 = vadd.f32 %v2737, %v3495
    %v3636 = vadd.f32 %v2738, %v3497
    %v3637 = vadd.f32 %v2739, %v3499
    %v3638 = vadd.f32 %v2740, %v3501
    %v3639 = vadd.f32 %v2741, %v3505
    %v3640 = vadd.f32 %v2742, %v3507
    %v3641 = vadd.f32 %v2743, %v3509
    %v3642 = vadd.f32 %v2744, %v3511
    %v3643 = vadd.f32 %v2745, %v3515
    %v3644 = vadd.f32 %v2746, %v3517
    %v3645 = vadd.f32 %v2747, %v3519
    %v3646 = vadd.f32 %v2748, %v3521
    %v3647 = vadd.f32 %v2749, %v3525
    %v3648 = vadd.f32 %v2750, %v3527
    %v3649 = vadd.f32 %v2751, %v3529
    %v3650 = vadd.f32 %v2752, %v3531
    %v3651 = vadd.f32 %v2753, %v3535
    %v3652 = vadd.f32 %v2754, %v3537
    %v3653 = vadd.f32 %v2755, %v3539
    %v3654 = vadd.f32 %v2756, %v3541
    %v3655 = vadd.f32 %v2757, %v3545
    %v3656 = vadd.f32 %v2758, %v3547
    %v3657 = vadd.f32 %v2759, %v3549
    %v3658 = vadd.f32 %v2760, %v3551
    %v3659 = vadd.f32 %v2761, %v3555
    %v3660 = vadd.f32 %v2762, %v3557
    %v3661 = vadd.f32 %v2763, %v3559
    %v3662 = vadd.f32 %v2764, %v3561
    %v3663 = vadd.f32 %v2765, %v3565
    %v3664 = vadd.f32 %v2766, %v3567
    %v3665 = vadd.f32 %v2767, %v3569
    %v3666 = vadd.f32 %v2768, %v3571
    %v3667 = vadd.f32 %v2769, %v3575
    %v3668 = vadd.f32 %v2770, %v3577
    %v3669 = vadd.f32 %v2771, %v3579
    %v3670 = vadd.f32 %v2772, %v3581
    %v3671 = vadd.f32 %v2773, %v3585
    %v3672 = vadd.f32 %v2774, %v3587
    %v3673 = vadd.f32 %v2775, %v3589
    %v3674 = vadd.f32 %v2776, %v3591
    %v3675 = vadd.f32 %v2777, %v3595
    %v3676 = vadd.f32 %v2778, %v3597
    %v3677 = vadd.f32 %v2779, %v3599
    %v3678 = vadd.f32 %v2780, %v3601
    %v3679 = vadd.f32 %v2781, %v3605
    %v3680 = vadd.f32 %v2782, %v3607
    %v3681 = vadd.f32 %v2783, %v3609
    %v3682 = vadd.f32 %v2784, %v3611
    %v3683 = vadd.f32 %v2785, %v3615
    %v3684 = vadd.f32 %v2786, %v3617
    %v3685 = vadd.f32 %v2787, %v3619
    %v3686 = vadd.f32 %v2788, %v3621
    %3687 = vst [vmem:[#allocation11] sm:$0xff] %v3623
    %3688 = vst [vmem:[#allocation11 + $0x8] sm:$0xff] %v3624
    %3689 = vst [vmem:[#allocation11 + $0x10] sm:$0xff] %v3625
    %3690 = vst [vmem:[#allocation11 + $0x18] sm:$0xff] %v3626
    %3691 = vst [vmem:[#allocation11 + $0x20] sm:$0xff] %v3627
    %3692 = vst [vmem:[#allocation11 + $0x28] sm:$0xff] %v3628
    %3693 = vst [vmem:[#allocation11 + $0x30] sm:$0xff] %v3629
    %3694 = vst [vmem:[#allocation11 + $0x38] sm:$0xff] %v3630
    %3695 = vst [vmem:[#allocation11 + $0x40] sm:$0xff] %v3631
    %3696 = vst [vmem:[#allocation11 + $0x48] sm:$0xff] %v3632
    %3697 = vst [vmem:[#allocation11 + $0x50] sm:$0xff] %v3633
    %3698 = vst [vmem:[#allocation11 + $0x58] sm:$0xff] %v3634
    %3699 = vst [vmem:[#allocation11 + $0x60] sm:$0xff] %v3635
    %3700 = vst [vmem:[#allocation11 + $0x68] sm:$0xff] %v3636
    %3701 = vst [vmem:[#allocation11 + $0x70] sm:$0xff] %v3637
    %3702 = vst [vmem:[#allocation11 + $0x78] sm:$0xff] %v3638
    %3703 = vst [vmem:[#allocation11 + $0x80] sm:$0xff] %v3639
    %3704 = vst [vmem:[#allocation11 + $0x88] sm:$0xff] %v3640
    %3705 = vst [vmem:[#allocation11 + $0x90] sm:$0xff] %v3641
    %3706 = vst [vmem:[#allocation11 + $0x98] sm:$0xff] %v3642
    %3707 = vst [vmem:[#allocation11 + $0xa0] sm:$0xff] %v3643
    %3708 = vst [vmem:[#allocation11 + $0xa8] sm:$0xff] %v3644
    %3709 = vst [vmem:[#allocation11 + $0xb0] sm:$0xff] %v3645
    %3710 = vst [vmem:[#allocation11 + $0xb8] sm:$0xff] %v3646
    %3711 = vst [vmem:[#allocation11 + $0xc0] sm:$0xff] %v3647
    %3712 = vst [vmem:[#allocation11 + $0xc8] sm:$0xff] %v3648
    %3713 = vst [vmem:[#allocation11 + $0xd0] sm:$0xff] %v3649
    %3714 = vst [vmem:[#allocation11 + $0xd8] sm:$0xff] %v3650
    %3715 = vst [vmem:[#allocation11 + $0xe0] sm:$0xff] %v3651
    %3716 = vst [vmem:[#allocation11 + $0xe8] sm:$0xff] %v3652
    %3717 = vst [vmem:[#allocation11 + $0xf0] sm:$0xff] %v3653
    %3718 = vst [vmem:[#allocation11 + $0xf8] sm:$0xff] %v3654
    %3719 = vst [vmem:[#allocation11 + $0x100] sm:$0xff] %v3655
    %3720 = vst [vmem:[#allocation11 + $0x108] sm:$0xff] %v3656
    %3721 = vst [vmem:[#allocation11 + $0x110] sm:$0xff] %v3657
    %3722 = vst [vmem:[#allocation11 + $0x118] sm:$0xff] %v3658
    %3723 = vst [vmem:[#allocation11 + $0x120] sm:$0xff] %v3659
    %3724 = vst [vmem:[#allocation11 + $0x128] sm:$0xff] %v3660
    %3725 = vst [vmem:[#allocation11 + $0x130] sm:$0xff] %v3661
    %3726 = vst [vmem:[#allocation11 + $0x138] sm:$0xff] %v3662
    %3727 = vst [vmem:[#allocation11 + $0x140] sm:$0xff] %v3663
    %3728 = vst [vmem:[#allocation11 + $0x148] sm:$0xff] %v3664
    %3729 = vst [vmem:[#allocation11 + $0x150] sm:$0xff] %v3665
    %3730 = vst [vmem:[#allocation11 + $0x158] sm:$0xff] %v3666
    %3731 = vst [vmem:[#allocation11 + $0x160] sm:$0xff] %v3667
    %3732 = vst [vmem:[#allocation11 + $0x168] sm:$0xff] %v3668
    %3733 = vst [vmem:[#allocation11 + $0x170] sm:$0xff] %v3669
    %3734 = vst [vmem:[#allocation11 + $0x178] sm:$0xff] %v3670
    %3735 = vst [vmem:[#allocation11 + $0x180] sm:$0xff] %v3671
    %3736 = vst [vmem:[#allocation11 + $0x188] sm:$0xff] %v3672
    %3737 = vst [vmem:[#allocation11 + $0x190] sm:$0xff] %v3673
    %3738 = vst [vmem:[#allocation11 + $0x198] sm:$0xff] %v3674
    %3739 = vst [vmem:[#allocation11 + $0x1a0] sm:$0xff] %v3675
    %3740 = vst [vmem:[#allocation11 + $0x1a8] sm:$0xff] %v3676
    %3741 = vst [vmem:[#allocation11 + $0x1b0] sm:$0xff] %v3677
    %3742 = vst [vmem:[#allocation11 + $0x1b8] sm:$0xff] %v3678
    %3743 = vst [vmem:[#allocation11 + $0x1c0] sm:$0xff] %v3679
    %3744 = vst [vmem:[#allocation11 + $0x1c8] sm:$0xff] %v3680
    %3745 = vst [vmem:[#allocation11 + $0x1d0] sm:$0xff] %v3681
    %3746 = vst [vmem:[#allocation11 + $0x1d8] sm:$0xff] %v3682
    %3747 = vst [vmem:[#allocation11 + $0x1e0] sm:$0xff] %v3683
    %3748 = vst [vmem:[#allocation11 + $0x1e8] sm:$0xff] %v3684
    %3749 = vst [vmem:[#allocation11 + $0x1f0] sm:$0xff] %v3685
    %3750 = vst [vmem:[#allocation11 + $0x1f8] sm:$0xff] %v3686
    // Predicated region
    $region50: #{tpu_custom_call.1} parent=1 // pred_check
      %p3751 = pneg %p80
    $region51: #{tpu_custom_call.1} parent=1 // pred_check_branch
      %3753 = sbr.rel (%p3751) target = $region53
    $region52: #{tpu_custom_call.1} parent=1 // pred_region
      %v3754 = vld [vmem:[#allocation11] sm:$0xff]
      %v3755 = vld [vmem:[#allocation11 + $0x8] sm:$0xff]
      %v3756 = vld [vmem:[#allocation11 + $0x10] sm:$0xff]
      %v3757 = vld [vmem:[#allocation11 + $0x18] sm:$0xff]
      %v3758 = vld [vmem:[#allocation11 + $0x20] sm:$0xff]
      %v3759 = vld [vmem:[#allocation11 + $0x28] sm:$0xff]
      %v3760 = vld [vmem:[#allocation11 + $0x30] sm:$0xff]
      %v3761 = vld [vmem:[#allocation11 + $0x38] sm:$0xff]
      %v3762 = vld [vmem:[#allocation11 + $0x40] sm:$0xff]
      %v3763 = vld [vmem:[#allocation11 + $0x48] sm:$0xff]
      %v3764 = vld [vmem:[#allocation11 + $0x50] sm:$0xff]
      %v3765 = vld [vmem:[#allocation11 + $0x58] sm:$0xff]
      %v3766 = vld [vmem:[#allocation11 + $0x60] sm:$0xff]
      %v3767 = vld [vmem:[#allocation11 + $0x68] sm:$0xff]
      %v3768 = vld [vmem:[#allocation11 + $0x70] sm:$0xff]
      %v3769 = vld [vmem:[#allocation11 + $0x78] sm:$0xff]
      %v3770 = vld [vmem:[#allocation11 + $0x80] sm:$0xff]
      %v3771 = vld [vmem:[#allocation11 + $0x88] sm:$0xff]
      %v3772 = vld [vmem:[#allocation11 + $0x90] sm:$0xff]
      %v3773 = vld [vmem:[#allocation11 + $0x98] sm:$0xff]
      %v3774 = vld [vmem:[#allocation11 + $0xa0] sm:$0xff]
      %v3775 = vld [vmem:[#allocation11 + $0xa8] sm:$0xff]
      %v3776 = vld [vmem:[#allocation11 + $0xb0] sm:$0xff]
      %v3777 = vld [vmem:[#allocation11 + $0xb8] sm:$0xff]
      %v3778 = vld [vmem:[#allocation11 + $0xc0] sm:$0xff]
      %v3779 = vld [vmem:[#allocation11 + $0xc8] sm:$0xff]
      %v3780 = vld [vmem:[#allocation11 + $0xd0] sm:$0xff]
      %v3781 = vld [vmem:[#allocation11 + $0xd8] sm:$0xff]
      %v3782 = vld [vmem:[#allocation11 + $0xe0] sm:$0xff]
      %v3783 = vld [vmem:[#allocation11 + $0xe8] sm:$0xff]
      %v3784 = vld [vmem:[#allocation11 + $0xf0] sm:$0xff]
      %v3785 = vld [vmem:[#allocation11 + $0xf8] sm:$0xff]
      %v3786 = vld [vmem:[#allocation11 + $0x100] sm:$0xff]
      %v3787 = vld [vmem:[#allocation11 + $0x108] sm:$0xff]
      %v3788 = vld [vmem:[#allocation11 + $0x110] sm:$0xff]
      %v3789 = vld [vmem:[#allocation11 + $0x118] sm:$0xff]
      %v3790 = vld [vmem:[#allocation11 + $0x120] sm:$0xff]
      %v3791 = vld [vmem:[#allocation11 + $0x128] sm:$0xff]
      %v3792 = vld [vmem:[#allocation11 + $0x130] sm:$0xff]
      %v3793 = vld [vmem:[#allocation11 + $0x138] sm:$0xff]
      %v3794 = vld [vmem:[#allocation11 + $0x140] sm:$0xff]
      %v3795 = vld [vmem:[#allocation11 + $0x148] sm:$0xff]
      %v3796 = vld [vmem:[#allocation11 + $0x150] sm:$0xff]
      %v3797 = vld [vmem:[#allocation11 + $0x158] sm:$0xff]
      %v3798 = vld [vmem:[#allocation11 + $0x160] sm:$0xff]
      %v3799 = vld [vmem:[#allocation11 + $0x168] sm:$0xff]
      %v3800 = vld [vmem:[#allocation11 + $0x170] sm:$0xff]
      %v3801 = vld [vmem:[#allocation11 + $0x178] sm:$0xff]
      %v3802 = vld [vmem:[#allocation11 + $0x180] sm:$0xff]
      %v3803 = vld [vmem:[#allocation11 + $0x188] sm:$0xff]
      %v3804 = vld [vmem:[#allocation11 + $0x190] sm:$0xff]
      %v3805 = vld [vmem:[#allocation11 + $0x198] sm:$0xff]
      %v3806 = vld [vmem:[#allocation11 + $0x1a0] sm:$0xff]
      %v3807 = vld [vmem:[#allocation11 + $0x1a8] sm:$0xff]
      %v3808 = vld [vmem:[#allocation11 + $0x1b0] sm:$0xff]
      %v3809 = vld [vmem:[#allocation11 + $0x1b8] sm:$0xff]
      %v3810 = vld [vmem:[#allocation11 + $0x1c0] sm:$0xff]
      %v3811 = vld [vmem:[#allocation11 + $0x1c8] sm:$0xff]
      %v3812 = vld [vmem:[#allocation11 + $0x1d0] sm:$0xff]
      %v3813 = vld [vmem:[#allocation11 + $0x1d8] sm:$0xff]
      %v3814 = vld [vmem:[#allocation11 + $0x1e0] sm:$0xff]
      %v3815 = vld [vmem:[#allocation11 + $0x1e8] sm:$0xff]
      %v3816 = vld [vmem:[#allocation11 + $0x1f0] sm:$0xff]
      %v3817 = vld [vmem:[#allocation11 + $0x1f8] sm:$0xff]
      %v3818 = vld [vmem:[%s6] sm:$0x3]
      %v3820 = vlaneseq
      %v3821 = vshrl.u32 %v3820, 7
      %v3822 = vsub.s32 0, %v3821
      %v3823 = vrot.slane %v3818, %v3822
      %v3824 = vlaneseq
      %v3825 = vshrl.u32 %v3824, 7
      %v3826 = vsub.s32 1, %v3825
      %v3827 = vrot.slane %v3818, %v3826
      %v3830 = vadd.f32 %v3754, %v3823
      %v3831 = vadd.f32 %v3755, %v3827
      %v3832 = vadd.f32 %v3756, %v3823
      %v3833 = vadd.f32 %v3757, %v3827
      %v3834 = vadd.f32 %v3758, %v3823
      %v3835 = vadd.f32 %v3759, %v3827
      %v3836 = vadd.f32 %v3760, %v3823
      %v3837 = vadd.f32 %v3761, %v3827
      %v3838 = vadd.f32 %v3762, %v3823
      %v3839 = vadd.f32 %v3763, %v3827
      %v3840 = vadd.f32 %v3764, %v3823
      %v3841 = vadd.f32 %v3765, %v3827
      %v3842 = vadd.f32 %v3766, %v3823
      %v3843 = vadd.f32 %v3767, %v3827
      %v3844 = vadd.f32 %v3768, %v3823
      %v3845 = vadd.f32 %v3769, %v3827
      %v3846 = vadd.f32 %v3770, %v3823
      %v3847 = vadd.f32 %v3771, %v3827
      %v3848 = vadd.f32 %v3772, %v3823
      %v3849 = vadd.f32 %v3773, %v3827
      %v3850 = vadd.f32 %v3774, %v3823
      %v3851 = vadd.f32 %v3775, %v3827
      %v3852 = vadd.f32 %v3776, %v3823
      %v3853 = vadd.f32 %v3777, %v3827
      %v3854 = vadd.f32 %v3778, %v3823
      %v3855 = vadd.f32 %v3779, %v3827
      %v3856 = vadd.f32 %v3780, %v3823
      %v3857 = vadd.f32 %v3781, %v3827
      %v3858 = vadd.f32 %v3782, %v3823
      %v3859 = vadd.f32 %v3783, %v3827
      %v3860 = vadd.f32 %v3784, %v3823
      %v3861 = vadd.f32 %v3785, %v3827
      %v3862 = vadd.f32 %v3786, %v3823
      %v3863 = vadd.f32 %v3787, %v3827
      %v3864 = vadd.f32 %v3788, %v3823
      %v3865 = vadd.f32 %v3789, %v3827
      %v3866 = vadd.f32 %v3790, %v3823
      %v3867 = vadd.f32 %v3791, %v3827
      %v3868 = vadd.f32 %v3792, %v3823
      %v3869 = vadd.f32 %v3793, %v3827
      %v3870 = vadd.f32 %v3794, %v3823
      %v3871 = vadd.f32 %v3795, %v3827
      %v3872 = vadd.f32 %v3796, %v3823
      %v3873 = vadd.f32 %v3797, %v3827
      %v3874 = vadd.f32 %v3798, %v3823
      %v3875 = vadd.f32 %v3799, %v3827
      %v3876 = vadd.f32 %v3800, %v3823
      %v3877 = vadd.f32 %v3801, %v3827
      %v3878 = vadd.f32 %v3802, %v3823
      %v3879 = vadd.f32 %v3803, %v3827
      %v3880 = vadd.f32 %v3804, %v3823
      %v3881 = vadd.f32 %v3805, %v3827
      %v3882 = vadd.f32 %v3806, %v3823
      %v3883 = vadd.f32 %v3807, %v3827
      %v3884 = vadd.f32 %v3808, %v3823
      %v3885 = vadd.f32 %v3809, %v3827
      %v3886 = vadd.f32 %v3810, %v3823
      %v3887 = vadd.f32 %v3811, %v3827
      %v3888 = vadd.f32 %v3812, %v3823
      %v3889 = vadd.f32 %v3813, %v3827
      %v3890 = vadd.f32 %v3814, %v3823
      %v3891 = vadd.f32 %v3815, %v3827
      %v3892 = vadd.f32 %v3816, %v3823
      %v3893 = vadd.f32 %v3817, %v3827
      %3894 = vst [vmem:[#allocation11] sm:$0xff] %v3830
      %3895 = vst [vmem:[#allocation11 + $0x8] sm:$0xff] %v3831
      %3896 = vst [vmem:[#allocation11 + $0x10] sm:$0xff] %v3832
      %3897 = vst [vmem:[#allocation11 + $0x18] sm:$0xff] %v3833
      %3898 = vst [vmem:[#allocation11 + $0x20] sm:$0xff] %v3834
      %3899 = vst [vmem:[#allocation11 + $0x28] sm:$0xff] %v3835
      %3900 = vst [vmem:[#allocation11 + $0x30] sm:$0xff] %v3836
      %3901 = vst [vmem:[#allocation11 + $0x38] sm:$0xff] %v3837
      %3902 = vst [vmem:[#allocation11 + $0x40] sm:$0xff] %v3838
      %3903 = vst [vmem:[#allocation11 + $0x48] sm:$0xff] %v3839
      %3904 = vst [vmem:[#allocation11 + $0x50] sm:$0xff] %v3840
      %3905 = vst [vmem:[#allocation11 + $0x58] sm:$0xff] %v3841
      %3906 = vst [vmem:[#allocation11 + $0x60] sm:$0xff] %v3842
      %3907 = vst [vmem:[#allocation11 + $0x68] sm:$0xff] %v3843
      %3908 = vst [vmem:[#allocation11 + $0x70] sm:$0xff] %v3844
      %3909 = vst [vmem:[#allocation11 + $0x78] sm:$0xff] %v3845
      %3910 = vst [vmem:[#allocation11 + $0x80] sm:$0xff] %v3846
      %3911 = vst [vmem:[#allocation11 + $0x88] sm:$0xff] %v3847
      %3912 = vst [vmem:[#allocation11 + $0x90] sm:$0xff] %v3848
      %3913 = vst [vmem:[#allocation11 + $0x98] sm:$0xff] %v3849
      %3914 = vst [vmem:[#allocation11 + $0xa0] sm:$0xff] %v3850
      %3915 = vst [vmem:[#allocation11 + $0xa8] sm:$0xff] %v3851
      %3916 = vst [vmem:[#allocation11 + $0xb0] sm:$0xff] %v3852
      %3917 = vst [vmem:[#allocation11 + $0xb8] sm:$0xff] %v3853
      %3918 = vst [vmem:[#allocation11 + $0xc0] sm:$0xff] %v3854
      %3919 = vst [vmem:[#allocation11 + $0xc8] sm:$0xff] %v3855
      %3920 = vst [vmem:[#allocation11 + $0xd0] sm:$0xff] %v3856
      %3921 = vst [vmem:[#allocation11 + $0xd8] sm:$0xff] %v3857
      %3922 = vst [vmem:[#allocation11 + $0xe0] sm:$0xff] %v3858
      %3923 = vst [vmem:[#allocation11 + $0xe8] sm:$0xff] %v3859
      %3924 = vst [vmem:[#allocation11 + $0xf0] sm:$0xff] %v3860
      %3925 = vst [vmem:[#allocation11 + $0xf8] sm:$0xff] %v3861
      %3926 = vst [vmem:[#allocation11 + $0x100] sm:$0xff] %v3862
      %3927 = vst [vmem:[#allocation11 + $0x108] sm:$0xff] %v3863
      %3928 = vst [vmem:[#allocation11 + $0x110] sm:$0xff] %v3864
      %3929 = vst [vmem:[#allocation11 + $0x118] sm:$0xff] %v3865
      %3930 = vst [vmem:[#allocation11 + $0x120] sm:$0xff] %v3866
      %3931 = vst [vmem:[#allocation11 + $0x128] sm:$0xff] %v3867
      %3932 = vst [vmem:[#allocation11 + $0x130] sm:$0xff] %v3868
      %3933 = vst [vmem:[#allocation11 + $0x138] sm:$0xff] %v3869
      %3934 = vst [vmem:[#allocation11 + $0x140] sm:$0xff] %v3870
      %3935 = vst [vmem:[#allocation11 + $0x148] sm:$0xff] %v3871
      %3936 = vst [vmem:[#allocation11 + $0x150] sm:$0xff] %v3872
      %3937 = vst [vmem:[#allocation11 + $0x158] sm:$0xff] %v3873
      %3938 = vst [vmem:[#allocation11 + $0x160] sm:$0xff] %v3874
      %3939 = vst [vmem:[#allocation11 + $0x168] sm:$0xff] %v3875
      %3940 = vst [vmem:[#allocation11 + $0x170] sm:$0xff] %v3876
      %3941 = vst [vmem:[#allocation11 + $0x178] sm:$0xff] %v3877
      %3942 = vst [vmem:[#allocation11 + $0x180] sm:$0xff] %v3878
      %3943 = vst [vmem:[#allocation11 + $0x188] sm:$0xff] %v3879
      %3944 = vst [vmem:[#allocation11 + $0x190] sm:$0xff] %v3880
      %3945 = vst [vmem:[#allocation11 + $0x198] sm:$0xff] %v3881
      %3946 = vst [vmem:[#allocation11 + $0x1a0] sm:$0xff] %v3882
      %3947 = vst [vmem:[#allocation11 + $0x1a8] sm:$0xff] %v3883
      %3948 = vst [vmem:[#allocation11 + $0x1b0] sm:$0xff] %v3884
      %3949 = vst [vmem:[#allocation11 + $0x1b8] sm:$0xff] %v3885
      %3950 = vst [vmem:[#allocation11 + $0x1c0] sm:$0xff] %v3886
      %3951 = vst [vmem:[#allocation11 + $0x1c8] sm:$0xff] %v3887
      %3952 = vst [vmem:[#allocation11 + $0x1d0] sm:$0xff] %v3888
      %3953 = vst [vmem:[#allocation11 + $0x1d8] sm:$0xff] %v3889
      %3954 = vst [vmem:[#allocation11 + $0x1e0] sm:$0xff] %v3890
      %3955 = vst [vmem:[#allocation11 + $0x1e8] sm:$0xff] %v3891
      %3956 = vst [vmem:[#allocation11 + $0x1f0] sm:$0xff] %v3892
      %3957 = vst [vmem:[#allocation11 + $0x1f8] sm:$0xff] %v3893
    $region53: #{tpu_custom_call.1} parent=1 // pred_fallthru
      _
    // Predicated region
    $region54: #{tpu_custom_call.1} parent=1 // pred_check
      _
    $region55: #{tpu_custom_call.1} parent=1 // pred_check_branch
      %3959 = sbr.rel (0) target = $region57
    $region56: #{tpu_custom_call.1} parent=1 // pred_region
      %s3961 = ssub.s32 8192, 8192
      %3962 = vsyncadd [#allocation5], %s3961
      %s3963 = sshll.u32 [#allocation11], 4
      %s3964 = int_to_ptr.vmem [resolvable:$true] %s3963
      %3969 = dma.vmem_to_hbm [thread:$0]  %s3964, 8192, %s7, [#allocation5], 256, 256, 16
    $region57: #{tpu_custom_call.1} parent=1 // pred_fallthru
      _
    // Predicated region
    $region58: #{tpu_custom_call.1} parent=1 // pred_check
      _
    $region59: #{tpu_custom_call.1} parent=1 // pred_check_branch
      %3971 = sbr.rel (0) target = $region61
    $region60: #{tpu_custom_call.1} parent=1 // pred_region
      %3972 = dma.done [#allocation5], 8192
    $region61: #{tpu_custom_call.1} parent=1 // pred_fallthru
      _
    %3973 = vsyncpa [#allocation4], 1
    %3974 = vsyncpa [#allocation7], 1
    %3975 = vsyncpa [#allocation10], 1
    %3976 = vsyncpa [#allocation5], 1

</llo_original>
